<compile_context>
chip_gen: v7x
topology: tpu7x:2x2x1
jax: 0.10.0
libtpu: 0.0.40
codegen_flags: <defaults>
</compile_context>

<pallas_src>
import functools

import jax
import jax.numpy as jnp
from jax import lax
from jax.experimental import pallas as pl
from jax.experimental.pallas import tpu as pltpu

GAMMA = 10.0  # Gaussian RBF width

_PARALLEL = pltpu.CompilerParams(dimension_semantics=("parallel",))
_ARBITRARY = pltpu.CompilerParams(dimension_semantics=("arbitrary",))


# ----------------------------- Pallas kernels ------------------------------

def embed_kernel(xattr_ref, we_ref, be_ref, wself_ref, bself_ref,
                 h_ref, s0_ref, s1_ref, s2_ref):
    """first_atom_embed plus the hoisted per-layer self terms.

    h      = x_attr @ W_embed + b_embed
    self_l = x_attr @ W_self[l] + b_out[l]   (used as a bias in the conv kernel)
    x_attr is streamed from HBM exactly once for all four outputs.
    """
    xb = xattr_ref[...].astype(jnp.bfloat16)
    h_ref[...] = (jnp.dot(xb, we_ref[...], preferred_element_type=jnp.float32)
                  + be_ref[...])
    for l, s_ref in enumerate((s0_ref, s1_ref, s2_ref)):
        s_ref[...] = (jnp.dot(xb, wself_ref[l],
                              preferred_element_type=jnp.float32)
                      + bself_ref[l])


def edge_kernel(pos_src_ref, pos_dst_ref, pvec_ref, centers_ref,
                wr1_ref, br1_ref, wr2_ref, br2_ref, wsh_ref,
                m0_ref, m1_ref, m2_ref):
    """edge_embed + radial_basis + (radial MLP * angular gate) for 3 layers.

    mult_l[e, :] = radial_l(rbf(e)) * <sh(e), wsh_l>   (stored bf16).
    Geometry uses one rsqrt (no sqrt + divides) and explicit component sums
    (no XLU reduce over a 3-wide lane dim).  wsh lives in SMEM as scalars.
    Zero-padded edges give vec == 0 -> gate == 0 -> mult == 0.
    """
    vec = pos_dst_ref[...] - pos_src_ref[...] + pvec_ref[...]       # [TE,3]
    vx = vec[:, 0:1]
    vy = vec[:, 1:2]
    vz = vec[:, 2:3]
    ssq = vx * vx + vy * vy + vz * vz + 1e-12
    inv = lax.rsqrt(ssq)                                            # EUP
    lengths = ssq * inv                                             # == sqrt(ssq)
    sx = vx * inv
    sy = vy * inv
    sz = vz * inv
    d = lengths - centers_ref[...]                                  # [TE,B]
    rbf = jnp.exp(-GAMMA * d * d).astype(jnp.bfloat16)
    out_refs = (m0_ref, m1_ref, m2_ref)
    for l in range(3):                                              # static
        hid = (jnp.dot(rbf, wr1_ref[l], preferred_element_type=jnp.float32)
               + br1_ref[l])
        hid = jnp.maximum(hid, 0.0)
        radial = (jnp.dot(hid.astype(jnp.bfloat16), wr2_ref[l],
                          preferred_element_type=jnp.float32)
                  + br2_ref[l])
        gate = (sx * wsh_ref[l, 0] + sy * wsh_ref[l, 1]
                + sz * wsh_ref[l, 2])                               # [TE,1] VPU
        out_refs[l][...] = (radial * gate).astype(jnp.bfloat16)


def conv_kernel(src_ref, dst_ref, h_ref, mult_ref, self_ref, wout_ref,
                out_ref, mbuf_ref, agg_ref):
    """Fused conv layer: gather h[src] * mult, scatter-add into a node-resident
    VMEM accumulator, then (last grid step) h_out = SiLU(agg @ Wout + self).

    src/dst are scalar-prefetched SMEM index arrays; h / self / Wout / out are
    fully VMEM-resident across the edge-tile grid (constant index maps).
    """
    i = pl.program_id(0)
    te = mult_ref.shape[0]

    @pl.when(i == 0)
    def _init():
        agg_ref[...] = jnp.zeros_like(agg_ref)

    # Widen this tile's bf16 gate to f32 once (vectorized) so the per-edge
    # dynamic row slices below operate on 32-bit rows.
    mbuf_ref[...] = mult_ref[...].astype(jnp.float32)

    base = i * te

    def body(e, carry):
        s = src_ref[base + e]                                       # SMEM scalar
        d = dst_ref[base + e]
        msg = h_ref[pl.ds(s, 1), :] * mbuf_ref[pl.ds(e, 1), :]      # [1,H]
        agg_ref[pl.ds(d, 1), :] = agg_ref[pl.ds(d, 1), :] + msg
        return carry

    lax.fori_loop(0, te, body, 0)

    @pl.when(i == pl.num_programs(0) - 1)
    def _finish():
        lin = (jnp.dot(agg_ref[...].astype(jnp.bfloat16), wout_ref[...],
                       preferred_element_type=jnp.float32)
               + self_ref[...])
        out_ref[...] = lin * jax.nn.sigmoid(lin)                    # SiLU


# ------------------------------ call wrappers -------------------------------

def _round_up(x, m):
    return ((x + m - 1) // m) * m


def _tile_and_pad(total, preferred, align):
    """Pick an aligned tile <= preferred and pad `total` to a tile multiple."""
    t = min(_round_up(total, align), _round_up(preferred, align))
    padded = _round_up(total, t)
    return t, padded


def _pad_rows(a, rows):
    pad = rows - a.shape[0]
    if pad == 0:
        return a
    return jnp.pad(a, ((0, pad),) + ((0, 0),) * (a.ndim - 1))


def embed_call(x_attr, w_embed, b_embed, wself, bself, node_tile):
    n_pad, a = x_attr.shape
    h_dim = w_embed.shape[1]
    tn = node_tile
    out = jax.ShapeDtypeStruct((n_pad, h_dim), jnp.float32)
    return pl.pallas_call(
        embed_kernel,
        out_shape=(out, out, out, out),
        grid=(n_pad // tn,),
        in_specs=[pl.BlockSpec((tn, a), lambda i: (i, 0)),
                  pl.BlockSpec((a, h_dim), lambda i: (0, 0)),
                  pl.BlockSpec((1, h_dim), lambda i: (0, 0)),
                  pl.BlockSpec((3, a, h_dim), lambda i: (0, 0, 0)),
                  pl.BlockSpec((3, 1, h_dim), lambda i: (0, 0, 0))],
        out_specs=[pl.BlockSpec((tn, h_dim), lambda i: (i, 0))] * 4,
        compiler_params=_PARALLEL,
    )(x_attr, w_embed, b_embed, wself, bself)


def edge_call(pos_src, pos_dst, pvec, centers, wr1, br1, wr2, br2, wsh,
              edge_tile):
    e_pad = pos_src.shape[0]
    b_dim = centers.shape[1]
    rh = wr1.shape[2]
    h_dim = wr2.shape[2]
    te = edge_tile
    out = jax.ShapeDtypeStruct((e_pad, h_dim), jnp.bfloat16)
    return pl.pallas_call(
        edge_kernel,
        out_shape=(out, out, out),
        grid=(e_pad // te,),
        in_specs=[pl.BlockSpec((te, 3), lambda i: (i, 0)),
                  pl.BlockSpec((te, 3), lambda i: (i, 0)),
                  pl.BlockSpec((te, 3), lambda i: (i, 0)),
                  pl.BlockSpec((1, b_dim), lambda i: (0, 0)),
                  pl.BlockSpec((3, b_dim, rh), lambda i: (0, 0, 0)),
                  pl.BlockSpec((3, 1, rh), lambda i: (0, 0, 0)),
                  pl.BlockSpec((3, rh, h_dim), lambda i: (0, 0, 0)),
                  pl.BlockSpec((3, 1, h_dim), lambda i: (0, 0, 0)),
                  pl.BlockSpec(memory_space=pltpu.MemorySpace.SMEM)],
        out_specs=[pl.BlockSpec((te, h_dim), lambda i: (i, 0))] * 3,
        compiler_params=_PARALLEL,
    )(pos_src, pos_dst, pvec, centers, wr1, br1, wr2, br2, wsh)


def conv_call(src, dst, h, mult_l, self_l, wout_l, edge_tile):
    n_pad, h_dim = h.shape
    e_pad = mult_l.shape[0]
    te = edge_tile
    # TODO(synk): for very large graphs (node tables > scoped VMEM, esp. v7x's
    # 64 MiB physical / 32 MiB default) tile the node dimension or raise
    # vmem_limit_bytes; here the whole node table stays VMEM-resident.
    return pl.pallas_call(
        conv_kernel,
        out_shape=jax.ShapeDtypeStruct((n_pad, h_dim), jnp.float32),
        grid_spec=pltpu.PrefetchScalarGridSpec(
            num_scalar_prefetch=2,
            grid=(e_pad // te,),
            in_specs=[pl.BlockSpec((n_pad, h_dim), lambda i, s, d: (0, 0)),
                      pl.BlockSpec((te, h_dim), lambda i, s, d: (i, 0)),
                      pl.BlockSpec((n_pad, h_dim), lambda i, s, d: (0, 0)),
                      pl.BlockSpec((h_dim, h_dim), lambda i, s, d: (0, 0))],
            out_specs=pl.BlockSpec((n_pad, h_dim), lambda i, s, d: (0, 0)),
            scratch_shapes=[pltpu.VMEM((te, h_dim), jnp.float32),
                            pltpu.VMEM((n_pad, h_dim), jnp.float32)]),
        compiler_params=_ARBITRARY,
    )(src, dst, h, mult_l, self_l, wout_l)


# -------------------------------- forward -----------------------------------

def rep_module_forward(params, x, pos, edge_index, period_vec, batch,
                       *, node_tile=512, edge_tile=1024):
    del batch  # forward() of RepModule never uses `batch`
    n = pos.shape[0]
    e = edge_index.shape[1]
    tn, n_pad = _tile_and_pad(n, node_tile, 8)
    te, e_pad = _tile_and_pad(e, edge_tile, 16)

    src = edge_index[0].astype(jnp.int32)
    dst = edge_index[1].astype(jnp.int32)
    idx = x.astype(jnp.int32).reshape(-1)                       # squeeze(-1)

    # elem_embed table gather + per-edge position gathers (index glue, linear)
    x_attr = jnp.take(params['table'], idx, axis=0)             # [N, A] f32
    pos_f = pos.astype(jnp.float32)
    pos_src = jnp.take(pos_f, src, axis=0)                      # [E, 3]
    pos_dst = jnp.take(pos_f, dst, axis=0)                      # [E, 3]

    # Pad graph to tile multiples.  Padded edges have zero geometry -> zero
    # mult -> zero message scattered into node 0 (harmless); padded node rows
    # are dropped at the end.
    x_attr = _pad_rows(x_attr, n_pad)
    pos_src = _pad_rows(pos_src, e_pad)
    pos_dst = _pad_rows(pos_dst, e_pad)
    pvec = _pad_rows(period_vec.astype(jnp.float32), e_pad)
    src = _pad_rows(src, e_pad)
    dst = _pad_rows(dst, e_pad)

    # first_atom_embed + hoisted self terms of all 3 conv layers (one pass)
    h, s0, s1, s2 = embed_call(x_attr, params['w_embed'], params['b_embed'],
                               params['wself'], params['bout'], tn)

    # edge_embed + radial_basis + radial MLP / angular gate of all 3 layers
    m0, m1, m2 = edge_call(pos_src, pos_dst, pvec, params['centers'],
                           params['wr1'], params['br1'], params['wr2'],
                           params['br2'], params['wsh'], te)

    selfs = (s0, s1, s2)
    mults = (m0, m1, m2)
    for l in range(3):
        # fused gather(h[src]) * mult -> scatter-add(dst) -> SiLU node update
        h = conv_call(src, dst, h, mults[l], selfs[l], params['wout'][l], te)
    return h[:n]


# --------------------------- parameter creation -----------------------------

class _KeyGen:
    def __init__(self, key):
        self._key = key

    def __call__(self):
        self._key, sub = jax.random.split(self._key)
        return sub


def make_params(key, num_types, attr_dim, hidden, rbf_dim, radial_hidden):
    kg = _KeyGen(key)

    def nrm(shape, scale=0.1, dtype=jnp.float32):
        return (scale * jax.random.normal(kg(), shape,
                                          dtype=jnp.float32)).astype(dtype)

    return {
        'table':   nrm((num_types, attr_dim), 1.0),                       # f32
        'w_embed': nrm((attr_dim, hidden), 0.1, jnp.bfloat16),
        'b_embed': nrm((1, hidden)),
        'centers': jnp.linspace(0.0, 2.0, rbf_dim,
                                dtype=jnp.float32).reshape(1, rbf_dim),
        # stacked per-conv-layer weights (leading axis = layer)
        'wr1':   nrm((3, rbf_dim, radial_hidden), 0.1, jnp.bfloat16),
        'br1':   nrm((3, 1, radial_hidden)),
        'wr2':   nrm((3, radial_hidden, hidden), 0.1, jnp.bfloat16),
        'br2':   nrm((3, 1, hidden)),
        'wsh':   nrm((3, 3), 1.0),                                        # SMEM
        'wout':  nrm((3, hidden, hidden), 0.1, jnp.bfloat16),
        'wself': nrm((3, attr_dim, hidden), 0.1, jnp.bfloat16),
        'bout':  nrm((3, 1, hidden)),
    }


# --------------------------------- main -------------------------------------

if __name__ == "__main__":
    N, E = 32, 128            # nodes, edges
    V, A, H, B, RH = 4, 16, 128, 32, 128   # radial_hidden padded to 128

    key = jax.random.PRNGKey(0)
    k_par, k_x, k_pos, k_src, k_dst, k_pv = jax.random.split(key, 6)

    params = make_params(k_par, V, A, H, B, RH)

    x = jax.random.randint(k_x, (N, 1), 0, V, dtype=jnp.int32)     # atom types
    pos = jax.random.normal(k_pos, (N, 3), dtype=jnp.float32)      # positions
    src = jax.random.randint(k_src, (E,), 0, N, dtype=jnp.int32)
    dst = jax.random.randint(k_dst, (E,), 0, N, dtype=jnp.int32)
    edge_index = jnp.stack([src, dst], axis=0)                     # [2, E]
    period_vec = 0.1 * jax.random.normal(k_pv, (E, 3), dtype=jnp.float32)
    batch = jnp.zeros((N,), dtype=jnp.int32)                       # unused

    fwd = jax.jit(functools.partial(rep_module_forward, params))
    h = fwd(x, pos, edge_index, period_vec, batch)
    jax.block_until_ready(h)

    assert h.shape == (N, H) and h.dtype == jnp.float32
    assert bool(jnp.all(jnp.isfinite(h)))
    print("KERNEL_OK")
</pallas_src>

<mosaic_0001>
module attributes {stable_mosaic.version = 11 : i64} {
  func.func @edge_kernel(%arg0: i32, %arg1: memref<128x3xf32, #tpu.memory_space<vmem>>, %arg2: memref<128x3xf32, #tpu.memory_space<vmem>>, %arg3: memref<128x3xf32, #tpu.memory_space<vmem>>, %arg4: memref<1x32xf32, #tpu.memory_space<vmem>>, %arg5: memref<3x32x128xbf16, #tpu.memory_space<vmem>>, %arg6: memref<3x1x128xf32, #tpu.memory_space<vmem>>, %arg7: memref<3x128x128xbf16, #tpu.memory_space<vmem>>, %arg8: memref<3x1x128xf32, #tpu.memory_space<vmem>>, %arg9: memref<3x3xf32, #tpu.memory_space<smem>>, %arg10: memref<128x128xbf16, #tpu.memory_space<vmem>>, %arg11: memref<128x128xbf16, #tpu.memory_space<vmem>>, %arg12: memref<128x128xbf16, #tpu.memory_space<vmem>>) attributes {dimension_semantics = [#tpu.dimension_semantics<parallel>], iteration_bounds = array<i64: 1>, scalar_prefetch = 0 : i64, scratch_operands = 0 : i64, tpu.core_type = #tpu.core_type<tc>, window_params = [{transform_indices = @transform_0, window_bounds = array<i64: 128, 3>}, {transform_indices = @transform_1, window_bounds = array<i64: 128, 3>}, {transform_indices = @transform_2, window_bounds = array<i64: 128, 3>}, {pipeline_mode = #tpu.pipeline_mode<synchronous>, transform_indices = @transform_3, window_bounds = array<i64: 1, 32>}, {pipeline_mode = #tpu.pipeline_mode<synchronous>, transform_indices = @transform_4, window_bounds = array<i64: 3, 32, 128>}, {pipeline_mode = #tpu.pipeline_mode<synchronous>, transform_indices = @transform_5, window_bounds = array<i64: 3, 1, 128>}, {pipeline_mode = #tpu.pipeline_mode<synchronous>, transform_indices = @transform_6, window_bounds = array<i64: 3, 128, 128>}, {pipeline_mode = #tpu.pipeline_mode<synchronous>, transform_indices = @transform_7, window_bounds = array<i64: 3, 1, 128>}, {transform_indices = @transform_8, window_bounds = array<i64: 3, 3>}, {transform_indices = @transform_9, window_bounds = array<i64: 128, 128>}, {transform_indices = @transform_10, window_bounds = array<i64: 128, 128>}, {transform_indices = @transform_11, window_bounds = array<i64: 128, 128>}]} {
    %c0 = arith.constant 0 : index
    %c0_0 = arith.constant 0 : index
    %0 = vector.load %arg2[%c0, %c0_0] : memref<128x3xf32, #tpu.memory_space<vmem>>, vector<128x3xf32>
    %c0_1 = arith.constant 0 : index
    %c0_2 = arith.constant 0 : index
    %1 = vector.load %arg1[%c0_1, %c0_2] : memref<128x3xf32, #tpu.memory_space<vmem>>, vector<128x3xf32>
    %2 = arith.subf %0, %1 : vector<128x3xf32>
    %c0_3 = arith.constant 0 : index
    %c0_4 = arith.constant 0 : index
    %3 = vector.load %arg3[%c0_3, %c0_4] : memref<128x3xf32, #tpu.memory_space<vmem>>, vector<128x3xf32>
    %4 = arith.addf %2, %3 : vector<128x3xf32>
    %5 = vector.extract_strided_slice %4 {offsets = [0, 0], sizes = [128, 1], strides = [1, 1]} : vector<128x3xf32> to vector<128x1xf32>
    %6 = vector.extract_strided_slice %4 {offsets = [0, 1], sizes = [128, 1], strides = [1, 1]} : vector<128x3xf32> to vector<128x1xf32>
    %7 = vector.extract_strided_slice %4 {offsets = [0, 2], sizes = [128, 1], strides = [1, 1]} : vector<128x3xf32> to vector<128x1xf32>
    %8 = arith.mulf %5, %5 : vector<128x1xf32>
    %9 = arith.mulf %6, %6 : vector<128x1xf32>
    %10 = arith.addf %8, %9 : vector<128x1xf32>
    %11 = arith.mulf %7, %7 : vector<128x1xf32>
    %12 = arith.addf %10, %11 : vector<128x1xf32>
    %cst = arith.constant 9.99999996E-13 : f32
    %13 = vector.broadcast %cst : f32 to vector<128x1xf32>
    %14 = arith.addf %12, %13 : vector<128x1xf32>
    %15 = math.rsqrt %14 : vector<128x1xf32>
    %16 = arith.mulf %14, %15 : vector<128x1xf32>
    %17 = arith.mulf %5, %15 : vector<128x1xf32>
    %18 = arith.mulf %6, %15 : vector<128x1xf32>
    %19 = arith.mulf %7, %15 : vector<128x1xf32>
    %c0_5 = arith.constant 0 : index
    %c0_6 = arith.constant 0 : index
    %20 = vector.load %arg4[%c0_5, %c0_6] : memref<1x32xf32, #tpu.memory_space<vmem>>, vector<1x32xf32>
    %21 = vector.broadcast %16 : vector<128x1xf32> to vector<128x32xf32>
    %22 = vector.broadcast %20 : vector<1x32xf32> to vector<128x32xf32>
    %23 = arith.subf %21, %22 : vector<128x32xf32>
    %cst_7 = arith.constant -1.000000e+01 : f32
    %24 = vector.broadcast %cst_7 : f32 to vector<128x32xf32>
    %25 = arith.mulf %24, %23 : vector<128x32xf32>
    %26 = arith.mulf %25, %23 : vector<128x32xf32>
    %27 = math.exp %26 : vector<128x32xf32>
    %28 = arith.truncf %27 : vector<128x32xf32> to vector<128x32xbf16>
    %c0_8 = arith.constant 0 : index
    %c0_9 = arith.constant 0 : index
    %c0_10 = arith.constant 0 : index
    %29 = vector.load %arg5[%c0_8, %c0_9, %c0_10] : memref<3x32x128xbf16, #tpu.memory_space<vmem>>, vector<1x32x128xbf16>
    %30 = vector.shape_cast %29 : vector<1x32x128xbf16> to vector<32x128xbf16>
    %cst_11 = arith.constant dense<0.000000e+00> : vector<128x128xf32>
    %31 = tpu.matmul %28, %30, %cst_11 {dimension_numbers = #tpu.dot_dimension_numbers<[1], [0], [0], [1], [0, 0, 1, 1], [], []>} : vector<128x32xbf16>, vector<32x128xbf16>, vector<128x128xf32> -> vector<128x128xf32>
    %c0_12 = arith.constant 0 : index
    %c0_13 = arith.constant 0 : index
    %c0_14 = arith.constant 0 : index
    %32 = vector.load %arg6[%c0_12, %c0_13, %c0_14] : memref<3x1x128xf32, #tpu.memory_space<vmem>>, vector<1x1x128xf32>
    %33 = vector.shape_cast %32 : vector<1x1x128xf32> to vector<1x128xf32>
    %34 = vector.broadcast %33 : vector<1x128xf32> to vector<128x128xf32>
    %35 = arith.addf %31, %34 : vector<128x128xf32>
    %cst_15 = arith.constant 0.000000e+00 : f32
    %36 = vector.broadcast %cst_15 : f32 to vector<128x128xf32>
    %37 = arith.maximumf %35, %36 : vector<128x128xf32>
    %38 = arith.truncf %37 : vector<128x128xf32> to vector<128x128xbf16>
    %c0_16 = arith.constant 0 : index
    %c0_17 = arith.constant 0 : index
    %c0_18 = arith.constant 0 : index
    %39 = vector.load %arg7[%c0_16, %c0_17, %c0_18] : memref<3x128x128xbf16, #tpu.memory_space<vmem>>, vector<1x128x128xbf16>
    %40 = vector.shape_cast %39 : vector<1x128x128xbf16> to vector<128x128xbf16>
    %cst_19 = arith.constant dense<0.000000e+00> : vector<128x128xf32>
    %41 = tpu.matmul %38, %40, %cst_19 {dimension_numbers = #tpu.dot_dimension_numbers<[1], [0], [0], [1], [0, 0, 1, 1], [], []>} : vector<128x128xbf16>, vector<128x128xbf16>, vector<128x128xf32> -> vector<128x128xf32>
    %c0_20 = arith.constant 0 : index
    %c0_21 = arith.constant 0 : index
    %c0_22 = arith.constant 0 : index
    %42 = vector.load %arg8[%c0_20, %c0_21, %c0_22] : memref<3x1x128xf32, #tpu.memory_space<vmem>>, vector<1x1x128xf32>
    %43 = vector.shape_cast %42 : vector<1x1x128xf32> to vector<1x128xf32>
    %44 = vector.broadcast %43 : vector<1x128xf32> to vector<128x128xf32>
    %45 = arith.addf %41, %44 : vector<128x128xf32>
    %c0_23 = arith.constant 0 : index
    %c0_24 = arith.constant 0 : index
    %46 = memref.load %arg9[%c0_23, %c0_24] : memref<3x3xf32, #tpu.memory_space<smem>>
    %47 = vector.broadcast %46 : f32 to vector<128x1xf32>
    %48 = arith.mulf %17, %47 : vector<128x1xf32>
    %c0_25 = arith.constant 0 : index
    %c1 = arith.constant 1 : index
    %49 = memref.load %arg9[%c0_25, %c1] : memref<3x3xf32, #tpu.memory_space<smem>>
    %50 = vector.broadcast %49 : f32 to vector<128x1xf32>
    %51 = arith.mulf %18, %50 : vector<128x1xf32>
    %52 = arith.addf %48, %51 : vector<128x1xf32>
    %c0_26 = arith.constant 0 : index
    %c2 = arith.constant 2 : index
    %53 = memref.load %arg9[%c0_26, %c2] : memref<3x3xf32, #tpu.memory_space<smem>>
    %54 = vector.broadcast %53 : f32 to vector<128x1xf32>
    %55 = arith.mulf %19, %54 : vector<128x1xf32>
    %56 = arith.addf %52, %55 : vector<128x1xf32>
    %57 = vector.broadcast %56 : vector<128x1xf32> to vector<128x128xf32>
    %58 = arith.mulf %45, %57 : vector<128x128xf32>
    %59 = arith.truncf %58 : vector<128x128xf32> to vector<128x128xbf16>
    %c0_27 = arith.constant 0 : index
    %c0_28 = arith.constant 0 : index
    %60 = vector.load %arg10[%c0_27, %c0_28] : memref<128x128xbf16, #tpu.memory_space<vmem>>, vector<128x128xbf16>
    tpu.vector_store %arg10[%c0_27, %c0_28], %59 {strides = array<i32>} : memref<128x128xbf16, #tpu.memory_space<vmem>>, vector<128x128xbf16>,
    %c1_29 = arith.constant 1 : index
    %c0_30 = arith.constant 0 : index
    %c0_31 = arith.constant 0 : index
    %61 = vector.load %arg5[%c1_29, %c0_30, %c0_31] : memref<3x32x128xbf16, #tpu.memory_space<vmem>>, vector<1x32x128xbf16>
    %62 = vector.shape_cast %61 : vector<1x32x128xbf16> to vector<32x128xbf16>
    %cst_32 = arith.constant dense<0.000000e+00> : vector<128x128xf32>
    %63 = tpu.matmul %28, %62, %cst_32 {dimension_numbers = #tpu.dot_dimension_numbers<[1], [0], [0], [1], [0, 0, 1, 1], [], []>} : vector<128x32xbf16>, vector<32x128xbf16>, vector<128x128xf32> -> vector<128x128xf32>
    %c1_33 = arith.constant 1 : index
    %c0_34 = arith.constant 0 : index
    %c0_35 = arith.constant 0 : index
    %64 = vector.load %arg6[%c1_33, %c0_34, %c0_35] : memref<3x1x128xf32, #tpu.memory_space<vmem>>, vector<1x1x128xf32>
    %65 = vector.shape_cast %64 : vector<1x1x128xf32> to vector<1x128xf32>
    %66 = vector.broadcast %65 : vector<1x128xf32> to vector<128x128xf32>
    %67 = arith.addf %63, %66 : vector<128x128xf32>
    %cst_36 = arith.constant 0.000000e+00 : f32
    %68 = vector.broadcast %cst_36 : f32 to vector<128x128xf32>
    %69 = arith.maximumf %67, %68 : vector<128x128xf32>
    %70 = arith.truncf %69 : vector<128x128xf32> to vector<128x128xbf16>
    %c1_37 = arith.constant 1 : index
    %c0_38 = arith.constant 0 : index
    %c0_39 = arith.constant 0 : index
    %71 = vector.load %arg7[%c1_37, %c0_38, %c0_39] : memref<3x128x128xbf16, #tpu.memory_space<vmem>>, vector<1x128x128xbf16>
    %72 = vector.shape_cast %71 : vector<1x128x128xbf16> to vector<128x128xbf16>
    %cst_40 = arith.constant dense<0.000000e+00> : vector<128x128xf32>
    %73 = tpu.matmul %70, %72, %cst_40 {dimension_numbers = #tpu.dot_dimension_numbers<[1], [0], [0], [1], [0, 0, 1, 1], [], []>} : vector<128x128xbf16>, vector<128x128xbf16>, vector<128x128xf32> -> vector<128x128xf32>
    %c1_41 = arith.constant 1 : index
    %c0_42 = arith.constant 0 : index
    %c0_43 = arith.constant 0 : index
    %74 = vector.load %arg8[%c1_41, %c0_42, %c0_43] : memref<3x1x128xf32, #tpu.memory_space<vmem>>, vector<1x1x128xf32>
    %75 = vector.shape_cast %74 : vector<1x1x128xf32> to vector<1x128xf32>
    %76 = vector.broadcast %75 : vector<1x128xf32> to vector<128x128xf32>
    %77 = arith.addf %73, %76 : vector<128x128xf32>
    %c1_44 = arith.constant 1 : index
    %c0_45 = arith.constant 0 : index
    %78 = memref.load %arg9[%c1_44, %c0_45] : memref<3x3xf32, #tpu.memory_space<smem>>
    %79 = vector.broadcast %78 : f32 to vector<128x1xf32>
    %80 = arith.mulf %17, %79 : vector<128x1xf32>
    %c1_46 = arith.constant 1 : index
    %c1_47 = arith.constant 1 : index
    %81 = memref.load %arg9[%c1_46, %c1_47] : memref<3x3xf32, #tpu.memory_space<smem>>
    %82 = vector.broadcast %81 : f32 to vector<128x1xf32>
    %83 = arith.mulf %18, %82 : vector<128x1xf32>
    %84 = arith.addf %80, %83 : vector<128x1xf32>
    %c1_48 = arith.constant 1 : index
    %c2_49 = arith.constant 2 : index
    %85 = memref.load %arg9[%c1_48, %c2_49] : memref<3x3xf32, #tpu.memory_space<smem>>
    %86 = vector.broadcast %85 : f32 to vector<128x1xf32>
    %87 = arith.mulf %19, %86 : vector<128x1xf32>
    %88 = arith.addf %84, %87 : vector<128x1xf32>
    %89 = vector.broadcast %88 : vector<128x1xf32> to vector<128x128xf32>
    %90 = arith.mulf %77, %89 : vector<128x128xf32>
    %91 = arith.truncf %90 : vector<128x128xf32> to vector<128x128xbf16>
    %c0_50 = arith.constant 0 : index
    %c0_51 = arith.constant 0 : index
    %92 = vector.load %arg11[%c0_50, %c0_51] : memref<128x128xbf16, #tpu.memory_space<vmem>>, vector<128x128xbf16>
    tpu.vector_store %arg11[%c0_50, %c0_51], %91 {strides = array<i32>} : memref<128x128xbf16, #tpu.memory_space<vmem>>, vector<128x128xbf16>,
    %c2_52 = arith.constant 2 : index
    %c0_53 = arith.constant 0 : index
    %c0_54 = arith.constant 0 : index
    %93 = vector.load %arg5[%c2_52, %c0_53, %c0_54] : memref<3x32x128xbf16, #tpu.memory_space<vmem>>, vector<1x32x128xbf16>
    %94 = vector.shape_cast %93 : vector<1x32x128xbf16> to vector<32x128xbf16>
    %cst_55 = arith.constant dense<0.000000e+00> : vector<128x128xf32>
    %95 = tpu.matmul %28, %94, %cst_55 {dimension_numbers = #tpu.dot_dimension_numbers<[1], [0], [0], [1], [0, 0, 1, 1], [], []>} : vector<128x32xbf16>, vector<32x128xbf16>, vector<128x128xf32> -> vector<128x128xf32>
    %c2_56 = arith.constant 2 : index
    %c0_57 = arith.constant 0 : index
    %c0_58 = arith.constant 0 : index
    %96 = vector.load %arg6[%c2_56, %c0_57, %c0_58] : memref<3x1x128xf32, #tpu.memory_space<vmem>>, vector<1x1x128xf32>
    %97 = vector.shape_cast %96 : vector<1x1x128xf32> to vector<1x128xf32>
    %98 = vector.broadcast %97 : vector<1x128xf32> to vector<128x128xf32>
    %99 = arith.addf %95, %98 : vector<128x128xf32>
    %cst_59 = arith.constant 0.000000e+00 : f32
    %100 = vector.broadcast %cst_59 : f32 to vector<128x128xf32>
    %101 = arith.maximumf %99, %100 : vector<128x128xf32>
    %102 = arith.truncf %101 : vector<128x128xf32> to vector<128x128xbf16>
    %c2_60 = arith.constant 2 : index
    %c0_61 = arith.constant 0 : index
    %c0_62 = arith.constant 0 : index
    %103 = vector.load %arg7[%c2_60, %c0_61, %c0_62] : memref<3x128x128xbf16, #tpu.memory_space<vmem>>, vector<1x128x128xbf16>
    %104 = vector.shape_cast %103 : vector<1x128x128xbf16> to vector<128x128xbf16>
    %cst_63 = arith.constant dense<0.000000e+00> : vector<128x128xf32>
    %105 = tpu.matmul %102, %104, %cst_63 {dimension_numbers = #tpu.dot_dimension_numbers<[1], [0], [0], [1], [0, 0, 1, 1], [], []>} : vector<128x128xbf16>, vector<128x128xbf16>, vector<128x128xf32> -> vector<128x128xf32>
    %c2_64 = arith.constant 2 : index
    %c0_65 = arith.constant 0 : index
    %c0_66 = arith.constant 0 : index
    %106 = vector.load %arg8[%c2_64, %c0_65, %c0_66] : memref<3x1x128xf32, #tpu.memory_space<vmem>>, vector<1x1x128xf32>
    %107 = vector.shape_cast %106 : vector<1x1x128xf32> to vector<1x128xf32>
    %108 = vector.broadcast %107 : vector<1x128xf32> to vector<128x128xf32>
    %109 = arith.addf %105, %108 : vector<128x128xf32>
    %c2_67 = arith.constant 2 : index
    %c0_68 = arith.constant 0 : index
    %110 = memref.load %arg9[%c2_67, %c0_68] : memref<3x3xf32, #tpu.memory_space<smem>>
    %111 = vector.broadcast %110 : f32 to vector<128x1xf32>
    %112 = arith.mulf %17, %111 : vector<128x1xf32>
    %c2_69 = arith.constant 2 : index
    %c1_70 = arith.constant 1 : index
    %113 = memref.load %arg9[%c2_69, %c1_70] : memref<3x3xf32, #tpu.memory_space<smem>>
    %114 = vector.broadcast %113 : f32 to vector<128x1xf32>
    %115 = arith.mulf %18, %114 : vector<128x1xf32>
    %116 = arith.addf %112, %115 : vector<128x1xf32>
    %c2_71 = arith.constant 2 : index
    %c2_72 = arith.constant 2 : index
    %117 = memref.load %arg9[%c2_71, %c2_72] : memref<3x3xf32, #tpu.memory_space<smem>>
    %118 = vector.broadcast %117 : f32 to vector<128x1xf32>
    %119 = arith.mulf %19, %118 : vector<128x1xf32>
    %120 = arith.addf %116, %119 : vector<128x1xf32>
    %121 = vector.broadcast %120 : vector<128x1xf32> to vector<128x128xf32>
    %122 = arith.mulf %109, %121 : vector<128x128xf32>
    %123 = arith.truncf %122 : vector<128x128xf32> to vector<128x128xbf16>
    %c0_73 = arith.constant 0 : index
    %c0_74 = arith.constant 0 : index
    %124 = vector.load %arg12[%c0_73, %c0_74] : memref<128x128xbf16, #tpu.memory_space<vmem>>, vector<128x128xbf16>
    tpu.vector_store %arg12[%c0_73, %c0_74], %123 {strides = array<i32>} : memref<128x128xbf16, #tpu.memory_space<vmem>>, vector<128x128xbf16>,
    return
  }
  func.func @transform_0(%arg0: i32) -> (i32, i32) {
    %c0_i32 = arith.constant 0 : i32
    %c0_i32_0 = arith.constant 0 : i32
    return %arg0, %c0_i32 : i32, i32
  }
  func.func @transform_1(%arg0: i32) -> (i32, i32) {
    %c0_i32 = arith.constant 0 : i32
    %c0_i32_0 = arith.constant 0 : i32
    return %arg0, %c0_i32 : i32, i32
  }
  func.func @transform_2(%arg0: i32) -> (i32, i32) {
    %c0_i32 = arith.constant 0 : i32
    %c0_i32_0 = arith.constant 0 : i32
    return %arg0, %c0_i32 : i32, i32
  }
  func.func @transform_3(%arg0: i32) -> (i32, i32) {
    %c0_i32 = arith.constant 0 : i32
    %c0_i32_0 = arith.constant 0 : i32
    %c0_i32_1 = arith.constant 0 : i32
    return %c0_i32, %c0_i32_0 : i32, i32
  }
  func.func @transform_4(%arg0: i32) -> (i32, i32, i32) {
    %c0_i32 = arith.constant 0 : i32
    %c0_i32_0 = arith.constant 0 : i32
    %c0_i32_1 = arith.constant 0 : i32
    %c0_i32_2 = arith.constant 0 : i32
    return %c0_i32, %c0_i32_0, %c0_i32_1 : i32, i32, i32
  }
  func.func @transform_5(%arg0: i32) -> (i32, i32, i32) {
    %c0_i32 = arith.constant 0 : i32
    %c0_i32_0 = arith.constant 0 : i32
    %c0_i32_1 = arith.constant 0 : i32
    %c0_i32_2 = arith.constant 0 : i32
    return %c0_i32, %c0_i32_0, %c0_i32_1 : i32, i32, i32
  }
  func.func @transform_6(%arg0: i32) -> (i32, i32, i32) {
    %c0_i32 = arith.constant 0 : i32
    %c0_i32_0 = arith.constant 0 : i32
    %c0_i32_1 = arith.constant 0 : i32
    %c0_i32_2 = arith.constant 0 : i32
    return %c0_i32, %c0_i32_0, %c0_i32_1 : i32, i32, i32
  }
  func.func @transform_7(%arg0: i32) -> (i32, i32, i32) {
    %c0_i32 = arith.constant 0 : i32
    %c0_i32_0 = arith.constant 0 : i32
    %c0_i32_1 = arith.constant 0 : i32
    %c0_i32_2 = arith.constant 0 : i32
    return %c0_i32, %c0_i32_0, %c0_i32_1 : i32, i32, i32
  }
  func.func @transform_8(%arg0: i32) -> (i32, i32) {
    %c0_i32 = arith.constant 0 : i32
    %c0_i32_0 = arith.constant 0 : i32
    %c0_i32_1 = arith.constant 0 : i32
    return %c0_i32, %c0_i32_0 : i32, i32
  }
  func.func @transform_9(%arg0: i32) -> (i32, i32) {
    %c0_i32 = arith.constant 0 : i32
    %c0_i32_0 = arith.constant 0 : i32
    return %arg0, %c0_i32 : i32, i32
  }
  func.func @transform_10(%arg0: i32) -> (i32, i32) {
    %c0_i32 = arith.constant 0 : i32
    %c0_i32_0 = arith.constant 0 : i32
    return %arg0, %c0_i32 : i32, i32
  }
  func.func @transform_11(%arg0: i32) -> (i32, i32) {
    %c0_i32 = arith.constant 0 : i32
    %c0_i32_0 = arith.constant 0 : i32
    return %arg0, %c0_i32 : i32, i32
  }
}

module attributes {stable_mosaic.version = 11 : i64} {
  func.func @embed_kernel(%arg0: i32, %arg1: memref<32x16xf32, #tpu.memory_space<vmem>>, %arg2: memref<16x128xbf16, #tpu.memory_space<vmem>>, %arg3: memref<1x128xf32, #tpu.memory_space<vmem>>, %arg4: memref<3x16x128xbf16, #tpu.memory_space<vmem>>, %arg5: memref<3x1x128xf32, #tpu.memory_space<vmem>>, %arg6: memref<32x128xf32, #tpu.memory_space<vmem>>, %arg7: memref<32x128xf32, #tpu.memory_space<vmem>>, %arg8: memref<32x128xf32, #tpu.memory_space<vmem>>, %arg9: memref<32x128xf32, #tpu.memory_space<vmem>>) attributes {dimension_semantics = [#tpu.dimension_semantics<parallel>], iteration_bounds = array<i64: 1>, scalar_prefetch = 0 : i64, scratch_operands = 0 : i64, tpu.core_type = #tpu.core_type<tc>, window_params = [{transform_indices = @transform_0, window_bounds = array<i64: 32, 16>}, {pipeline_mode = #tpu.pipeline_mode<synchronous>, transform_indices = @transform_1, window_bounds = array<i64: 16, 128>}, {pipeline_mode = #tpu.pipeline_mode<synchronous>, transform_indices = @transform_2, window_bounds = array<i64: 1, 128>}, {pipeline_mode = #tpu.pipeline_mode<synchronous>, transform_indices = @transform_3, window_bounds = array<i64: 3, 16, 128>}, {pipeline_mode = #tpu.pipeline_mode<synchronous>, transform_indices = @transform_4, window_bounds = array<i64: 3, 1, 128>}, {transform_indices = @transform_5, window_bounds = array<i64: 32, 128>}, {transform_indices = @transform_6, window_bounds = array<i64: 32, 128>}, {transform_indices = @transform_7, window_bounds = array<i64: 32, 128>}, {transform_indices = @transform_8, window_bounds = array<i64: 32, 128>}]} {
    %c0 = arith.constant 0 : index
    %c0_0 = arith.constant 0 : index
    %0 = vector.load %arg1[%c0, %c0_0] : memref<32x16xf32, #tpu.memory_space<vmem>>, vector<32x16xf32>
    %1 = arith.truncf %0 : vector<32x16xf32> to vector<32x16xbf16>
    %c0_1 = arith.constant 0 : index
    %c0_2 = arith.constant 0 : index
    %2 = vector.load %arg2[%c0_1, %c0_2] : memref<16x128xbf16, #tpu.memory_space<vmem>>, vector<16x128xbf16>
    %cst = arith.constant dense<0.000000e+00> : vector<32x128xf32>
    %3 = tpu.matmul %1, %2, %cst {dimension_numbers = #tpu.dot_dimension_numbers<[1], [0], [0], [1], [0, 0, 1, 1], [], []>} : vector<32x16xbf16>, vector<16x128xbf16>, vector<32x128xf32> -> vector<32x128xf32>
    %c0_3 = arith.constant 0 : index
    %c0_4 = arith.constant 0 : index
    %4 = vector.load %arg3[%c0_3, %c0_4] : memref<1x128xf32, #tpu.memory_space<vmem>>, vector<1x128xf32>
    %5 = vector.broadcast %4 : vector<1x128xf32> to vector<32x128xf32>
    %6 = arith.addf %3, %5 : vector<32x128xf32>
    %c0_5 = arith.constant 0 : index
    %c0_6 = arith.constant 0 : index
    %7 = vector.load %arg6[%c0_5, %c0_6] : memref<32x128xf32, #tpu.memory_space<vmem>>, vector<32x128xf32>
    tpu.vector_store %arg6[%c0_5, %c0_6], %6 {strides = array<i32>} : memref<32x128xf32, #tpu.memory_space<vmem>>, vector<32x128xf32>,
    %c0_7 = arith.constant 0 : index
    %c0_8 = arith.constant 0 : index
    %c0_9 = arith.constant 0 : index
    %8 = vector.load %arg4[%c0_7, %c0_8, %c0_9] : memref<3x16x128xbf16, #tpu.memory_space<vmem>>, vector<1x16x128xbf16>
    %9 = vector.shape_cast %8 : vector<1x16x128xbf16> to vector<16x128xbf16>
    %cst_10 = arith.constant dense<0.000000e+00> : vector<32x128xf32>
    %10 = tpu.matmul %1, %9, %cst_10 {dimension_numbers = #tpu.dot_dimension_numbers<[1], [0], [0], [1], [0, 0, 1, 1], [], []>} : vector<32x16xbf16>, vector<16x128xbf16>, vector<32x128xf32> -> vector<32x128xf32>
    %c0_11 = arith.constant 0 : index
    %c0_12 = arith.constant 0 : index
    %c0_13 = arith.constant 0 : index
    %11 = vector.load %arg5[%c0_11, %c0_12, %c0_13] : memref<3x1x128xf32, #tpu.memory_space<vmem>>, vector<1x1x128xf32>
    %12 = vector.shape_cast %11 : vector<1x1x128xf32> to vector<1x128xf32>
    %13 = vector.broadcast %12 : vector<1x128xf32> to vector<32x128xf32>
    %14 = arith.addf %10, %13 : vector<32x128xf32>
    %c0_14 = arith.constant 0 : index
    %c0_15 = arith.constant 0 : index
    %15 = vector.load %arg7[%c0_14, %c0_15] : memref<32x128xf32, #tpu.memory_space<vmem>>, vector<32x128xf32>
    tpu.vector_store %arg7[%c0_14, %c0_15], %14 {strides = array<i32>} : memref<32x128xf32, #tpu.memory_space<vmem>>, vector<32x128xf32>,
    %c1 = arith.constant 1 : index
    %c0_16 = arith.constant 0 : index
    %c0_17 = arith.constant 0 : index
    %16 = vector.load %arg4[%c1, %c0_16, %c0_17] : memref<3x16x128xbf16, #tpu.memory_space<vmem>>, vector<1x16x128xbf16>
    %17 = vector.shape_cast %16 : vector<1x16x128xbf16> to vector<16x128xbf16>
    %cst_18 = arith.constant dense<0.000000e+00> : vector<32x128xf32>
    %18 = tpu.matmul %1, %17, %cst_18 {dimension_numbers = #tpu.dot_dimension_numbers<[1], [0], [0], [1], [0, 0, 1, 1], [], []>} : vector<32x16xbf16>, vector<16x128xbf16>, vector<32x128xf32> -> vector<32x128xf32>
    %c1_19 = arith.constant 1 : index
    %c0_20 = arith.constant 0 : index
    %c0_21 = arith.constant 0 : index
    %19 = vector.load %arg5[%c1_19, %c0_20, %c0_21] : memref<3x1x128xf32, #tpu.memory_space<vmem>>, vector<1x1x128xf32>
    %20 = vector.shape_cast %19 : vector<1x1x128xf32> to vector<1x128xf32>
    %21 = vector.broadcast %20 : vector<1x128xf32> to vector<32x128xf32>
    %22 = arith.addf %18, %21 : vector<32x128xf32>
    %c0_22 = arith.constant 0 : index
    %c0_23 = arith.constant 0 : index
    %23 = vector.load %arg8[%c0_22, %c0_23] : memref<32x128xf32, #tpu.memory_space<vmem>>, vector<32x128xf32>
    tpu.vector_store %arg8[%c0_22, %c0_23], %22 {strides = array<i32>} : memref<32x128xf32, #tpu.memory_space<vmem>>, vector<32x128xf32>,
    %c2 = arith.constant 2 : index
    %c0_24 = arith.constant 0 : index
    %c0_25 = arith.constant 0 : index
    %24 = vector.load %arg4[%c2, %c0_24, %c0_25] : memref<3x16x128xbf16, #tpu.memory_space<vmem>>, vector<1x16x128xbf16>
    %25 = vector.shape_cast %24 : vector<1x16x128xbf16> to vector<16x128xbf16>
    %cst_26 = arith.constant dense<0.000000e+00> : vector<32x128xf32>
    %26 = tpu.matmul %1, %25, %cst_26 {dimension_numbers = #tpu.dot_dimension_numbers<[1], [0], [0], [1], [0, 0, 1, 1], [], []>} : vector<32x16xbf16>, vector<16x128xbf16>, vector<32x128xf32> -> vector<32x128xf32>
    %c2_27 = arith.constant 2 : index
    %c0_28 = arith.constant 0 : index
    %c0_29 = arith.constant 0 : index
    %27 = vector.load %arg5[%c2_27, %c0_28, %c0_29] : memref<3x1x128xf32, #tpu.memory_space<vmem>>, vector<1x1x128xf32>
    %28 = vector.shape_cast %27 : vector<1x1x128xf32> to vector<1x128xf32>
    %29 = vector.broadcast %28 : vector<1x128xf32> to vector<32x128xf32>
    %30 = arith.addf %26, %29 : vector<32x128xf32>
    %c0_30 = arith.constant 0 : index
    %c0_31 = arith.constant 0 : index
    %31 = vector.load %arg9[%c0_30, %c0_31] : memref<32x128xf32, #tpu.memory_space<vmem>>, vector<32x128xf32>
    tpu.vector_store %arg9[%c0_30, %c0_31], %30 {strides = array<i32>} : memref<32x128xf32, #tpu.memory_space<vmem>>, vector<32x128xf32>,
    return
  }
  func.func @transform_0(%arg0: i32) -> (i32, i32) {
    %c0_i32 = arith.constant 0 : i32
    %c0_i32_0 = arith.constant 0 : i32
    return %arg0, %c0_i32 : i32, i32
  }
  func.func @transform_1(%arg0: i32) -> (i32, i32) {
    %c0_i32 = arith.constant 0 : i32
    %c0_i32_0 = arith.constant 0 : i32
    %c0_i32_1 = arith.constant 0 : i32
    return %c0_i32, %c0_i32_0 : i32, i32
  }
  func.func @transform_2(%arg0: i32) -> (i32, i32) {
    %c0_i32 = arith.constant 0 : i32
    %c0_i32_0 = arith.constant 0 : i32
    %c0_i32_1 = arith.constant 0 : i32
    return %c0_i32, %c0_i32_0 : i32, i32
  }
  func.func @transform_3(%arg0: i32) -> (i32, i32, i32) {
    %c0_i32 = arith.constant 0 : i32
    %c0_i32_0 = arith.constant 0 : i32
    %c0_i32_1 = arith.constant 0 : i32
    %c0_i32_2 = arith.constant 0 : i32
    return %c0_i32, %c0_i32_0, %c0_i32_1 : i32, i32, i32
  }
  func.func @transform_4(%arg0: i32) -> (i32, i32, i32) {
    %c0_i32 = arith.constant 0 : i32
    %c0_i32_0 = arith.constant 0 : i32
    %c0_i32_1 = arith.constant 0 : i32
    %c0_i32_2 = arith.constant 0 : i32
    return %c0_i32, %c0_i32_0, %c0_i32_1 : i32, i32, i32
  }
  func.func @transform_5(%arg0: i32) -> (i32, i32) {
    %c0_i32 = arith.constant 0 : i32
    %c0_i32_0 = arith.constant 0 : i32
    return %arg0, %c0_i32 : i32, i32
  }
  func.func @transform_6(%arg0: i32) -> (i32, i32) {
    %c0_i32 = arith.constant 0 : i32
    %c0_i32_0 = arith.constant 0 : i32
    return %arg0, %c0_i32 : i32, i32
  }
  func.func @transform_7(%arg0: i32) -> (i32, i32) {
    %c0_i32 = arith.constant 0 : i32
    %c0_i32_0 = arith.constant 0 : i32
    return %arg0, %c0_i32 : i32, i32
  }
  func.func @transform_8(%arg0: i32) -> (i32, i32) {
    %c0_i32 = arith.constant 0 : i32
    %c0_i32_0 = arith.constant 0 : i32
    return %arg0, %c0_i32 : i32, i32
  }
}

module attributes {stable_mosaic.version = 11 : i64} {
  func.func @conv_kernel(%arg0: i32, %arg1: memref<128xi32, #tpu.memory_space<smem>>, %arg2: memref<128xi32, #tpu.memory_space<smem>>, %arg3: memref<32x128xf32, #tpu.memory_space<vmem>>, %arg4: memref<128x128xbf16, #tpu.memory_space<vmem>>, %arg5: memref<32x128xf32, #tpu.memory_space<vmem>>, %arg6: memref<128x128xbf16, #tpu.memory_space<vmem>>, %arg7: memref<32x128xf32, #tpu.memory_space<vmem>>, %arg8: memref<128x128xf32, #tpu.memory_space<vmem>>, %arg9: memref<32x128xf32, #tpu.memory_space<vmem>>) attributes {dimension_semantics = [#tpu.dimension_semantics<arbitrary>], iteration_bounds = array<i64: 1>, scalar_prefetch = 2 : i64, scratch_operands = 2 : i64, tpu.core_type = #tpu.core_type<tc>, window_params = [{pipeline_mode = #tpu.pipeline_mode<synchronous>, transform_indices = @transform_0, window_bounds = array<i64: 32, 128>}, {transform_indices = @transform_1, window_bounds = array<i64: 128, 128>}, {pipeline_mode = #tpu.pipeline_mode<synchronous>, transform_indices = @transform_2, window_bounds = array<i64: 32, 128>}, {pipeline_mode = #tpu.pipeline_mode<synchronous>, transform_indices = @transform_3, window_bounds = array<i64: 128, 128>}, {pipeline_mode = #tpu.pipeline_mode<synchronous>, transform_indices = @transform_4, window_bounds = array<i64: 32, 128>}]} {
    %c0_i32 = arith.constant 0 : i32
    %0 = arith.cmpi eq, %arg0, %c0_i32 : i32
    %1 = arith.extui %0 : i1 to i32
    %c0_i32_0 = arith.constant 0 : i32
    %2 = arith.cmpi ne, %1, %c0_i32_0 : i32
    scf.if %2 {
      %cst = arith.constant 0.000000e+00 : f32
      %11 = vector.broadcast %cst : f32 to vector<32x128xf32>
      %c0_9 = arith.constant 0 : index
      %c0_10 = arith.constant 0 : index
      %12 = vector.load %arg9[%c0_9, %c0_10] : memref<32x128xf32, #tpu.memory_space<vmem>>, vector<32x128xf32>
      tpu.vector_store %arg9[%c0_9, %c0_10], %11 {strides = array<i32>} : memref<32x128xf32, #tpu.memory_space<vmem>>, vector<32x128xf32>,
    } else {
    }
    %c0 = arith.constant 0 : index
    %c0_1 = arith.constant 0 : index
    %3 = vector.load %arg4[%c0, %c0_1] : memref<128x128xbf16, #tpu.memory_space<vmem>>, vector<128x128xbf16>
    %4 = arith.extf %3 : vector<128x128xbf16> to vector<128x128xf32>
    %c0_2 = arith.constant 0 : index
    %c0_3 = arith.constant 0 : index
    %5 = vector.load %arg8[%c0_2, %c0_3] : memref<128x128xf32, #tpu.memory_space<vmem>>, vector<128x128xf32>
    tpu.vector_store %arg8[%c0_2, %c0_3], %4 {strides = array<i32>} : memref<128x128xf32, #tpu.memory_space<vmem>>, vector<128x128xf32>,
    %c128_i32 = arith.constant 128 : i32
    %6 = arith.muli %arg0, %c128_i32 : i32
    %c0_i32_4 = arith.constant 0 : i32
    %c128_i32_5 = arith.constant 128 : i32
    %7 = arith.addi %c0_i32_4, %c128_i32_5 : i32
    %c1_i32 = arith.constant 1 : i32
    scf.for %arg10 = %c0_i32_4 to %7 step %c1_i32  : i32 {
      %11 = arith.addi %6, %arg10 : i32
      %12 = arith.index_cast %11 : i32 to index
      %13 = memref.load %arg1[%12] : memref<128xi32, #tpu.memory_space<smem>>
      %14 = arith.addi %6, %arg10 : i32
      %15 = arith.index_cast %14 : i32 to index
      %16 = memref.load %arg2[%15] : memref<128xi32, #tpu.memory_space<smem>>
      %17 = arith.index_cast %13 : i32 to index
      %c0_9 = arith.constant 0 : index
      %18 = vector.load %arg3[%17, %c0_9] : memref<32x128xf32, #tpu.memory_space<vmem>>, vector<1x128xf32>
      %19 = arith.index_cast %arg10 : i32 to index
      %c0_10 = arith.constant 0 : index
      %20 = vector.load %arg8[%19, %c0_10] : memref<128x128xf32, #tpu.memory_space<vmem>>, vector<1x128xf32>
      %21 = arith.mulf %18, %20 : vector<1x128xf32>
      %22 = arith.index_cast %16 : i32 to index
      %c0_11 = arith.constant 0 : index
      %23 = vector.load %arg9[%22, %c0_11] : memref<32x128xf32, #tpu.memory_space<vmem>>, vector<1x128xf32>
      %24 = arith.addf %23, %21 : vector<1x128xf32>
      %25 = arith.index_cast %16 : i32 to index
      %c0_12 = arith.constant 0 : index
      %26 = vector.load %arg9[%25, %c0_12] : memref<32x128xf32, #tpu.memory_space<vmem>>, vector<1x128xf32>
      tpu.vector_store %arg9[%25, %c0_12], %24 {strides = array<i32>} : memref<32x128xf32, #tpu.memory_space<vmem>>, vector<1x128xf32>,
    }
    %c128_i32_6 = arith.constant 128 : i32
    %c0_i32_7 = arith.constant 0 : i32
    %8 = arith.cmpi eq, %arg0, %c0_i32_7 : i32
    %9 = arith.extui %8 : i1 to i32
    %c0_i32_8 = arith.constant 0 : i32
    %10 = arith.cmpi ne, %9, %c0_i32_8 : i32
    scf.if %10 {
      %c0_9 = arith.constant 0 : index
      %c0_10 = arith.constant 0 : index
      %11 = vector.load %arg9[%c0_9, %c0_10] : memref<32x128xf32, #tpu.memory_space<vmem>>, vector<32x128xf32>
      %12 = arith.truncf %11 : vector<32x128xf32> to vector<32x128xbf16>
      %c0_11 = arith.constant 0 : index
      %c0_12 = arith.constant 0 : index
      %13 = vector.load %arg6[%c0_11, %c0_12] : memref<128x128xbf16, #tpu.memory_space<vmem>>, vector<128x128xbf16>
      %cst = arith.constant dense<0.000000e+00> : vector<32x128xf32>
      %14 = tpu.matmul %12, %13, %cst {dimension_numbers = #tpu.dot_dimension_numbers<[1], [0], [0], [1], [0, 0, 1, 1], [], []>} : vector<32x128xbf16>, vector<128x128xbf16>, vector<32x128xf32> -> vector<32x128xf32>
      %c0_13 = arith.constant 0 : index
      %c0_14 = arith.constant 0 : index
      %15 = vector.load %arg5[%c0_13, %c0_14] : memref<32x128xf32, #tpu.memory_space<vmem>>, vector<32x128xf32>
      %16 = arith.addf %14, %15 : vector<32x128xf32>
      %17 = arith.negf %16 : vector<32x128xf32>
      %18 = math.exp %17 : vector<32x128xf32>
      %cst_15 = arith.constant 1.000000e+00 : f32
      %19 = vector.broadcast %cst_15 : f32 to vector<32x128xf32>
      %20 = arith.addf %19, %18 : vector<32x128xf32>
      %21 = arith.divf %19, %20 : vector<32x128xf32>
      %22 = arith.mulf %16, %21 : vector<32x128xf32>
      %c0_16 = arith.constant 0 : index
      %c0_17 = arith.constant 0 : index
      %23 = vector.load %arg7[%c0_16, %c0_17] : memref<32x128xf32, #tpu.memory_space<vmem>>, vector<32x128xf32>
      tpu.vector_store %arg7[%c0_16, %c0_17], %22 {strides = array<i32>} : memref<32x128xf32, #tpu.memory_space<vmem>>, vector<32x128xf32>,
    } else {
    }
    return
  }
  func.func @transform_0(%arg0: i32, %arg1: memref<128xi32, #tpu.memory_space<smem>>, %arg2: memref<128xi32, #tpu.memory_space<smem>>) -> (i32, i32) {
    %c0_i32 = arith.constant 0 : i32
    %c0_i32_0 = arith.constant 0 : i32
    %c0_i32_1 = arith.constant 0 : i32
    return %c0_i32, %c0_i32_0 : i32, i32
  }
  func.func @transform_1(%arg0: i32, %arg1: memref<128xi32, #tpu.memory_space<smem>>, %arg2: memref<128xi32, #tpu.memory_space<smem>>) -> (i32, i32) {
    %c0_i32 = arith.constant 0 : i32
    %c0_i32_0 = arith.constant 0 : i32
    return %arg0, %c0_i32 : i32, i32
  }
  func.func @transform_2(%arg0: i32, %arg1: memref<128xi32, #tpu.memory_space<smem>>, %arg2: memref<128xi32, #tpu.memory_space<smem>>) -> (i32, i32) {
    %c0_i32 = arith.constant 0 : i32
    %c0_i32_0 = arith.constant 0 : i32
    %c0_i32_1 = arith.constant 0 : i32
    return %c0_i32, %c0_i32_0 : i32, i32
  }
  func.func @transform_3(%arg0: i32, %arg1: memref<128xi32, #tpu.memory_space<smem>>, %arg2: memref<128xi32, #tpu.memory_space<smem>>) -> (i32, i32) {
    %c0_i32 = arith.constant 0 : i32
    %c0_i32_0 = arith.constant 0 : i32
    %c0_i32_1 = arith.constant 0 : i32
    return %c0_i32, %c0_i32_0 : i32, i32
  }
  func.func @transform_4(%arg0: i32, %arg1: memref<128xi32, #tpu.memory_space<smem>>, %arg2: memref<128xi32, #tpu.memory_space<smem>>) -> (i32, i32) {
    %c0_i32 = arith.constant 0 : i32
    %c0_i32_0 = arith.constant 0 : i32
    %c0_i32_1 = arith.constant 0 : i32
    return %c0_i32, %c0_i32_0 : i32, i32
  }
}

module attributes {stable_mosaic.version = 11 : i64} {
  func.func @conv_kernel(%arg0: i32, %arg1: memref<128xi32, #tpu.memory_space<smem>>, %arg2: memref<128xi32, #tpu.memory_space<smem>>, %arg3: memref<32x128xf32, #tpu.memory_space<vmem>>, %arg4: memref<128x128xbf16, #tpu.memory_space<vmem>>, %arg5: memref<32x128xf32, #tpu.memory_space<vmem>>, %arg6: memref<128x128xbf16, #tpu.memory_space<vmem>>, %arg7: memref<32x128xf32, #tpu.memory_space<vmem>>, %arg8: memref<128x128xf32, #tpu.memory_space<vmem>>, %arg9: memref<32x128xf32, #tpu.memory_space<vmem>>) attributes {dimension_semantics = [#tpu.dimension_semantics<arbitrary>], iteration_bounds = array<i64: 1>, scalar_prefetch = 2 : i64, scratch_operands = 2 : i64, tpu.core_type = #tpu.core_type<tc>, window_params = [{pipeline_mode = #tpu.pipeline_mode<synchronous>, transform_indices = @transform_0, window_bounds = array<i64: 32, 128>}, {transform_indices = @transform_1, window_bounds = array<i64: 128, 128>}, {pipeline_mode = #tpu.pipeline_mode<synchronous>, transform_indices = @transform_2, window_bounds = array<i64: 32, 128>}, {pipeline_mode = #tpu.pipeline_mode<synchronous>, transform_indices = @transform_3, window_bounds = array<i64: 128, 128>}, {pipeline_mode = #tpu.pipeline_mode<synchronous>, transform_indices = @transform_4, window_bounds = array<i64: 32, 128>}]} {
    %c0_i32 = arith.constant 0 : i32
    %0 = arith.cmpi eq, %arg0, %c0_i32 : i32
    %1 = arith.extui %0 : i1 to i32
    %c0_i32_0 = arith.constant 0 : i32
    %2 = arith.cmpi ne, %1, %c0_i32_0 : i32
    scf.if %2 {
      %cst = arith.constant 0.000000e+00 : f32
      %11 = vector.broadcast %cst : f32 to vector<32x128xf32>
      %c0_9 = arith.constant 0 : index
      %c0_10 = arith.constant 0 : index
      %12 = vector.load %arg9[%c0_9, %c0_10] : memref<32x128xf32, #tpu.memory_space<vmem>>, vector<32x128xf32>
      tpu.vector_store %arg9[%c0_9, %c0_10], %11 {strides = array<i32>} : memref<32x128xf32, #tpu.memory_space<vmem>>, vector<32x128xf32>,
    } else {
    }
    %c0 = arith.constant 0 : index
    %c0_1 = arith.constant 0 : index
    %3 = vector.load %arg4[%c0, %c0_1] : memref<128x128xbf16, #tpu.memory_space<vmem>>, vector<128x128xbf16>
    %4 = arith.extf %3 : vector<128x128xbf16> to vector<128x128xf32>
    %c0_2 = arith.constant 0 : index
    %c0_3 = arith.constant 0 : index
    %5 = vector.load %arg8[%c0_2, %c0_3] : memref<128x128xf32, #tpu.memory_space<vmem>>, vector<128x128xf32>
    tpu.vector_store %arg8[%c0_2, %c0_3], %4 {strides = array<i32>} : memref<128x128xf32, #tpu.memory_space<vmem>>, vector<128x128xf32>,
    %c128_i32 = arith.constant 128 : i32
    %6 = arith.muli %arg0, %c128_i32 : i32
    %c0_i32_4 = arith.constant 0 : i32
    %c128_i32_5 = arith.constant 128 : i32
    %7 = arith.addi %c0_i32_4, %c128_i32_5 : i32
    %c1_i32 = arith.constant 1 : i32
    scf.for %arg10 = %c0_i32_4 to %7 step %c1_i32  : i32 {
      %11 = arith.addi %6, %arg10 : i32
      %12 = arith.index_cast %11 : i32 to index
      %13 = memref.load %arg1[%12] : memref<128xi32, #tpu.memory_space<smem>>
      %14 = arith.addi %6, %arg10 : i32
      %15 = arith.index_cast %14 : i32 to index
      %16 = memref.load %arg2[%15] : memref<128xi32, #tpu.memory_space<smem>>
      %17 = arith.index_cast %13 : i32 to index
      %c0_9 = arith.constant 0 : index
      %18 = vector.load %arg3[%17, %c0_9] : memref<32x128xf32, #tpu.memory_space<vmem>>, vector<1x128xf32>
      %19 = arith.index_cast %arg10 : i32 to index
      %c0_10 = arith.constant 0 : index
      %20 = vector.load %arg8[%19, %c0_10] : memref<128x128xf32, #tpu.memory_space<vmem>>, vector<1x128xf32>
      %21 = arith.mulf %18, %20 : vector<1x128xf32>
      %22 = arith.index_cast %16 : i32 to index
      %c0_11 = arith.constant 0 : index
      %23 = vector.load %arg9[%22, %c0_11] : memref<32x128xf32, #tpu.memory_space<vmem>>, vector<1x128xf32>
      %24 = arith.addf %23, %21 : vector<1x128xf32>
      %25 = arith.index_cast %16 : i32 to index
      %c0_12 = arith.constant 0 : index
      %26 = vector.load %arg9[%25, %c0_12] : memref<32x128xf32, #tpu.memory_space<vmem>>, vector<1x128xf32>
      tpu.vector_store %arg9[%25, %c0_12], %24 {strides = array<i32>} : memref<32x128xf32, #tpu.memory_space<vmem>>, vector<1x128xf32>,
    }
    %c128_i32_6 = arith.constant 128 : i32
    %c0_i32_7 = arith.constant 0 : i32
    %8 = arith.cmpi eq, %arg0, %c0_i32_7 : i32
    %9 = arith.extui %8 : i1 to i32
    %c0_i32_8 = arith.constant 0 : i32
    %10 = arith.cmpi ne, %9, %c0_i32_8 : i32
    scf.if %10 {
      %c0_9 = arith.constant 0 : index
      %c0_10 = arith.constant 0 : index
      %11 = vector.load %arg9[%c0_9, %c0_10] : memref<32x128xf32, #tpu.memory_space<vmem>>, vector<32x128xf32>
      %12 = arith.truncf %11 : vector<32x128xf32> to vector<32x128xbf16>
      %c0_11 = arith.constant 0 : index
      %c0_12 = arith.constant 0 : index
      %13 = vector.load %arg6[%c0_11, %c0_12] : memref<128x128xbf16, #tpu.memory_space<vmem>>, vector<128x128xbf16>
      %cst = arith.constant dense<0.000000e+00> : vector<32x128xf32>
      %14 = tpu.matmul %12, %13, %cst {dimension_numbers = #tpu.dot_dimension_numbers<[1], [0], [0], [1], [0, 0, 1, 1], [], []>} : vector<32x128xbf16>, vector<128x128xbf16>, vector<32x128xf32> -> vector<32x128xf32>
      %c0_13 = arith.constant 0 : index
      %c0_14 = arith.constant 0 : index
      %15 = vector.load %arg5[%c0_13, %c0_14] : memref<32x128xf32, #tpu.memory_space<vmem>>, vector<32x128xf32>
      %16 = arith.addf %14, %15 : vector<32x128xf32>
      %17 = arith.negf %16 : vector<32x128xf32>
      %18 = math.exp %17 : vector<32x128xf32>
      %cst_15 = arith.constant 1.000000e+00 : f32
      %19 = vector.broadcast %cst_15 : f32 to vector<32x128xf32>
      %20 = arith.addf %19, %18 : vector<32x128xf32>
      %21 = arith.divf %19, %20 : vector<32x128xf32>
      %22 = arith.mulf %16, %21 : vector<32x128xf32>
      %c0_16 = arith.constant 0 : index
      %c0_17 = arith.constant 0 : index
      %23 = vector.load %arg7[%c0_16, %c0_17] : memref<32x128xf32, #tpu.memory_space<vmem>>, vector<32x128xf32>
      tpu.vector_store %arg7[%c0_16, %c0_17], %22 {strides = array<i32>} : memref<32x128xf32, #tpu.memory_space<vmem>>, vector<32x128xf32>,
    } else {
    }
    return
  }
  func.func @transform_0(%arg0: i32, %arg1: memref<128xi32, #tpu.memory_space<smem>>, %arg2: memref<128xi32, #tpu.memory_space<smem>>) -> (i32, i32) {
    %c0_i32 = arith.constant 0 : i32
    %c0_i32_0 = arith.constant 0 : i32
    %c0_i32_1 = arith.constant 0 : i32
    return %c0_i32, %c0_i32_0 : i32, i32
  }
  func.func @transform_1(%arg0: i32, %arg1: memref<128xi32, #tpu.memory_space<smem>>, %arg2: memref<128xi32, #tpu.memory_space<smem>>) -> (i32, i32) {
    %c0_i32 = arith.constant 0 : i32
    %c0_i32_0 = arith.constant 0 : i32
    return %arg0, %c0_i32 : i32, i32
  }
  func.func @transform_2(%arg0: i32, %arg1: memref<128xi32, #tpu.memory_space<smem>>, %arg2: memref<128xi32, #tpu.memory_space<smem>>) -> (i32, i32) {
    %c0_i32 = arith.constant 0 : i32
    %c0_i32_0 = arith.constant 0 : i32
    %c0_i32_1 = arith.constant 0 : i32
    return %c0_i32, %c0_i32_0 : i32, i32
  }
  func.func @transform_3(%arg0: i32, %arg1: memref<128xi32, #tpu.memory_space<smem>>, %arg2: memref<128xi32, #tpu.memory_space<smem>>) -> (i32, i32) {
    %c0_i32 = arith.constant 0 : i32
    %c0_i32_0 = arith.constant 0 : i32
    %c0_i32_1 = arith.constant 0 : i32
    return %c0_i32, %c0_i32_0 : i32, i32
  }
  func.func @transform_4(%arg0: i32, %arg1: memref<128xi32, #tpu.memory_space<smem>>, %arg2: memref<128xi32, #tpu.memory_space<smem>>) -> (i32, i32) {
    %c0_i32 = arith.constant 0 : i32
    %c0_i32_0 = arith.constant 0 : i32
    %c0_i32_1 = arith.constant 0 : i32
    return %c0_i32, %c0_i32_0 : i32, i32
  }
}

</mosaic_0001>

<llo_original>
// kernel: rep_module_forward.9
$region0: #{rep_module_forward.9}
  #allocation0 [shape = 'u32[]', space=smem, size = 0x4, offset = 0x4, fixed_abs, tag = 'smem constant byte address 0x4 - core index']
  #allocation1 [shape = 'u32[144,128]{1,0:T(1,128)}', space=vmem, size = 0x12000, scoped, tag = 'internal scratch']
  #allocation2 [shape = 'f32[128,128]{1,0:T(8,128)}', space=vmem, size = 0x10000, scoped, tag = 'scratch operand']
  #allocation3 [shape = 'f32[32,128]{1,0:T(8,128)}', space=vmem, size = 0x4000, scoped, tag = 'scratch operand']
  #allocation4 [shape = 's32[1]{0}', space=sflag, size = 0x4, scoped, tag = 'scoped memory for rep_module_forward.9']
  #allocation5 [shape = 'u8[512]{0}', space=smem, size = 0x200, scoped, tag = 'prefetched SMEM operand 0']
  #allocation6 [shape = 'u8[512]{0}', space=smem, size = 0x200, scoped, tag = 'prefetched SMEM operand 1']
  %s0 = inlined_call_operand.vmem [shape: s32[128], index: 0, kind: input, shape index: {}]
  %s1 = inlined_call_operand.vmem [shape: s32[128], index: 1, kind: input, shape index: {}]
  %s2 = inlined_call_operand.vmem [shape: f32[32,128], index: 2, kind: input, shape index: {}]
  %s3 = inlined_call_operand.vmem [shape: bf16[128,128], index: 3, kind: input, shape index: {}]
  %s4 = inlined_call_operand.vmem [shape: f32[32,128], index: 4, kind: input, shape index: {}]
  %s5 = inlined_call_operand.vmem [shape: bf16[128,128], index: 5, kind: input, shape index: {}]
  %s6 = inlined_call_operand.hbm [shape: f32[32,128], index: 6, kind: output, shape index: {}]
  %s7 = sld [smem:[#allocation0]]
  $region41: #{rep_module_forward.9} parent=0
    _
  %s9 = ssub.s32 1, %s7
  %s10 = scalar_select 0, %s9, %s7
  %s11 = sshll.u32 %s0, 4
  %s12 = int_to_ptr.vmem [resolvable:$true] %s11
  %14 = dma.vmem_to_smem %s12, 16, [#allocation5], [#allocation4]
  %s15 = sshll.u32 %s1, 4
  %s16 = int_to_ptr.vmem [resolvable:$true] %s15
  %18 = dma.vmem_to_smem %s16, 16, [#allocation6], [#allocation4]
  %19 = dma.done [#allocation4], 32
  %20 = sfence
  $region1: #{rep_module_forward.9} parent=0
    #allocation7 [shape = 'u8[16384]{0}', space=vmem, size = 0x4000, scoped, tag = 'output window, operand 0, single buffered']
    #allocation8 [shape = 's32[1]{0}', space=sflag, size = 0x4, scoped, tag = 'scoped memory for rep_module_forward.9']
    %21 = vsyncpa [#allocation8], 0
    // Predicated region
    $region2: #{rep_module_forward.9} parent=1 // pred_check
      _
    $region3: #{rep_module_forward.9} parent=1 // pred_check_branch
      %23 = sbr.rel (0) target = $region5
    $region4: #{rep_module_forward.9} parent=1 // pred_region
      _
    $region5: #{rep_module_forward.9} parent=1 // pred_fallthru
      _
    // Predicated region
    $region6: #{rep_module_forward.9} parent=1 // pred_check
      _
    $region7: #{rep_module_forward.9} parent=1 // pred_check_branch
      %25 = sbr.rel (0) target = $region9
    $region8: #{rep_module_forward.9} parent=1 // pred_region
      _
    $region9: #{rep_module_forward.9} parent=1 // pred_fallthru
      _
    // Predicated region
    $region10: #{rep_module_forward.9} parent=1 // pred_check
      _
    $region11: #{rep_module_forward.9} parent=1 // pred_check_branch
      %27 = sbr.rel (0) target = $region13
    $region12: #{rep_module_forward.9} parent=1 // pred_region
      _
    $region13: #{rep_module_forward.9} parent=1 // pred_fallthru
      _
    // Predicated region
    $region14: #{rep_module_forward.9} parent=1 // pred_check
      _
    $region15: #{rep_module_forward.9} parent=1 // pred_check_branch
      %29 = sbr.rel (0) target = $region17
    $region16: #{rep_module_forward.9} parent=1 // pred_region
      _
    $region17: #{rep_module_forward.9} parent=1 // pred_fallthru
      _
    %p31 = scmp.eq.s32.totalorder 0, 0
    // Predicated region
    $region18: #{rep_module_forward.9} parent=1 // pred_check
      %p32 = pneg %p31
    $region19: #{rep_module_forward.9} parent=1 // pred_check_branch
      %34 = sbr.rel (%p32) target = $region21
    $region20: #{rep_module_forward.9} parent=1 // pred_region
      %35 = vst [vmem:[#allocation3] sm:$0xff] 0.0
      %36 = vst [vmem:[#allocation3 + $0x8] sm:$0xff] 0.0
      %37 = vst [vmem:[#allocation3 + $0x10] sm:$0xff] 0.0
      %38 = vst [vmem:[#allocation3 + $0x18] sm:$0xff] 0.0
    $region21: #{rep_module_forward.9} parent=1 // pred_fallthru
      _
    %v39 = vld [vmem:[%s3] sm:$0xf]
    %v40 = vld [vmem:[%s3 + $0x4] sm:$0xf]
    %v41 = vld [vmem:[%s3 + $0x8] sm:$0xf]
    %v42 = vld [vmem:[%s3 + $0xc] sm:$0xf]
    %v43 = vld [vmem:[%s3 + $0x10] sm:$0xf]
    %v44 = vld [vmem:[%s3 + $0x14] sm:$0xf]
    %v45 = vld [vmem:[%s3 + $0x18] sm:$0xf]
    %v46 = vld [vmem:[%s3 + $0x1c] sm:$0xf]
    %v47 = vld [vmem:[%s3 + $0x20] sm:$0xf]
    %v48 = vld [vmem:[%s3 + $0x24] sm:$0xf]
    %v49 = vld [vmem:[%s3 + $0x28] sm:$0xf]
    %v50 = vld [vmem:[%s3 + $0x2c] sm:$0xf]
    %v51 = vld [vmem:[%s3 + $0x30] sm:$0xf]
    %v52 = vld [vmem:[%s3 + $0x34] sm:$0xf]
    %v53 = vld [vmem:[%s3 + $0x38] sm:$0xf]
    %v54 = vld [vmem:[%s3 + $0x3c] sm:$0xf]
    %v55 = vunpack.c.l.bf16 %v39
    %v56 = vunpack.c.l.bf16 %v40
    %v57 = vunpack.c.l.bf16 %v41
    %v58 = vunpack.c.l.bf16 %v42
    %v59 = vunpack.c.l.bf16 %v43
    %v60 = vunpack.c.l.bf16 %v44
    %v61 = vunpack.c.l.bf16 %v45
    %v62 = vunpack.c.l.bf16 %v46
    %v63 = vunpack.c.l.bf16 %v47
    %v64 = vunpack.c.l.bf16 %v48
    %v65 = vunpack.c.l.bf16 %v49
    %v66 = vunpack.c.l.bf16 %v50
    %v67 = vunpack.c.l.bf16 %v51
    %v68 = vunpack.c.l.bf16 %v52
    %v69 = vunpack.c.l.bf16 %v53
    %v70 = vunpack.c.l.bf16 %v54
    %71 = vst [vmem:[#allocation2] sm:$0xff] %v55
    %72 = vst [vmem:[#allocation2 + $0x8] sm:$0xff] %v56
    %73 = vst [vmem:[#allocation2 + $0x10] sm:$0xff] %v57
    %74 = vst [vmem:[#allocation2 + $0x18] sm:$0xff] %v58
    %75 = vst [vmem:[#allocation2 + $0x20] sm:$0xff] %v59
    %76 = vst [vmem:[#allocation2 + $0x28] sm:$0xff] %v60
    %77 = vst [vmem:[#allocation2 + $0x30] sm:$0xff] %v61
    %78 = vst [vmem:[#allocation2 + $0x38] sm:$0xff] %v62
    %79 = vst [vmem:[#allocation2 + $0x40] sm:$0xff] %v63
    %80 = vst [vmem:[#allocation2 + $0x48] sm:$0xff] %v64
    %81 = vst [vmem:[#allocation2 + $0x50] sm:$0xff] %v65
    %82 = vst [vmem:[#allocation2 + $0x58] sm:$0xff] %v66
    %83 = vst [vmem:[#allocation2 + $0x60] sm:$0xff] %v67
    %84 = vst [vmem:[#allocation2 + $0x68] sm:$0xff] %v68
    %85 = vst [vmem:[#allocation2 + $0x70] sm:$0xff] %v69
    %86 = vst [vmem:[#allocation2 + $0x78] sm:$0xff] %v70
    %s87 = smul.u32 0, 128
    loop: start=0, step=1, limit=128
    $region22: #{rep_module_forward.9} parent=1 // loop_pre_header
      _
    $region23: #{rep_module_forward.9} parent=1 // loop_header
      %s89 = sphi 0, %s93
      %p90 = scmp.ge.s32.totalorder %s89, 128
    $region24: #{rep_module_forward.9} parent=1 // loop_header_branch
      %92 = sbr.rel (%p90) target = $region28
    $region25: #{rep_module_forward.9} parent=1 // loop_body
      %s94 = sadd.s32 %s87, %s89
      %s95 = sld [smem:[#allocation5 + %s94]]
      %s96 = sld [smem:[#allocation6 + %s94]]
      %s97 = scalar_lea.vmem %s2, %s95
      %v98 = vld [vmem:[%s97] sm:$0x1]
      %s99 = scalar_lea.vmem [#allocation2], %s89
      %v100 = vld [vmem:[%s99] sm:$0x1]
      %v101 = vmul.f32 %v98, %v100
      %s102 = scalar_lea.vmem [#allocation3], %s96
      %v103 = vld [vmem:[%s102] sm:$0x1]
      %v104 = vadd.f32 %v103, %v101
      %105 = vst [vmem:[%s102] sm:$0x1] %v104
    $region26: #{rep_module_forward.9} parent=1 // loop_footer
      %s93 = sadd.s32 1, %s89
    $region27: #{rep_module_forward.9} parent=1 // loop_footer_branch
      %88 = sbr.rel target = $region23
    $region28: #{rep_module_forward.9} parent=1 // loop_exit
      _
    // Predicated region
    $region29: #{rep_module_forward.9} parent=1 // pred_check
      %p106 = pneg %p31
    $region30: #{rep_module_forward.9} parent=1 // pred_check_branch
      %108 = sbr.rel (%p106) target = $region32
    $region31: #{rep_module_forward.9} parent=1 // pred_region
      %v109 = vld [vmem:[#allocation3] sm:$0xff]
      %v110 = vld [vmem:[#allocation3 + $0x8] sm:$0xff]
      %v111 = vld [vmem:[#allocation3 + $0x10] sm:$0xff]
      %v112 = vld [vmem:[#allocation3 + $0x18] sm:$0xff]
      %v113 = vpack.c.bf16 %v110, %v109
      %v114 = vpack.c.bf16 %v112, %v111
      %v115 = vld [vmem:[%s5] sm:$0xf]
      %v116 = vld [vmem:[%s5 + $0x4] sm:$0xf]
      %v117 = vld [vmem:[%s5 + $0x8] sm:$0xf]
      %v118 = vld [vmem:[%s5 + $0xc] sm:$0xf]
      %v119 = vld [vmem:[%s5 + $0x10] sm:$0xf]
      %v120 = vld [vmem:[%s5 + $0x14] sm:$0xf]
      %v121 = vld [vmem:[%s5 + $0x18] sm:$0xf]
      %v122 = vld [vmem:[%s5 + $0x1c] sm:$0xf]
      %v123 = vld [vmem:[%s5 + $0x20] sm:$0xf]
      %v124 = vld [vmem:[%s5 + $0x24] sm:$0xf]
      %v125 = vld [vmem:[%s5 + $0x28] sm:$0xf]
      %v126 = vld [vmem:[%s5 + $0x2c] sm:$0xf]
      %v127 = vld [vmem:[%s5 + $0x30] sm:$0xf]
      %v128 = vld [vmem:[%s5 + $0x34] sm:$0xf]
      %v129 = vld [vmem:[%s5 + $0x38] sm:$0xf]
      %v130 = vld [vmem:[%s5 + $0x3c] sm:$0xf]
      %v131 = vld [vmem:[%s4] sm:$0xff]
      %v132 = vld [vmem:[%s4 + $0x8] sm:$0xff]
      %v133 = vld [vmem:[%s4 + $0x10] sm:$0xff]
      %v134 = vld [vmem:[%s4 + $0x18] sm:$0xff]
      %v151 = vunpack.c.l.b16 %v115
      %v152 = vunpack.c.l.b16 %v116
      %v153 = vunpack.c.l.b16 %v117
      %v154 = vunpack.c.l.b16 %v118
      %v155 = vunpack.c.l.b16 %v119
      %v156 = vunpack.c.l.b16 %v120
      %v157 = vunpack.c.l.b16 %v121
      %v158 = vunpack.c.l.b16 %v122
      %v159 = vunpack.c.l.b16 %v123
      %v160 = vunpack.c.l.b16 %v124
      %v161 = vunpack.c.l.b16 %v125
      %v162 = vunpack.c.l.b16 %v126
      %v163 = vunpack.c.l.b16 %v127
      %v164 = vunpack.c.l.b16 %v128
      %v165 = vunpack.c.l.b16 %v129
      %v166 = vunpack.c.l.b16 %v130
      %v167 = vpack.c.b16 %v152, %v151
      %v168 = vpack.c.b16 %v154, %v153
      %v169 = vpack.c.b16 %v156, %v155
      %v170 = vpack.c.b16 %v158, %v157
      %v171 = vpack.c.b16 %v160, %v159
      %v172 = vpack.c.b16 %v162, %v161
      %v173 = vpack.c.b16 %v164, %v163
      %v174 = vpack.c.b16 %v166, %v165
      %183 = vmatprep.subr.bf16.mxu0 0
      %184 = vmatpush1.bf16.msra.mxu0 %v167
      %185 = vmatprep.subr.bf16.mxu0 0
      %186 = vmatpush1.bf16.msra.mxu0 %v168
      %187 = vmatprep.subr.bf16.mxu0 0
      %188 = vmatpush1.bf16.msra.mxu0 %v169
      %189 = vmatprep.subr.bf16.mxu0 0
      %190 = vmatpush1.bf16.msra.mxu0 %v170
      %191 = vmatprep.subr.bf16.mxu0 0
      %192 = vmatpush1.bf16.msra.mxu0 %v171
      %193 = vmatprep.subr.bf16.mxu0 0
      %194 = vmatpush1.bf16.msra.mxu0 %v172
      %195 = vmatprep.subr.bf16.mxu0 0
      %196 = vmatpush1.bf16.msra.mxu0 %v173
      %197 = vmatprep.subr.bf16.mxu0 0
      %198 = vmatpush1.bf16.msra.mxu0 %v174
      %199 = vmatprep.subr.bf16.mxu0 0
      %200 = vmatpush1.bf16.msra.mxu0 0
      %201 = vmatprep.subr.bf16.mxu0 0
      %202 = vmatpush1.bf16.msra.mxu0 0
      %203 = vmatprep.subr.bf16.mxu0 0
      %204 = vmatpush1.bf16.msra.mxu0 0
      %205 = vmatprep.subr.bf16.mxu0 0
      %206 = vmatpush1.bf16.msra.mxu0 0
      %207 = vmatprep.subr.bf16.mxu0 0
      %208 = vmatpush1.bf16.msra.mxu0 0
      %209 = vmatprep.subr.bf16.mxu0 0
      %210 = vmatpush1.bf16.msra.mxu0 0
      %211 = vmatprep.subr.bf16.mxu0 0
      %212 = vmatpush1.bf16.msra.mxu0 0
      %213 = vmatprep.subr.bf16.mxu0 0
      %214 = vmatpush1.bf16.msra.mxu0 0
      %215 = vmatprep.mubr.bf16.mxu0 0
      %216 = vmatmul.mubr.bf16.gmra.mrb[0].mxu0 %v113
      %v217 = vpop.f32.mrb[0].mxu0
      %v218 = vadd.f32 %v131, %v217
      %v219 = vpop.f32.mrb[0].mxu0
      %v220 = vpop.f32.mrb[0].mxu0
      %v221 = vadd.f32 %v132, %v220
      %v222 = vpop.f32.mrb[0].mxu0
      %223 = vmatprep.mubr.bf16.mxu0 0
      %224 = vmatmul.mubr.bf16.gmra.mrb[0].mxu0 %v114
      %v225 = vpop.f32.mrb[0].mxu0
      %v226 = vadd.f32 %v133, %v225
      %v227 = vpop.f32.mrb[0].mxu0
      %v228 = vpop.f32.mrb[0].mxu0
      %v229 = vadd.f32 %v134, %v228
      %v230 = vpop.f32.mrb[0].mxu0
      %231 = vdwg.mxu0
      %v232 = vxor.u32 %v218, 2147483648
      %v233 = vxor.u32 %v221, 2147483648
      %v234 = vxor.u32 %v226, 2147483648
      %v235 = vxor.u32 %v229, 2147483648
      %v236 = vmul.f32 %v232, 1.442695
      %v237 = vpow.pop %v236
      %v238 = vmul.f32 %v233, 1.442695
      %v239 = vpow.pop %v238
      %v240 = vmul.f32 %v234, 1.442695
      %v241 = vpow.pop %v240
      %v242 = vmul.f32 %v235, 1.442695
      %v243 = vpow.pop %v242
      %v244 = vadd.f32 %v237, 1.0
      %v245 = vadd.f32 %v239, 1.0
      %v246 = vadd.f32 %v241, 1.0
      %v247 = vadd.f32 %v243, 1.0
      %v248 = vrcp.pop %v244
      %v249 = vmul.f32 1.0, %v248
      %v250 = vrcp.pop %v245
      %v251 = vmul.f32 1.0, %v250
      %v252 = vrcp.pop %v246
      %v253 = vmul.f32 1.0, %v252
      %v254 = vrcp.pop %v247
      %v255 = vmul.f32 1.0, %v254
      %v256 = vmul.f32 %v218, %v249
      %v257 = vmul.f32 %v221, %v251
      %v258 = vmul.f32 %v226, %v253
      %v259 = vmul.f32 %v229, %v255
      %260 = vst [vmem:[#allocation7] sm:$0xff] %v256
      %261 = vst [vmem:[#allocation7 + $0x8] sm:$0xff] %v257
      %262 = vst [vmem:[#allocation7 + $0x10] sm:$0xff] %v258
      %263 = vst [vmem:[#allocation7 + $0x18] sm:$0xff] %v259
    $region32: #{rep_module_forward.9} parent=1 // pred_fallthru
      _
    // Predicated region
    $region33: #{rep_module_forward.9} parent=1 // pred_check
      _
    $region34: #{rep_module_forward.9} parent=1 // pred_check_branch
      %265 = sbr.rel (0) target = $region36
    $region35: #{rep_module_forward.9} parent=1 // pred_region
      %s267 = ssub.s32 512, 512
      %268 = vsyncadd [#allocation8], %s267
      %s269 = sshll.u32 [#allocation7], 4
      %s270 = int_to_ptr.vmem [resolvable:$true] %s269
      %275 = dma.vmem_to_hbm [thread:$0]  %s270, 512, %s6, [#allocation8], 128, 128, 8
    $region36: #{rep_module_forward.9} parent=1 // pred_fallthru
      _
    // Predicated region
    $region37: #{rep_module_forward.9} parent=1 // pred_check
      _
    $region38: #{rep_module_forward.9} parent=1 // pred_check_branch
      %277 = sbr.rel (0) target = $region40
    $region39: #{rep_module_forward.9} parent=1 // pred_region
      %278 = dma.done [#allocation8], 512
    $region40: #{rep_module_forward.9} parent=1 // pred_fallthru
      _
    %279 = vsyncpa [#allocation8], 1

// kernel: rep_module_forward.7
$region0: #{rep_module_forward.7}
  #allocation0 [shape = 'u32[]', space=smem, size = 0x4, offset = 0x4, fixed_abs, tag = 'smem constant byte address 0x4 - core index']
  #allocation1 [shape = 'u32[144,128]{1,0:T(1,128)}', space=vmem, size = 0x12000, scoped, tag = 'internal scratch']
  #allocation2 [shape = 'f32[128,128]{1,0:T(8,128)}', space=vmem, size = 0x10000, scoped, tag = 'scratch operand']
  #allocation3 [shape = 'f32[32,128]{1,0:T(8,128)}', space=vmem, size = 0x4000, scoped, tag = 'scratch operand']
  #allocation4 [shape = 's32[1]{0}', space=sflag, size = 0x4, scoped, tag = 'scoped memory for rep_module_forward.7']
  #allocation5 [shape = 'u8[512]{0}', space=smem, size = 0x200, scoped, tag = 'prefetched SMEM operand 0']
  #allocation6 [shape = 'u8[512]{0}', space=smem, size = 0x200, scoped, tag = 'prefetched SMEM operand 1']
  %s0 = inlined_call_operand.vmem [shape: s32[128], index: 0, kind: input, shape index: {}]
  %s1 = inlined_call_operand.vmem [shape: s32[128], index: 1, kind: input, shape index: {}]
  %s2 = inlined_call_operand.vmem [shape: f32[32,128], index: 2, kind: input, shape index: {}]
  %s3 = inlined_call_operand.vmem [shape: bf16[128,128], index: 3, kind: input, shape index: {}]
  %s4 = inlined_call_operand.vmem [shape: f32[32,128], index: 4, kind: input, shape index: {}]
  %s5 = inlined_call_operand.vmem [shape: bf16[128,128], index: 5, kind: input, shape index: {}]
  %s6 = inlined_call_operand.vmem [shape: f32[32,128], index: 6, kind: output, shape index: {}]
  %s7 = sld [smem:[#allocation0]]
  $region41: #{rep_module_forward.7} parent=0
    _
  %s9 = ssub.s32 1, %s7
  %s10 = scalar_select 0, %s9, %s7
  %s11 = sshll.u32 %s0, 4
  %s12 = int_to_ptr.vmem [resolvable:$true] %s11
  %14 = dma.vmem_to_smem %s12, 16, [#allocation5], [#allocation4]
  %s15 = sshll.u32 %s1, 4
  %s16 = int_to_ptr.vmem [resolvable:$true] %s15
  %18 = dma.vmem_to_smem %s16, 16, [#allocation6], [#allocation4]
  %19 = dma.done [#allocation4], 32
  %20 = sfence
  // Predicated region
  $region2: #{rep_module_forward.7} parent=0 // pred_check
    _
  $region3: #{rep_module_forward.7} parent=0 // pred_check_branch
    %22 = sbr.rel (0) target = $region5
  $region4: #{rep_module_forward.7} parent=0 // pred_region
    _
  $region5: #{rep_module_forward.7} parent=0 // pred_fallthru
    _
  // Predicated region
  $region6: #{rep_module_forward.7} parent=0 // pred_check
    _
  $region7: #{rep_module_forward.7} parent=0 // pred_check_branch
    %24 = sbr.rel (0) target = $region9
  $region8: #{rep_module_forward.7} parent=0 // pred_region
    _
  $region9: #{rep_module_forward.7} parent=0 // pred_fallthru
    _
  // Predicated region
  $region10: #{rep_module_forward.7} parent=0 // pred_check
    _
  $region11: #{rep_module_forward.7} parent=0 // pred_check_branch
    %26 = sbr.rel (0) target = $region13
  $region12: #{rep_module_forward.7} parent=0 // pred_region
    _
  $region13: #{rep_module_forward.7} parent=0 // pred_fallthru
    _
  // Predicated region
  $region14: #{rep_module_forward.7} parent=0 // pred_check
    _
  $region15: #{rep_module_forward.7} parent=0 // pred_check_branch
    %28 = sbr.rel (0) target = $region17
  $region16: #{rep_module_forward.7} parent=0 // pred_region
    _
  $region17: #{rep_module_forward.7} parent=0 // pred_fallthru
    _
  %p30 = scmp.eq.s32.totalorder 0, 0
  // Predicated region
  $region18: #{rep_module_forward.7} parent=0 // pred_check
    %p31 = pneg %p30
  $region19: #{rep_module_forward.7} parent=0 // pred_check_branch
    %33 = sbr.rel (%p31) target = $region21
  $region20: #{rep_module_forward.7} parent=0 // pred_region
    %34 = vst [vmem:[#allocation3] sm:$0xff] 0.0
    %35 = vst [vmem:[#allocation3 + $0x8] sm:$0xff] 0.0
    %36 = vst [vmem:[#allocation3 + $0x10] sm:$0xff] 0.0
    %37 = vst [vmem:[#allocation3 + $0x18] sm:$0xff] 0.0
  $region21: #{rep_module_forward.7} parent=0 // pred_fallthru
    _
  %v38 = vld [vmem:[%s3] sm:$0xf]
  %v39 = vld [vmem:[%s3 + $0x4] sm:$0xf]
  %v40 = vld [vmem:[%s3 + $0x8] sm:$0xf]
  %v41 = vld [vmem:[%s3 + $0xc] sm:$0xf]
  %v42 = vld [vmem:[%s3 + $0x10] sm:$0xf]
  %v43 = vld [vmem:[%s3 + $0x14] sm:$0xf]
  %v44 = vld [vmem:[%s3 + $0x18] sm:$0xf]
  %v45 = vld [vmem:[%s3 + $0x1c] sm:$0xf]
  %v46 = vld [vmem:[%s3 + $0x20] sm:$0xf]
  %v47 = vld [vmem:[%s3 + $0x24] sm:$0xf]
  %v48 = vld [vmem:[%s3 + $0x28] sm:$0xf]
  %v49 = vld [vmem:[%s3 + $0x2c] sm:$0xf]
  %v50 = vld [vmem:[%s3 + $0x30] sm:$0xf]
  %v51 = vld [vmem:[%s3 + $0x34] sm:$0xf]
  %v52 = vld [vmem:[%s3 + $0x38] sm:$0xf]
  %v53 = vld [vmem:[%s3 + $0x3c] sm:$0xf]
  %v54 = vunpack.c.l.bf16 %v38
  %v55 = vunpack.c.l.bf16 %v39
  %v56 = vunpack.c.l.bf16 %v40
  %v57 = vunpack.c.l.bf16 %v41
  %v58 = vunpack.c.l.bf16 %v42
  %v59 = vunpack.c.l.bf16 %v43
  %v60 = vunpack.c.l.bf16 %v44
  %v61 = vunpack.c.l.bf16 %v45
  %v62 = vunpack.c.l.bf16 %v46
  %v63 = vunpack.c.l.bf16 %v47
  %v64 = vunpack.c.l.bf16 %v48
  %v65 = vunpack.c.l.bf16 %v49
  %v66 = vunpack.c.l.bf16 %v50
  %v67 = vunpack.c.l.bf16 %v51
  %v68 = vunpack.c.l.bf16 %v52
  %v69 = vunpack.c.l.bf16 %v53
  %70 = vst [vmem:[#allocation2] sm:$0xff] %v54
  %71 = vst [vmem:[#allocation2 + $0x8] sm:$0xff] %v55
  %72 = vst [vmem:[#allocation2 + $0x10] sm:$0xff] %v56
  %73 = vst [vmem:[#allocation2 + $0x18] sm:$0xff] %v57
  %74 = vst [vmem:[#allocation2 + $0x20] sm:$0xff] %v58
  %75 = vst [vmem:[#allocation2 + $0x28] sm:$0xff] %v59
  %76 = vst [vmem:[#allocation2 + $0x30] sm:$0xff] %v60
  %77 = vst [vmem:[#allocation2 + $0x38] sm:$0xff] %v61
  %78 = vst [vmem:[#allocation2 + $0x40] sm:$0xff] %v62
  %79 = vst [vmem:[#allocation2 + $0x48] sm:$0xff] %v63
  %80 = vst [vmem:[#allocation2 + $0x50] sm:$0xff] %v64
  %81 = vst [vmem:[#allocation2 + $0x58] sm:$0xff] %v65
  %82 = vst [vmem:[#allocation2 + $0x60] sm:$0xff] %v66
  %83 = vst [vmem:[#allocation2 + $0x68] sm:$0xff] %v67
  %84 = vst [vmem:[#allocation2 + $0x70] sm:$0xff] %v68
  %85 = vst [vmem:[#allocation2 + $0x78] sm:$0xff] %v69
  %s86 = smul.u32 0, 128
  loop: start=0, step=1, limit=128
  $region22: #{rep_module_forward.7} parent=0 // loop_pre_header
    _
  $region23: #{rep_module_forward.7} parent=0 // loop_header
    %s88 = sphi 0, %s92
    %p89 = scmp.ge.s32.totalorder %s88, 128
  $region24: #{rep_module_forward.7} parent=0 // loop_header_branch
    %91 = sbr.rel (%p89) target = $region28
  $region25: #{rep_module_forward.7} parent=0 // loop_body
    %s93 = sadd.s32 %s86, %s88
    %s94 = sld [smem:[#allocation5 + %s93]]
    %s95 = sld [smem:[#allocation6 + %s93]]
    %s96 = scalar_lea.vmem %s2, %s94
    %v97 = vld [vmem:[%s96] sm:$0x1]
    %s98 = scalar_lea.vmem [#allocation2], %s88
    %v99 = vld [vmem:[%s98] sm:$0x1]
    %v100 = vmul.f32 %v97, %v99
    %s101 = scalar_lea.vmem [#allocation3], %s95
    %v102 = vld [vmem:[%s101] sm:$0x1]
    %v103 = vadd.f32 %v102, %v100
    %104 = vst [vmem:[%s101] sm:$0x1] %v103
  $region26: #{rep_module_forward.7} parent=0 // loop_footer
    %s92 = sadd.s32 1, %s88
  $region27: #{rep_module_forward.7} parent=0 // loop_footer_branch
    %87 = sbr.rel target = $region23
  $region28: #{rep_module_forward.7} parent=0 // loop_exit
    _
  // Predicated region
  $region29: #{rep_module_forward.7} parent=0 // pred_check
    %p105 = pneg %p30
  $region30: #{rep_module_forward.7} parent=0 // pred_check_branch
    %107 = sbr.rel (%p105) target = $region32
  $region31: #{rep_module_forward.7} parent=0 // pred_region
    %v108 = vld [vmem:[#allocation3] sm:$0xff]
    %v109 = vld [vmem:[#allocation3 + $0x8] sm:$0xff]
    %v110 = vld [vmem:[#allocation3 + $0x10] sm:$0xff]
    %v111 = vld [vmem:[#allocation3 + $0x18] sm:$0xff]
    %v112 = vpack.c.bf16 %v109, %v108
    %v113 = vpack.c.bf16 %v111, %v110
    %v114 = vld [vmem:[%s5] sm:$0xf]
    %v115 = vld [vmem:[%s5 + $0x4] sm:$0xf]
    %v116 = vld [vmem:[%s5 + $0x8] sm:$0xf]
    %v117 = vld [vmem:[%s5 + $0xc] sm:$0xf]
    %v118 = vld [vmem:[%s5 + $0x10] sm:$0xf]
    %v119 = vld [vmem:[%s5 + $0x14] sm:$0xf]
    %v120 = vld [vmem:[%s5 + $0x18] sm:$0xf]
    %v121 = vld [vmem:[%s5 + $0x1c] sm:$0xf]
    %v122 = vld [vmem:[%s5 + $0x20] sm:$0xf]
    %v123 = vld [vmem:[%s5 + $0x24] sm:$0xf]
    %v124 = vld [vmem:[%s5 + $0x28] sm:$0xf]
    %v125 = vld [vmem:[%s5 + $0x2c] sm:$0xf]
    %v126 = vld [vmem:[%s5 + $0x30] sm:$0xf]
    %v127 = vld [vmem:[%s5 + $0x34] sm:$0xf]
    %v128 = vld [vmem:[%s5 + $0x38] sm:$0xf]
    %v129 = vld [vmem:[%s5 + $0x3c] sm:$0xf]
    %v130 = vld [vmem:[%s4] sm:$0xff]
    %v131 = vld [vmem:[%s4 + $0x8] sm:$0xff]
    %v132 = vld [vmem:[%s4 + $0x10] sm:$0xff]
    %v133 = vld [vmem:[%s4 + $0x18] sm:$0xff]
    %v150 = vunpack.c.l.b16 %v114
    %v151 = vunpack.c.l.b16 %v115
    %v152 = vunpack.c.l.b16 %v116
    %v153 = vunpack.c.l.b16 %v117
    %v154 = vunpack.c.l.b16 %v118
    %v155 = vunpack.c.l.b16 %v119
    %v156 = vunpack.c.l.b16 %v120
    %v157 = vunpack.c.l.b16 %v121
    %v158 = vunpack.c.l.b16 %v122
    %v159 = vunpack.c.l.b16 %v123
    %v160 = vunpack.c.l.b16 %v124
    %v161 = vunpack.c.l.b16 %v125
    %v162 = vunpack.c.l.b16 %v126
    %v163 = vunpack.c.l.b16 %v127
    %v164 = vunpack.c.l.b16 %v128
    %v165 = vunpack.c.l.b16 %v129
    %v166 = vpack.c.b16 %v151, %v150
    %v167 = vpack.c.b16 %v153, %v152
    %v168 = vpack.c.b16 %v155, %v154
    %v169 = vpack.c.b16 %v157, %v156
    %v170 = vpack.c.b16 %v159, %v158
    %v171 = vpack.c.b16 %v161, %v160
    %v172 = vpack.c.b16 %v163, %v162
    %v173 = vpack.c.b16 %v165, %v164
    %182 = vmatprep.subr.bf16.mxu0 0
    %183 = vmatpush1.bf16.msra.mxu0 %v166
    %184 = vmatprep.subr.bf16.mxu0 0
    %185 = vmatpush1.bf16.msra.mxu0 %v167
    %186 = vmatprep.subr.bf16.mxu0 0
    %187 = vmatpush1.bf16.msra.mxu0 %v168
    %188 = vmatprep.subr.bf16.mxu0 0
    %189 = vmatpush1.bf16.msra.mxu0 %v169
    %190 = vmatprep.subr.bf16.mxu0 0
    %191 = vmatpush1.bf16.msra.mxu0 %v170
    %192 = vmatprep.subr.bf16.mxu0 0
    %193 = vmatpush1.bf16.msra.mxu0 %v171
    %194 = vmatprep.subr.bf16.mxu0 0
    %195 = vmatpush1.bf16.msra.mxu0 %v172
    %196 = vmatprep.subr.bf16.mxu0 0
    %197 = vmatpush1.bf16.msra.mxu0 %v173
    %198 = vmatprep.subr.bf16.mxu0 0
    %199 = vmatpush1.bf16.msra.mxu0 0
    %200 = vmatprep.subr.bf16.mxu0 0
    %201 = vmatpush1.bf16.msra.mxu0 0
    %202 = vmatprep.subr.bf16.mxu0 0
    %203 = vmatpush1.bf16.msra.mxu0 0
    %204 = vmatprep.subr.bf16.mxu0 0
    %205 = vmatpush1.bf16.msra.mxu0 0
    %206 = vmatprep.subr.bf16.mxu0 0
    %207 = vmatpush1.bf16.msra.mxu0 0
    %208 = vmatprep.subr.bf16.mxu0 0
    %209 = vmatpush1.bf16.msra.mxu0 0
    %210 = vmatprep.subr.bf16.mxu0 0
    %211 = vmatpush1.bf16.msra.mxu0 0
    %212 = vmatprep.subr.bf16.mxu0 0
    %213 = vmatpush1.bf16.msra.mxu0 0
    %214 = vmatprep.mubr.bf16.mxu0 0
    %215 = vmatmul.mubr.bf16.gmra.mrb[0].mxu0 %v112
    %v216 = vpop.f32.mrb[0].mxu0
    %v217 = vadd.f32 %v130, %v216
    %v218 = vpop.f32.mrb[0].mxu0
    %v219 = vpop.f32.mrb[0].mxu0
    %v220 = vadd.f32 %v131, %v219
    %v221 = vpop.f32.mrb[0].mxu0
    %222 = vmatprep.mubr.bf16.mxu0 0
    %223 = vmatmul.mubr.bf16.gmra.mrb[0].mxu0 %v113
    %v224 = vpop.f32.mrb[0].mxu0
    %v225 = vadd.f32 %v132, %v224
    %v226 = vpop.f32.mrb[0].mxu0
    %v227 = vpop.f32.mrb[0].mxu0
    %v228 = vadd.f32 %v133, %v227
    %v229 = vpop.f32.mrb[0].mxu0
    %230 = vdwg.mxu0
    %v231 = vxor.u32 %v217, 2147483648
    %v232 = vxor.u32 %v220, 2147483648
    %v233 = vxor.u32 %v225, 2147483648
    %v234 = vxor.u32 %v228, 2147483648
    %v235 = vmul.f32 %v231, 1.442695
    %v236 = vpow.pop %v235
    %v237 = vmul.f32 %v232, 1.442695
    %v238 = vpow.pop %v237
    %v239 = vmul.f32 %v233, 1.442695
    %v240 = vpow.pop %v239
    %v241 = vmul.f32 %v234, 1.442695
    %v242 = vpow.pop %v241
    %v243 = vadd.f32 %v236, 1.0
    %v244 = vadd.f32 %v238, 1.0
    %v245 = vadd.f32 %v240, 1.0
    %v246 = vadd.f32 %v242, 1.0
    %v247 = vrcp.pop %v243
    %v248 = vmul.f32 1.0, %v247
    %v249 = vrcp.pop %v244
    %v250 = vmul.f32 1.0, %v249
    %v251 = vrcp.pop %v245
    %v252 = vmul.f32 1.0, %v251
    %v253 = vrcp.pop %v246
    %v254 = vmul.f32 1.0, %v253
    %v255 = vmul.f32 %v217, %v248
    %v256 = vmul.f32 %v220, %v250
    %v257 = vmul.f32 %v225, %v252
    %v258 = vmul.f32 %v228, %v254
    %259 = vst [vmem:[%s6] sm:$0xff] %v255
    %260 = vst [vmem:[%s6 + $0x8] sm:$0xff] %v256
    %261 = vst [vmem:[%s6 + $0x10] sm:$0xff] %v257
    %262 = vst [vmem:[%s6 + $0x18] sm:$0xff] %v258
  $region32: #{rep_module_forward.7} parent=0 // pred_fallthru
    _
  // Predicated region
  $region33: #{rep_module_forward.7} parent=0 // pred_check
    _
  $region34: #{rep_module_forward.7} parent=0 // pred_check_branch
    %264 = sbr.rel (0) target = $region36
  $region35: #{rep_module_forward.7} parent=0 // pred_region
    _
  $region36: #{rep_module_forward.7} parent=0 // pred_fallthru
    _
  // Predicated region
  $region37: #{rep_module_forward.7} parent=0 // pred_check
    _
  $region38: #{rep_module_forward.7} parent=0 // pred_check_branch
    %266 = sbr.rel (0) target = $region40
  $region39: #{rep_module_forward.7} parent=0 // pred_region
    _
  $region40: #{rep_module_forward.7} parent=0 // pred_fallthru
    _

// kernel: rep_module_forward.5
$region0: #{rep_module_forward.5}
  #allocation0 [shape = 'u32[]', space=smem, size = 0x4, offset = 0x4, fixed_abs, tag = 'smem constant byte address 0x4 - core index']
  #allocation1 [shape = 'u32[144,128]{1,0:T(1,128)}', space=vmem, size = 0x12000, scoped, tag = 'internal scratch']
  %s0 = inlined_call_operand.vmem [shape: f32[32,16], index: 0, kind: input, shape index: {}]
  %s1 = inlined_call_operand.vmem [shape: bf16[16,128], index: 1, kind: input, shape index: {}]
  %s2 = inlined_call_operand.vmem [shape: f32[1,128], index: 2, kind: input, shape index: {}]
  %s3 = inlined_call_operand.vmem [shape: bf16[3,16,128], index: 3, kind: input, shape index: {}]
  %s4 = inlined_call_operand.vmem [shape: f32[3,1,128], index: 4, kind: input, shape index: {}]
  %s5 = inlined_call_operand.vmem [shape: f32[32,128], index: 5, kind: output, shape index: {0}]
  %s6 = inlined_call_operand.vmem [shape: f32[32,128], index: 6, kind: output, shape index: {1}]
  %s7 = inlined_call_operand.vmem [shape: f32[32,128], index: 7, kind: output, shape index: {2}]
  %s8 = inlined_call_operand.vmem [shape: f32[32,128], index: 8, kind: output, shape index: {3}]
  %9 = xla_tuple %s5, %s6, %s7, %s8
  %s10 = sld [smem:[#allocation0]]
  $region54: #{rep_module_forward.5} parent=0
    _
  %s12 = ssub.s32 1, %s10
  %s13 = scalar_select 0, %s12, %s10
  // Predicated region
  $region2: #{rep_module_forward.5} parent=0 // pred_check
    _
  $region3: #{rep_module_forward.5} parent=0 // pred_check_branch
    %15 = sbr.rel (0) target = $region5
  $region4: #{rep_module_forward.5} parent=0 // pred_region
    _
  $region5: #{rep_module_forward.5} parent=0 // pred_fallthru
    _
  // Predicated region
  $region6: #{rep_module_forward.5} parent=0 // pred_check
    _
  $region7: #{rep_module_forward.5} parent=0 // pred_check_branch
    %17 = sbr.rel (0) target = $region9
  $region8: #{rep_module_forward.5} parent=0 // pred_region
    _
  $region9: #{rep_module_forward.5} parent=0 // pred_fallthru
    _
  // Predicated region
  $region10: #{rep_module_forward.5} parent=0 // pred_check
    _
  $region11: #{rep_module_forward.5} parent=0 // pred_check_branch
    %19 = sbr.rel (0) target = $region13
  $region12: #{rep_module_forward.5} parent=0 // pred_region
    _
  $region13: #{rep_module_forward.5} parent=0 // pred_fallthru
    _
  // Predicated region
  $region14: #{rep_module_forward.5} parent=0 // pred_check
    _
  $region15: #{rep_module_forward.5} parent=0 // pred_check_branch
    %21 = sbr.rel (0) target = $region17
  $region16: #{rep_module_forward.5} parent=0 // pred_region
    _
  $region17: #{rep_module_forward.5} parent=0 // pred_fallthru
    _
  // Predicated region
  $region18: #{rep_module_forward.5} parent=0 // pred_check
    _
  $region19: #{rep_module_forward.5} parent=0 // pred_check_branch
    %23 = sbr.rel (0) target = $region21
  $region20: #{rep_module_forward.5} parent=0 // pred_region
    _
  $region21: #{rep_module_forward.5} parent=0 // pred_fallthru
    _
  %v25 = vld [vmem:[%s0] sm:$0xff]
  %v26 = vld [vmem:[%s0 + $0x8] sm:$0xff]
  %v27 = vld [vmem:[%s0 + $0x10] sm:$0xff]
  %v28 = vld [vmem:[%s0 + $0x18] sm:$0xff]
  %v29 = vpack.c.bf16 %v26, %v25
  %v30 = vpack.c.bf16 %v28, %v27
  %v31 = vld [vmem:[%s1] sm:$0xf]
  %v32 = vld [vmem:[%s1 + $0x4] sm:$0xf]
  %v33 = vld [vmem:[%s2] sm:$0x1]
  %v35 = vlaneseq
  %v36 = vshrl.u32 %v35, 7
  %v37 = vsub.s32 0, %v36
  %v38 = vrot.slane %v33, %v37
  %v42 = vunpack.c.l.b16 %v31
  %v43 = vunpack.c.l.b16 %v32
  %v44 = vpack.c.b16 %v43, %v42
  %vm46 = vcmask 130048
  %v48 = vsel %vm46, %v29, 0
  %v51 = vsel %vm46, %v30, 0
  %53 = vmatprep.subr.bf16.mxu0 0
  %54 = vmatpush1.bf16.msra.mxu0 %v44
  %55 = vmatprep.subr.bf16.mxu0 0
  %56 = vmatpush1.bf16.msra.mxu0 0
  %57 = vmatprep.subr.bf16.mxu0 0
  %58 = vmatpush1.bf16.msra.mxu0 0
  %59 = vmatprep.subr.bf16.mxu0 0
  %60 = vmatpush1.bf16.msra.mxu0 0
  %61 = vmatprep.subr.bf16.mxu0 0
  %62 = vmatpush1.bf16.msra.mxu0 0
  %63 = vmatprep.subr.bf16.mxu0 0
  %64 = vmatpush1.bf16.msra.mxu0 0
  %65 = vmatprep.subr.bf16.mxu0 0
  %66 = vmatpush1.bf16.msra.mxu0 0
  %67 = vmatprep.subr.bf16.mxu0 0
  %68 = vmatpush1.bf16.msra.mxu0 0
  %69 = vmatprep.subr.bf16.mxu0 0
  %70 = vmatpush1.bf16.msra.mxu0 0
  %71 = vmatprep.subr.bf16.mxu0 0
  %72 = vmatpush1.bf16.msra.mxu0 0
  %73 = vmatprep.subr.bf16.mxu0 0
  %74 = vmatpush1.bf16.msra.mxu0 0
  %75 = vmatprep.subr.bf16.mxu0 0
  %76 = vmatpush1.bf16.msra.mxu0 0
  %77 = vmatprep.subr.bf16.mxu0 0
  %78 = vmatpush1.bf16.msra.mxu0 0
  %79 = vmatprep.subr.bf16.mxu0 0
  %80 = vmatpush1.bf16.msra.mxu0 0
  %81 = vmatprep.subr.bf16.mxu0 0
  %82 = vmatpush1.bf16.msra.mxu0 0
  %83 = vmatprep.subr.bf16.mxu0 0
  %84 = vmatpush1.bf16.msra.mxu0 0
  %85 = vmatprep.mubr.bf16.mxu0 0
  %86 = vmatmul.mubr.bf16.gmra.mrb[0].mxu0 %v48
  %v87 = vpop.f32.mrb[0].mxu0
  %v88 = vadd.f32 %v38, %v87
  %v89 = vpop.f32.mrb[0].mxu0
  %v90 = vpop.f32.mrb[0].mxu0
  %v91 = vadd.f32 %v38, %v90
  %v92 = vpop.f32.mrb[0].mxu0
  %93 = vmatprep.mubr.bf16.mxu0 0
  %94 = vmatmul.mubr.bf16.gmra.mrb[0].mxu0 %v51
  %v95 = vpop.f32.mrb[0].mxu0
  %v96 = vadd.f32 %v38, %v95
  %v97 = vpop.f32.mrb[0].mxu0
  %v98 = vpop.f32.mrb[0].mxu0
  %v99 = vadd.f32 %v38, %v98
  %v100 = vpop.f32.mrb[0].mxu0
  %101 = vdwg.mxu0
  %102 = vst [vmem:[%s5] sm:$0xff] %v88
  %103 = vst [vmem:[%s5 + $0x8] sm:$0xff] %v91
  %104 = vst [vmem:[%s5 + $0x10] sm:$0xff] %v96
  %105 = vst [vmem:[%s5 + $0x18] sm:$0xff] %v99
  %v106 = vld [vmem:[%s3] sm:$0xf]
  %v107 = vld [vmem:[%s3 + $0x4] sm:$0xf]
  %v108 = vld [vmem:[%s4] sm:$0x1]
  %v110 = vlaneseq
  %v111 = vshrl.u32 %v110, 7
  %v112 = vsub.s32 0, %v111
  %v113 = vrot.slane %v108, %v112
  %v117 = vunpack.c.l.b16 %v106
  %v118 = vunpack.c.l.b16 %v107
  %v119 = vpack.c.b16 %v118, %v117
  %121 = vmatprep.subr.bf16.mxu0 0
  %122 = vmatpush1.bf16.msra.mxu0 %v119
  %123 = vmatprep.subr.bf16.mxu0 0
  %124 = vmatpush1.bf16.msra.mxu0 0
  %125 = vmatprep.subr.bf16.mxu0 0
  %126 = vmatpush1.bf16.msra.mxu0 0
  %127 = vmatprep.subr.bf16.mxu0 0
  %128 = vmatpush1.bf16.msra.mxu0 0
  %129 = vmatprep.subr.bf16.mxu0 0
  %130 = vmatpush1.bf16.msra.mxu0 0
  %131 = vmatprep.subr.bf16.mxu0 0
  %132 = vmatpush1.bf16.msra.mxu0 0
  %133 = vmatprep.subr.bf16.mxu0 0
  %134 = vmatpush1.bf16.msra.mxu0 0
  %135 = vmatprep.subr.bf16.mxu0 0
  %136 = vmatpush1.bf16.msra.mxu0 0
  %137 = vmatprep.subr.bf16.mxu0 0
  %138 = vmatpush1.bf16.msra.mxu0 0
  %139 = vmatprep.subr.bf16.mxu0 0
  %140 = vmatpush1.bf16.msra.mxu0 0
  %141 = vmatprep.subr.bf16.mxu0 0
  %142 = vmatpush1.bf16.msra.mxu0 0
  %143 = vmatprep.subr.bf16.mxu0 0
  %144 = vmatpush1.bf16.msra.mxu0 0
  %145 = vmatprep.subr.bf16.mxu0 0
  %146 = vmatpush1.bf16.msra.mxu0 0
  %147 = vmatprep.subr.bf16.mxu0 0
  %148 = vmatpush1.bf16.msra.mxu0 0
  %149 = vmatprep.subr.bf16.mxu0 0
  %150 = vmatpush1.bf16.msra.mxu0 0
  %151 = vmatprep.subr.bf16.mxu0 0
  %152 = vmatpush1.bf16.msra.mxu0 0
  %153 = vmatprep.mubr.bf16.mxu0 0
  %154 = vmatmul.mubr.bf16.gmra.mrb[0].mxu0 %v48
  %v155 = vpop.f32.mrb[0].mxu0
  %v156 = vadd.f32 %v113, %v155
  %v157 = vpop.f32.mrb[0].mxu0
  %v158 = vpop.f32.mrb[0].mxu0
  %v159 = vadd.f32 %v113, %v158
  %v160 = vpop.f32.mrb[0].mxu0
  %161 = vmatprep.mubr.bf16.mxu0 0
  %162 = vmatmul.mubr.bf16.gmra.mrb[0].mxu0 %v51
  %v163 = vpop.f32.mrb[0].mxu0
  %v164 = vadd.f32 %v113, %v163
  %v165 = vpop.f32.mrb[0].mxu0
  %v166 = vpop.f32.mrb[0].mxu0
  %v167 = vadd.f32 %v113, %v166
  %v168 = vpop.f32.mrb[0].mxu0
  %169 = vdwg.mxu0
  %170 = vst [vmem:[%s6] sm:$0xff] %v156
  %171 = vst [vmem:[%s6 + $0x8] sm:$0xff] %v159
  %172 = vst [vmem:[%s6 + $0x10] sm:$0xff] %v164
  %173 = vst [vmem:[%s6 + $0x18] sm:$0xff] %v167
  %s174 = scalar_lea.vmem %s3, 8
  %v175 = vld [vmem:[%s174] sm:$0xf]
  %v176 = vld [vmem:[%s174 + $0x4] sm:$0xf]
  %s177 = scalar_lea.vmem %s4, 1
  %v178 = vld [vmem:[%s177] sm:$0x1]
  %v180 = vlaneseq
  %v181 = vshrl.u32 %v180, 7
  %v182 = vsub.s32 0, %v181
  %v183 = vrot.slane %v178, %v182
  %v187 = vunpack.c.l.b16 %v175
  %v188 = vunpack.c.l.b16 %v176
  %v189 = vpack.c.b16 %v188, %v187
  %191 = vmatprep.subr.bf16.mxu0 0
  %192 = vmatpush1.bf16.msra.mxu0 %v189
  %193 = vmatprep.subr.bf16.mxu0 0
  %194 = vmatpush1.bf16.msra.mxu0 0
  %195 = vmatprep.subr.bf16.mxu0 0
  %196 = vmatpush1.bf16.msra.mxu0 0
  %197 = vmatprep.subr.bf16.mxu0 0
  %198 = vmatpush1.bf16.msra.mxu0 0
  %199 = vmatprep.subr.bf16.mxu0 0
  %200 = vmatpush1.bf16.msra.mxu0 0
  %201 = vmatprep.subr.bf16.mxu0 0
  %202 = vmatpush1.bf16.msra.mxu0 0
  %203 = vmatprep.subr.bf16.mxu0 0
  %204 = vmatpush1.bf16.msra.mxu0 0
  %205 = vmatprep.subr.bf16.mxu0 0
  %206 = vmatpush1.bf16.msra.mxu0 0
  %207 = vmatprep.subr.bf16.mxu0 0
  %208 = vmatpush1.bf16.msra.mxu0 0
  %209 = vmatprep.subr.bf16.mxu0 0
  %210 = vmatpush1.bf16.msra.mxu0 0
  %211 = vmatprep.subr.bf16.mxu0 0
  %212 = vmatpush1.bf16.msra.mxu0 0
  %213 = vmatprep.subr.bf16.mxu0 0
  %214 = vmatpush1.bf16.msra.mxu0 0
  %215 = vmatprep.subr.bf16.mxu0 0
  %216 = vmatpush1.bf16.msra.mxu0 0
  %217 = vmatprep.subr.bf16.mxu0 0
  %218 = vmatpush1.bf16.msra.mxu0 0
  %219 = vmatprep.subr.bf16.mxu0 0
  %220 = vmatpush1.bf16.msra.mxu0 0
  %221 = vmatprep.subr.bf16.mxu0 0
  %222 = vmatpush1.bf16.msra.mxu0 0
  %223 = vmatprep.mubr.bf16.mxu0 0
  %224 = vmatmul.mubr.bf16.gmra.mrb[0].mxu0 %v48
  %v225 = vpop.f32.mrb[0].mxu0
  %v226 = vadd.f32 %v183, %v225
  %v227 = vpop.f32.mrb[0].mxu0
  %v228 = vpop.f32.mrb[0].mxu0
  %v229 = vadd.f32 %v183, %v228
  %v230 = vpop.f32.mrb[0].mxu0
  %231 = vmatprep.mubr.bf16.mxu0 0
  %232 = vmatmul.mubr.bf16.gmra.mrb[0].mxu0 %v51
  %v233 = vpop.f32.mrb[0].mxu0
  %v234 = vadd.f32 %v183, %v233
  %v235 = vpop.f32.mrb[0].mxu0
  %v236 = vpop.f32.mrb[0].mxu0
  %v237 = vadd.f32 %v183, %v236
  %v238 = vpop.f32.mrb[0].mxu0
  %239 = vdwg.mxu0
  %240 = vst [vmem:[%s7] sm:$0xff] %v226
  %241 = vst [vmem:[%s7 + $0x8] sm:$0xff] %v229
  %242 = vst [vmem:[%s7 + $0x10] sm:$0xff] %v234
  %243 = vst [vmem:[%s7 + $0x18] sm:$0xff] %v237
  %s244 = scalar_lea.vmem %s3, 16
  %v245 = vld [vmem:[%s244] sm:$0xf]
  %v246 = vld [vmem:[%s244 + $0x4] sm:$0xf]
  %s247 = scalar_lea.vmem %s4, 2
  %v248 = vld [vmem:[%s247] sm:$0x1]
  %v250 = vlaneseq
  %v251 = vshrl.u32 %v250, 7
  %v252 = vsub.s32 0, %v251
  %v253 = vrot.slane %v248, %v252
  %v257 = vunpack.c.l.b16 %v245
  %v258 = vunpack.c.l.b16 %v246
  %v259 = vpack.c.b16 %v258, %v257
  %261 = vmatprep.subr.bf16.mxu0 0
  %262 = vmatpush1.bf16.msra.mxu0 %v259
  %263 = vmatprep.subr.bf16.mxu0 0
  %264 = vmatpush1.bf16.msra.mxu0 0
  %265 = vmatprep.subr.bf16.mxu0 0
  %266 = vmatpush1.bf16.msra.mxu0 0
  %267 = vmatprep.subr.bf16.mxu0 0
  %268 = vmatpush1.bf16.msra.mxu0 0
  %269 = vmatprep.subr.bf16.mxu0 0
  %270 = vmatpush1.bf16.msra.mxu0 0
  %271 = vmatprep.subr.bf16.mxu0 0
  %272 = vmatpush1.bf16.msra.mxu0 0
  %273 = vmatprep.subr.bf16.mxu0 0
  %274 = vmatpush1.bf16.msra.mxu0 0
  %275 = vmatprep.subr.bf16.mxu0 0
  %276 = vmatpush1.bf16.msra.mxu0 0
  %277 = vmatprep.subr.bf16.mxu0 0
  %278 = vmatpush1.bf16.msra.mxu0 0
  %279 = vmatprep.subr.bf16.mxu0 0
  %280 = vmatpush1.bf16.msra.mxu0 0
  %281 = vmatprep.subr.bf16.mxu0 0
  %282 = vmatpush1.bf16.msra.mxu0 0
  %283 = vmatprep.subr.bf16.mxu0 0
  %284 = vmatpush1.bf16.msra.mxu0 0
  %285 = vmatprep.subr.bf16.mxu0 0
  %286 = vmatpush1.bf16.msra.mxu0 0
  %287 = vmatprep.subr.bf16.mxu0 0
  %288 = vmatpush1.bf16.msra.mxu0 0
  %289 = vmatprep.subr.bf16.mxu0 0
  %290 = vmatpush1.bf16.msra.mxu0 0
  %291 = vmatprep.subr.bf16.mxu0 0
  %292 = vmatpush1.bf16.msra.mxu0 0
  %293 = vmatprep.mubr.bf16.mxu0 0
  %294 = vmatmul.mubr.bf16.gmra.mrb[0].mxu0 %v48
  %v295 = vpop.f32.mrb[0].mxu0
  %v296 = vadd.f32 %v253, %v295
  %v297 = vpop.f32.mrb[0].mxu0
  %v298 = vpop.f32.mrb[0].mxu0
  %v299 = vadd.f32 %v253, %v298
  %v300 = vpop.f32.mrb[0].mxu0
  %301 = vmatprep.mubr.bf16.mxu0 0
  %302 = vmatmul.mubr.bf16.gmra.mrb[0].mxu0 %v51
  %v303 = vpop.f32.mrb[0].mxu0
  %v304 = vadd.f32 %v253, %v303
  %v305 = vpop.f32.mrb[0].mxu0
  %v306 = vpop.f32.mrb[0].mxu0
  %v307 = vadd.f32 %v253, %v306
  %v308 = vpop.f32.mrb[0].mxu0
  %309 = vdwg.mxu0
  %310 = vst [vmem:[%s8] sm:$0xff] %v296
  %311 = vst [vmem:[%s8 + $0x8] sm:$0xff] %v299
  %312 = vst [vmem:[%s8 + $0x10] sm:$0xff] %v304
  %313 = vst [vmem:[%s8 + $0x18] sm:$0xff] %v307
  // Predicated region
  $region22: #{rep_module_forward.5} parent=0 // pred_check
    _
  $region23: #{rep_module_forward.5} parent=0 // pred_check_branch
    %315 = sbr.rel (0) target = $region25
  $region24: #{rep_module_forward.5} parent=0 // pred_region
    _
  $region25: #{rep_module_forward.5} parent=0 // pred_fallthru
    _
  // Predicated region
  $region26: #{rep_module_forward.5} parent=0 // pred_check
    _
  $region27: #{rep_module_forward.5} parent=0 // pred_check_branch
    %317 = sbr.rel (0) target = $region29
  $region28: #{rep_module_forward.5} parent=0 // pred_region
    _
  $region29: #{rep_module_forward.5} parent=0 // pred_fallthru
    _
  // Predicated region
  $region30: #{rep_module_forward.5} parent=0 // pred_check
    _
  $region31: #{rep_module_forward.5} parent=0 // pred_check_branch
    %319 = sbr.rel (0) target = $region33
  $region32: #{rep_module_forward.5} parent=0 // pred_region
    _
  $region33: #{rep_module_forward.5} parent=0 // pred_fallthru
    _
  // Predicated region
  $region34: #{rep_module_forward.5} parent=0 // pred_check
    _
  $region35: #{rep_module_forward.5} parent=0 // pred_check_branch
    %321 = sbr.rel (0) target = $region37
  $region36: #{rep_module_forward.5} parent=0 // pred_region
    _
  $region37: #{rep_module_forward.5} parent=0 // pred_fallthru
    _
  // Predicated region
  $region38: #{rep_module_forward.5} parent=0 // pred_check
    _
  $region39: #{rep_module_forward.5} parent=0 // pred_check_branch
    %323 = sbr.rel (0) target = $region41
  $region40: #{rep_module_forward.5} parent=0 // pred_region
    _
  $region41: #{rep_module_forward.5} parent=0 // pred_fallthru
    _
  // Predicated region
  $region42: #{rep_module_forward.5} parent=0 // pred_check
    _
  $region43: #{rep_module_forward.5} parent=0 // pred_check_branch
    %325 = sbr.rel (0) target = $region45
  $region44: #{rep_module_forward.5} parent=0 // pred_region
    _
  $region45: #{rep_module_forward.5} parent=0 // pred_fallthru
    _
  // Predicated region
  $region46: #{rep_module_forward.5} parent=0 // pred_check
    _
  $region47: #{rep_module_forward.5} parent=0 // pred_check_branch
    %327 = sbr.rel (0) target = $region49
  $region48: #{rep_module_forward.5} parent=0 // pred_region
    _
  $region49: #{rep_module_forward.5} parent=0 // pred_fallthru
    _
  // Predicated region
  $region50: #{rep_module_forward.5} parent=0 // pred_check
    _
  $region51: #{rep_module_forward.5} parent=0 // pred_check_branch
    %329 = sbr.rel (0) target = $region53
  $region52: #{rep_module_forward.5} parent=0 // pred_region
    _
  $region53: #{rep_module_forward.5} parent=0 // pred_fallthru
    _

// kernel: rep_module_forward.6
$region0: #{rep_module_forward.6}
  #allocation0 [shape = 'u32[]', space=smem, size = 0x4, offset = 0x4, fixed_abs, tag = 'smem constant byte address 0x4 - core index']
  #allocation1 [shape = 'u32[144,128]{1,0:T(1,128)}', space=vmem, size = 0x12000, scoped, tag = 'internal scratch']
  %s0 = inlined_call_operand.vmem [shape: f32[128,3], index: 0, kind: input, shape index: {}]
  %s1 = inlined_call_operand.vmem [shape: f32[128,3], index: 1, kind: input, shape index: {}]
  %s2 = inlined_call_operand.vmem [shape: f32[128,3], index: 2, kind: input, shape index: {}]
  %s3 = inlined_call_operand.vmem [shape: f32[1,32], index: 3, kind: input, shape index: {}]
  %s4 = inlined_call_operand.vmem [shape: bf16[3,32,128], index: 4, kind: input, shape index: {}]
  %s5 = inlined_call_operand.vmem [shape: f32[3,1,128], index: 5, kind: input, shape index: {}]
  %s6 = inlined_call_operand.vmem [shape: bf16[3,128,128], index: 6, kind: input, shape index: {}]
  %s7 = inlined_call_operand.vmem [shape: f32[3,1,128], index: 7, kind: input, shape index: {}]
  %s8 = inlined_call_operand.vmem [shape: f32[3,3], index: 8, kind: input, shape index: {}]
  %s9 = inlined_call_operand.vmem [shape: bf16[128,128], index: 9, kind: output, shape index: {0}]
  %s10 = inlined_call_operand.vmem [shape: bf16[128,128], index: 10, kind: output, shape index: {1}]
  %s11 = inlined_call_operand.vmem [shape: bf16[128,128], index: 11, kind: output, shape index: {2}]
  %12 = xla_tuple %s9, %s10, %s11
  %s13 = sld [smem:[#allocation0]]
  $region66: #{rep_module_forward.6} parent=0
    _
  %s15 = ssub.s32 1, %s13
  %s16 = scalar_select 0, %s15, %s13
  $region1: #{rep_module_forward.6} parent=0
    #allocation2 [shape = 'u8[2048]{0}', space=smem, size = 0x800, scoped, tag = 'input window, operand 8, single buffered']
    #allocation3 [shape = 's32[1]{0}', space=sflag, size = 0x4, scoped, tag = 'scoped memory for rep_module_forward.6']
    %17 = vsyncpa [#allocation3], 0
    // Predicated region
    $region2: #{rep_module_forward.6} parent=1 // pred_check
      _
    $region3: #{rep_module_forward.6} parent=1 // pred_check_branch
      %19 = sbr.rel (0) target = $region5
    $region4: #{rep_module_forward.6} parent=1 // pred_region
      _
    $region5: #{rep_module_forward.6} parent=1 // pred_fallthru
      _
    // Predicated region
    $region6: #{rep_module_forward.6} parent=1 // pred_check
      _
    $region7: #{rep_module_forward.6} parent=1 // pred_check_branch
      %21 = sbr.rel (0) target = $region9
    $region8: #{rep_module_forward.6} parent=1 // pred_region
      _
    $region9: #{rep_module_forward.6} parent=1 // pred_fallthru
      _
    // Predicated region
    $region10: #{rep_module_forward.6} parent=1 // pred_check
      _
    $region11: #{rep_module_forward.6} parent=1 // pred_check_branch
      %23 = sbr.rel (0) target = $region13
    $region12: #{rep_module_forward.6} parent=1 // pred_region
      _
    $region13: #{rep_module_forward.6} parent=1 // pred_fallthru
      _
    // Predicated region
    $region14: #{rep_module_forward.6} parent=1 // pred_check
      _
    $region15: #{rep_module_forward.6} parent=1 // pred_check_branch
      %25 = sbr.rel (0) target = $region17
    $region16: #{rep_module_forward.6} parent=1 // pred_region
      _
    $region17: #{rep_module_forward.6} parent=1 // pred_fallthru
      _
    // Predicated region
    $region18: #{rep_module_forward.6} parent=1 // pred_check
      _
    $region19: #{rep_module_forward.6} parent=1 // pred_check_branch
      %27 = sbr.rel (0) target = $region21
    $region20: #{rep_module_forward.6} parent=1 // pred_region
      _
    $region21: #{rep_module_forward.6} parent=1 // pred_fallthru
      _
    // Predicated region
    $region22: #{rep_module_forward.6} parent=1 // pred_check
      _
    $region23: #{rep_module_forward.6} parent=1 // pred_check_branch
      %29 = sbr.rel (0) target = $region25
    $region24: #{rep_module_forward.6} parent=1 // pred_region
      _
    $region25: #{rep_module_forward.6} parent=1 // pred_fallthru
      _
    // Predicated region
    $region26: #{rep_module_forward.6} parent=1 // pred_check
      _
    $region27: #{rep_module_forward.6} parent=1 // pred_check_branch
      %31 = sbr.rel (0) target = $region29
    $region28: #{rep_module_forward.6} parent=1 // pred_region
      _
    $region29: #{rep_module_forward.6} parent=1 // pred_fallthru
      _
    // Predicated region
    $region30: #{rep_module_forward.6} parent=1 // pred_check
      _
    $region31: #{rep_module_forward.6} parent=1 // pred_check_branch
      %33 = sbr.rel (0) target = $region33
    $region32: #{rep_module_forward.6} parent=1 // pred_region
      _
    $region33: #{rep_module_forward.6} parent=1 // pred_fallthru
      _
    // Predicated region
    $region34: #{rep_module_forward.6} parent=1 // pred_check
      _
    $region35: #{rep_module_forward.6} parent=1 // pred_check_branch
      %35 = sbr.rel (0) target = $region37
    $region36: #{rep_module_forward.6} parent=1 // pred_region
      %s37 = ssub.s32 64, 64
      %38 = vsyncadd [#allocation3], %s37
      %s40 = sshll.u32 %s8, 4
      %s41 = int_to_ptr.vmem [resolvable:$true] %s40
      %43 = dma.vmem_to_smem %s41, 64, [#allocation2], [#allocation3]
    $region37: #{rep_module_forward.6} parent=1 // pred_fallthru
      _
    // Predicated region
    $region38: #{rep_module_forward.6} parent=1 // pred_check
      _
    $region39: #{rep_module_forward.6} parent=1 // pred_check_branch
      %45 = sbr.rel (0) target = $region41
    $region40: #{rep_module_forward.6} parent=1 // pred_region
      %46 = dma.done [#allocation3], 64
    $region41: #{rep_module_forward.6} parent=1 // pred_fallthru
      _
    %47 = sfence
    %v49 = vld [vmem:[%s1] sm:$0xff]
    %v50 = vld [vmem:[%s1 + $0x8] sm:$0xff]
    %v51 = vld [vmem:[%s1 + $0x10] sm:$0xff]
    %v52 = vld [vmem:[%s1 + $0x18] sm:$0xff]
    %v53 = vld [vmem:[%s1 + $0x20] sm:$0xff]
    %v54 = vld [vmem:[%s1 + $0x28] sm:$0xff]
    %v55 = vld [vmem:[%s1 + $0x30] sm:$0xff]
    %v56 = vld [vmem:[%s1 + $0x38] sm:$0xff]
    %v57 = vld [vmem:[%s1 + $0x40] sm:$0xff]
    %v58 = vld [vmem:[%s1 + $0x48] sm:$0xff]
    %v59 = vld [vmem:[%s1 + $0x50] sm:$0xff]
    %v60 = vld [vmem:[%s1 + $0x58] sm:$0xff]
    %v61 = vld [vmem:[%s1 + $0x60] sm:$0xff]
    %v62 = vld [vmem:[%s1 + $0x68] sm:$0xff]
    %v63 = vld [vmem:[%s1 + $0x70] sm:$0xff]
    %v64 = vld [vmem:[%s1 + $0x78] sm:$0xff]
    %v65 = vld [vmem:[%s0] sm:$0xff]
    %v66 = vld [vmem:[%s0 + $0x8] sm:$0xff]
    %v67 = vld [vmem:[%s0 + $0x10] sm:$0xff]
    %v68 = vld [vmem:[%s0 + $0x18] sm:$0xff]
    %v69 = vld [vmem:[%s0 + $0x20] sm:$0xff]
    %v70 = vld [vmem:[%s0 + $0x28] sm:$0xff]
    %v71 = vld [vmem:[%s0 + $0x30] sm:$0xff]
    %v72 = vld [vmem:[%s0 + $0x38] sm:$0xff]
    %v73 = vld [vmem:[%s0 + $0x40] sm:$0xff]
    %v74 = vld [vmem:[%s0 + $0x48] sm:$0xff]
    %v75 = vld [vmem:[%s0 + $0x50] sm:$0xff]
    %v76 = vld [vmem:[%s0 + $0x58] sm:$0xff]
    %v77 = vld [vmem:[%s0 + $0x60] sm:$0xff]
    %v78 = vld [vmem:[%s0 + $0x68] sm:$0xff]
    %v79 = vld [vmem:[%s0 + $0x70] sm:$0xff]
    %v80 = vld [vmem:[%s0 + $0x78] sm:$0xff]
    %v81 = vsub.f32 %v49, %v65
    %v82 = vsub.f32 %v50, %v66
    %v83 = vsub.f32 %v51, %v67
    %v84 = vsub.f32 %v52, %v68
    %v85 = vsub.f32 %v53, %v69
    %v86 = vsub.f32 %v54, %v70
    %v87 = vsub.f32 %v55, %v71
    %v88 = vsub.f32 %v56, %v72
    %v89 = vsub.f32 %v57, %v73
    %v90 = vsub.f32 %v58, %v74
    %v91 = vsub.f32 %v59, %v75
    %v92 = vsub.f32 %v60, %v76
    %v93 = vsub.f32 %v61, %v77
    %v94 = vsub.f32 %v62, %v78
    %v95 = vsub.f32 %v63, %v79
    %v96 = vsub.f32 %v64, %v80
    %v97 = vld [vmem:[%s2] sm:$0xff]
    %v98 = vld [vmem:[%s2 + $0x8] sm:$0xff]
    %v99 = vld [vmem:[%s2 + $0x10] sm:$0xff]
    %v100 = vld [vmem:[%s2 + $0x18] sm:$0xff]
    %v101 = vld [vmem:[%s2 + $0x20] sm:$0xff]
    %v102 = vld [vmem:[%s2 + $0x28] sm:$0xff]
    %v103 = vld [vmem:[%s2 + $0x30] sm:$0xff]
    %v104 = vld [vmem:[%s2 + $0x38] sm:$0xff]
    %v105 = vld [vmem:[%s2 + $0x40] sm:$0xff]
    %v106 = vld [vmem:[%s2 + $0x48] sm:$0xff]
    %v107 = vld [vmem:[%s2 + $0x50] sm:$0xff]
    %v108 = vld [vmem:[%s2 + $0x58] sm:$0xff]
    %v109 = vld [vmem:[%s2 + $0x60] sm:$0xff]
    %v110 = vld [vmem:[%s2 + $0x68] sm:$0xff]
    %v111 = vld [vmem:[%s2 + $0x70] sm:$0xff]
    %v112 = vld [vmem:[%s2 + $0x78] sm:$0xff]
    %v113 = vadd.f32 %v81, %v97
    %v114 = vadd.f32 %v82, %v98
    %v115 = vadd.f32 %v83, %v99
    %v116 = vadd.f32 %v84, %v100
    %v117 = vadd.f32 %v85, %v101
    %v118 = vadd.f32 %v86, %v102
    %v119 = vadd.f32 %v87, %v103
    %v120 = vadd.f32 %v88, %v104
    %v121 = vadd.f32 %v89, %v105
    %v122 = vadd.f32 %v90, %v106
    %v123 = vadd.f32 %v91, %v107
    %v124 = vadd.f32 %v92, %v108
    %v125 = vadd.f32 %v93, %v109
    %v126 = vadd.f32 %v94, %v110
    %v127 = vadd.f32 %v95, %v111
    %v128 = vadd.f32 %v96, %v112
    %v129 = vmul.f32 %v113, %v113
    %v130 = vmul.f32 %v114, %v114
    %v131 = vmul.f32 %v115, %v115
    %v132 = vmul.f32 %v116, %v116
    %v133 = vmul.f32 %v117, %v117
    %v134 = vmul.f32 %v118, %v118
    %v135 = vmul.f32 %v119, %v119
    %v136 = vmul.f32 %v120, %v120
    %v137 = vmul.f32 %v121, %v121
    %v138 = vmul.f32 %v122, %v122
    %v139 = vmul.f32 %v123, %v123
    %v140 = vmul.f32 %v124, %v124
    %v141 = vmul.f32 %v125, %v125
    %v142 = vmul.f32 %v126, %v126
    %v143 = vmul.f32 %v127, %v127
    %v144 = vmul.f32 %v128, %v128
    %161 = vrot.lane.b32.xlu0 %v129, 127
    %v162 = vpop.permute.xlu0 %161
    %163 = vrot.lane.b32.xlu0 %v130, 127
    %v164 = vpop.permute.xlu0 %163
    %165 = vrot.lane.b32.xlu0 %v131, 127
    %v166 = vpop.permute.xlu0 %165
    %167 = vrot.lane.b32.xlu0 %v132, 127
    %v168 = vpop.permute.xlu0 %167
    %169 = vrot.lane.b32.xlu0 %v133, 127
    %v170 = vpop.permute.xlu0 %169
    %171 = vrot.lane.b32.xlu0 %v134, 127
    %v172 = vpop.permute.xlu0 %171
    %173 = vrot.lane.b32.xlu0 %v135, 127
    %v174 = vpop.permute.xlu0 %173
    %175 = vrot.lane.b32.xlu0 %v136, 127
    %v176 = vpop.permute.xlu0 %175
    %177 = vrot.lane.b32.xlu0 %v137, 127
    %v178 = vpop.permute.xlu0 %177
    %179 = vrot.lane.b32.xlu0 %v138, 127
    %v180 = vpop.permute.xlu0 %179
    %181 = vrot.lane.b32.xlu0 %v139, 127
    %v182 = vpop.permute.xlu0 %181
    %183 = vrot.lane.b32.xlu0 %v140, 127
    %v184 = vpop.permute.xlu0 %183
    %185 = vrot.lane.b32.xlu0 %v141, 127
    %v186 = vpop.permute.xlu0 %185
    %187 = vrot.lane.b32.xlu0 %v142, 127
    %v188 = vpop.permute.xlu0 %187
    %189 = vrot.lane.b32.xlu0 %v143, 127
    %v190 = vpop.permute.xlu0 %189
    %191 = vrot.lane.b32.xlu0 %v144, 127
    %v192 = vpop.permute.xlu0 %191
    %v209 = vadd.f32 %v129, %v162
    %v210 = vadd.f32 %v130, %v164
    %v211 = vadd.f32 %v131, %v166
    %v212 = vadd.f32 %v132, %v168
    %v213 = vadd.f32 %v133, %v170
    %v214 = vadd.f32 %v134, %v172
    %v215 = vadd.f32 %v135, %v174
    %v216 = vadd.f32 %v136, %v176
    %v217 = vadd.f32 %v137, %v178
    %v218 = vadd.f32 %v138, %v180
    %v219 = vadd.f32 %v139, %v182
    %v220 = vadd.f32 %v140, %v184
    %v221 = vadd.f32 %v141, %v186
    %v222 = vadd.f32 %v142, %v188
    %v223 = vadd.f32 %v143, %v190
    %v224 = vadd.f32 %v144, %v192
    %225 = vrot.lane.b32.xlu0 %v129, 126
    %v226 = vpop.permute.xlu0 %225
    %227 = vrot.lane.b32.xlu0 %v130, 126
    %v228 = vpop.permute.xlu0 %227
    %229 = vrot.lane.b32.xlu0 %v131, 126
    %v230 = vpop.permute.xlu0 %229
    %231 = vrot.lane.b32.xlu0 %v132, 126
    %v232 = vpop.permute.xlu0 %231
    %233 = vrot.lane.b32.xlu0 %v133, 126
    %v234 = vpop.permute.xlu0 %233
    %235 = vrot.lane.b32.xlu0 %v134, 126
    %v236 = vpop.permute.xlu0 %235
    %237 = vrot.lane.b32.xlu0 %v135, 126
    %v238 = vpop.permute.xlu0 %237
    %239 = vrot.lane.b32.xlu0 %v136, 126
    %v240 = vpop.permute.xlu0 %239
    %241 = vrot.lane.b32.xlu0 %v137, 126
    %v242 = vpop.permute.xlu0 %241
    %243 = vrot.lane.b32.xlu0 %v138, 126
    %v244 = vpop.permute.xlu0 %243
    %245 = vrot.lane.b32.xlu0 %v139, 126
    %v246 = vpop.permute.xlu0 %245
    %247 = vrot.lane.b32.xlu0 %v140, 126
    %v248 = vpop.permute.xlu0 %247
    %249 = vrot.lane.b32.xlu0 %v141, 126
    %v250 = vpop.permute.xlu0 %249
    %251 = vrot.lane.b32.xlu0 %v142, 126
    %v252 = vpop.permute.xlu0 %251
    %253 = vrot.lane.b32.xlu0 %v143, 126
    %v254 = vpop.permute.xlu0 %253
    %255 = vrot.lane.b32.xlu0 %v144, 126
    %v256 = vpop.permute.xlu0 %255
    %v273 = vadd.f32 %v209, %v226
    %v274 = vadd.f32 %v210, %v228
    %v275 = vadd.f32 %v211, %v230
    %v276 = vadd.f32 %v212, %v232
    %v277 = vadd.f32 %v213, %v234
    %v278 = vadd.f32 %v214, %v236
    %v279 = vadd.f32 %v215, %v238
    %v280 = vadd.f32 %v216, %v240
    %v281 = vadd.f32 %v217, %v242
    %v282 = vadd.f32 %v218, %v244
    %v283 = vadd.f32 %v219, %v246
    %v284 = vadd.f32 %v220, %v248
    %v285 = vadd.f32 %v221, %v250
    %v286 = vadd.f32 %v222, %v252
    %v287 = vadd.f32 %v223, %v254
    %v288 = vadd.f32 %v224, %v256
    %v289 = vadd.f32 %v273, 1e-12
    %v290 = vadd.f32 %v274, 1e-12
    %v291 = vadd.f32 %v275, 1e-12
    %v292 = vadd.f32 %v276, 1e-12
    %v293 = vadd.f32 %v277, 1e-12
    %v294 = vadd.f32 %v278, 1e-12
    %v295 = vadd.f32 %v279, 1e-12
    %v296 = vadd.f32 %v280, 1e-12
    %v297 = vadd.f32 %v281, 1e-12
    %v298 = vadd.f32 %v282, 1e-12
    %v299 = vadd.f32 %v283, 1e-12
    %v300 = vadd.f32 %v284, 1e-12
    %v301 = vadd.f32 %v285, 1e-12
    %v302 = vadd.f32 %v286, 1e-12
    %v303 = vadd.f32 %v287, 1e-12
    %v304 = vadd.f32 %v288, 1e-12
    %v305 = vrsqrt.pop %v289
    %v306 = vrsqrt.pop %v290
    %v307 = vrsqrt.pop %v291
    %v308 = vrsqrt.pop %v292
    %v309 = vrsqrt.pop %v293
    %v310 = vrsqrt.pop %v294
    %v311 = vrsqrt.pop %v295
    %v312 = vrsqrt.pop %v296
    %v313 = vrsqrt.pop %v297
    %v314 = vrsqrt.pop %v298
    %v315 = vrsqrt.pop %v299
    %v316 = vrsqrt.pop %v300
    %v317 = vrsqrt.pop %v301
    %v318 = vrsqrt.pop %v302
    %v319 = vrsqrt.pop %v303
    %v320 = vrsqrt.pop %v304
    %v321 = vmul.f32 %v289, %v305
    %v322 = vmul.f32 %v290, %v306
    %v323 = vmul.f32 %v291, %v307
    %v324 = vmul.f32 %v292, %v308
    %v325 = vmul.f32 %v293, %v309
    %v326 = vmul.f32 %v294, %v310
    %v327 = vmul.f32 %v295, %v311
    %v328 = vmul.f32 %v296, %v312
    %v329 = vmul.f32 %v297, %v313
    %v330 = vmul.f32 %v298, %v314
    %v331 = vmul.f32 %v299, %v315
    %v332 = vmul.f32 %v300, %v316
    %v333 = vmul.f32 %v301, %v317
    %v334 = vmul.f32 %v302, %v318
    %v335 = vmul.f32 %v303, %v319
    %v336 = vmul.f32 %v304, %v320
    %v337 = vmul.f32 %v113, %v305
    %v338 = vmul.f32 %v114, %v306
    %v339 = vmul.f32 %v115, %v307
    %v340 = vmul.f32 %v116, %v308
    %v341 = vmul.f32 %v117, %v309
    %v342 = vmul.f32 %v118, %v310
    %v343 = vmul.f32 %v119, %v311
    %v344 = vmul.f32 %v120, %v312
    %v345 = vmul.f32 %v121, %v313
    %v346 = vmul.f32 %v122, %v314
    %v347 = vmul.f32 %v123, %v315
    %v348 = vmul.f32 %v124, %v316
    %v349 = vmul.f32 %v125, %v317
    %v350 = vmul.f32 %v126, %v318
    %v351 = vmul.f32 %v127, %v319
    %v352 = vmul.f32 %v128, %v320
    %369 = vrot.lane.b32.xlu0 %v305, 1
    %v370 = vpop.permute.xlu0 %369
    %371 = vrot.lane.b32.xlu0 %v306, 1
    %v372 = vpop.permute.xlu0 %371
    %373 = vrot.lane.b32.xlu0 %v307, 1
    %v374 = vpop.permute.xlu0 %373
    %375 = vrot.lane.b32.xlu0 %v308, 1
    %v376 = vpop.permute.xlu0 %375
    %377 = vrot.lane.b32.xlu0 %v309, 1
    %v378 = vpop.permute.xlu0 %377
    %379 = vrot.lane.b32.xlu0 %v310, 1
    %v380 = vpop.permute.xlu0 %379
    %381 = vrot.lane.b32.xlu0 %v311, 1
    %v382 = vpop.permute.xlu0 %381
    %383 = vrot.lane.b32.xlu0 %v312, 1
    %v384 = vpop.permute.xlu0 %383
    %385 = vrot.lane.b32.xlu0 %v313, 1
    %v386 = vpop.permute.xlu0 %385
    %387 = vrot.lane.b32.xlu0 %v314, 1
    %v388 = vpop.permute.xlu0 %387
    %389 = vrot.lane.b32.xlu0 %v315, 1
    %v390 = vpop.permute.xlu0 %389
    %391 = vrot.lane.b32.xlu0 %v316, 1
    %v392 = vpop.permute.xlu0 %391
    %393 = vrot.lane.b32.xlu0 %v317, 1
    %v394 = vpop.permute.xlu0 %393
    %395 = vrot.lane.b32.xlu0 %v318, 1
    %v396 = vpop.permute.xlu0 %395
    %397 = vrot.lane.b32.xlu0 %v319, 1
    %v398 = vpop.permute.xlu0 %397
    %399 = vrot.lane.b32.xlu0 %v320, 1
    %v400 = vpop.permute.xlu0 %399
    %v417 = vmul.f32 %v113, %v370
    %v418 = vmul.f32 %v114, %v372
    %v419 = vmul.f32 %v115, %v374
    %v420 = vmul.f32 %v116, %v376
    %v421 = vmul.f32 %v117, %v378
    %v422 = vmul.f32 %v118, %v380
    %v423 = vmul.f32 %v119, %v382
    %v424 = vmul.f32 %v120, %v384
    %v425 = vmul.f32 %v121, %v386
    %v426 = vmul.f32 %v122, %v388
    %v427 = vmul.f32 %v123, %v390
    %v428 = vmul.f32 %v124, %v392
    %v429 = vmul.f32 %v125, %v394
    %v430 = vmul.f32 %v126, %v396
    %v431 = vmul.f32 %v127, %v398
    %v432 = vmul.f32 %v128, %v400
    %433 = vrot.lane.b32.xlu0 %v305, 2
    %v434 = vpop.permute.xlu0 %433
    %435 = vrot.lane.b32.xlu0 %v306, 2
    %v436 = vpop.permute.xlu0 %435
    %437 = vrot.lane.b32.xlu0 %v307, 2
    %v438 = vpop.permute.xlu0 %437
    %439 = vrot.lane.b32.xlu0 %v308, 2
    %v440 = vpop.permute.xlu0 %439
    %441 = vrot.lane.b32.xlu0 %v309, 2
    %v442 = vpop.permute.xlu0 %441
    %443 = vrot.lane.b32.xlu0 %v310, 2
    %v444 = vpop.permute.xlu0 %443
    %445 = vrot.lane.b32.xlu0 %v311, 2
    %v446 = vpop.permute.xlu0 %445
    %447 = vrot.lane.b32.xlu0 %v312, 2
    %v448 = vpop.permute.xlu0 %447
    %449 = vrot.lane.b32.xlu0 %v313, 2
    %v450 = vpop.permute.xlu0 %449
    %451 = vrot.lane.b32.xlu0 %v314, 2
    %v452 = vpop.permute.xlu0 %451
    %453 = vrot.lane.b32.xlu0 %v315, 2
    %v454 = vpop.permute.xlu0 %453
    %455 = vrot.lane.b32.xlu0 %v316, 2
    %v456 = vpop.permute.xlu0 %455
    %457 = vrot.lane.b32.xlu0 %v317, 2
    %v458 = vpop.permute.xlu0 %457
    %459 = vrot.lane.b32.xlu0 %v318, 2
    %v460 = vpop.permute.xlu0 %459
    %461 = vrot.lane.b32.xlu0 %v319, 2
    %v462 = vpop.permute.xlu0 %461
    %463 = vrot.lane.b32.xlu0 %v320, 2
    %v464 = vpop.permute.xlu0 %463
    %v481 = vmul.f32 %v113, %v434
    %v482 = vmul.f32 %v114, %v436
    %v483 = vmul.f32 %v115, %v438
    %v484 = vmul.f32 %v116, %v440
    %v485 = vmul.f32 %v117, %v442
    %v486 = vmul.f32 %v118, %v444
    %v487 = vmul.f32 %v119, %v446
    %v488 = vmul.f32 %v120, %v448
    %v489 = vmul.f32 %v121, %v450
    %v490 = vmul.f32 %v122, %v452
    %v491 = vmul.f32 %v123, %v454
    %v492 = vmul.f32 %v124, %v456
    %v493 = vmul.f32 %v125, %v458
    %v494 = vmul.f32 %v126, %v460
    %v495 = vmul.f32 %v127, %v462
    %v496 = vmul.f32 %v128, %v464
    %v497 = vld [vmem:[%s3] sm:$0x1]
    %499 = vset.pattern.permute.xlu0 0
    %500 = vperm.xlu0 %499, %v321
    %v501 = vpop.permute.xlu0 %500
    %504 = vset.pattern.permute.xlu0 0
    %505 = vperm.xlu0 %504, %v322
    %v506 = vpop.permute.xlu0 %505
    %509 = vset.pattern.permute.xlu0 0
    %510 = vperm.xlu0 %509, %v323
    %v511 = vpop.permute.xlu0 %510
    %514 = vset.pattern.permute.xlu0 0
    %515 = vperm.xlu0 %514, %v324
    %v516 = vpop.permute.xlu0 %515
    %519 = vset.pattern.permute.xlu0 0
    %520 = vperm.xlu0 %519, %v325
    %v521 = vpop.permute.xlu0 %520
    %524 = vset.pattern.permute.xlu0 0
    %525 = vperm.xlu0 %524, %v326
    %v526 = vpop.permute.xlu0 %525
    %529 = vset.pattern.permute.xlu0 0
    %530 = vperm.xlu0 %529, %v327
    %v531 = vpop.permute.xlu0 %530
    %534 = vset.pattern.permute.xlu0 0
    %535 = vperm.xlu0 %534, %v328
    %v536 = vpop.permute.xlu0 %535
    %539 = vset.pattern.permute.xlu0 0
    %540 = vperm.xlu0 %539, %v329
    %v541 = vpop.permute.xlu0 %540
    %544 = vset.pattern.permute.xlu0 0
    %545 = vperm.xlu0 %544, %v330
    %v546 = vpop.permute.xlu0 %545
    %549 = vset.pattern.permute.xlu0 0
    %550 = vperm.xlu0 %549, %v331
    %v551 = vpop.permute.xlu0 %550
    %554 = vset.pattern.permute.xlu0 0
    %555 = vperm.xlu0 %554, %v332
    %v556 = vpop.permute.xlu0 %555
    %559 = vset.pattern.permute.xlu0 0
    %560 = vperm.xlu0 %559, %v333
    %v561 = vpop.permute.xlu0 %560
    %564 = vset.pattern.permute.xlu0 0
    %565 = vperm.xlu0 %564, %v334
    %v566 = vpop.permute.xlu0 %565
    %569 = vset.pattern.permute.xlu0 0
    %570 = vperm.xlu0 %569, %v335
    %v571 = vpop.permute.xlu0 %570
    %574 = vset.pattern.permute.xlu0 0
    %575 = vperm.xlu0 %574, %v336
    %v576 = vpop.permute.xlu0 %575
    %v579 = vlaneseq
    %v580 = vshrl.u32 %v579, 7
    %v581 = vsub.s32 0, %v580
    %v582 = vrot.slane %v497, %v581
    %v584 = vsub.f32 %v501, %v582
    %v585 = vsub.f32 %v506, %v582
    %v586 = vsub.f32 %v511, %v582
    %v587 = vsub.f32 %v516, %v582
    %v588 = vsub.f32 %v521, %v582
    %v589 = vsub.f32 %v526, %v582
    %v590 = vsub.f32 %v531, %v582
    %v591 = vsub.f32 %v536, %v582
    %v592 = vsub.f32 %v541, %v582
    %v593 = vsub.f32 %v546, %v582
    %v594 = vsub.f32 %v551, %v582
    %v595 = vsub.f32 %v556, %v582
    %v596 = vsub.f32 %v561, %v582
    %v597 = vsub.f32 %v566, %v582
    %v598 = vsub.f32 %v571, %v582
    %v599 = vsub.f32 %v576, %v582
    %v600 = vmul.f32 %v584, -10.0
    %v601 = vmul.f32 %v585, -10.0
    %v602 = vmul.f32 %v586, -10.0
    %v603 = vmul.f32 %v587, -10.0
    %v604 = vmul.f32 %v588, -10.0
    %v605 = vmul.f32 %v589, -10.0
    %v606 = vmul.f32 %v590, -10.0
    %v607 = vmul.f32 %v591, -10.0
    %v608 = vmul.f32 %v592, -10.0
    %v609 = vmul.f32 %v593, -10.0
    %v610 = vmul.f32 %v594, -10.0
    %v611 = vmul.f32 %v595, -10.0
    %v612 = vmul.f32 %v596, -10.0
    %v613 = vmul.f32 %v597, -10.0
    %v614 = vmul.f32 %v598, -10.0
    %v615 = vmul.f32 %v599, -10.0
    %v616 = vmul.f32 %v600, %v584
    %v617 = vmul.f32 %v601, %v585
    %v618 = vmul.f32 %v602, %v586
    %v619 = vmul.f32 %v603, %v587
    %v620 = vmul.f32 %v604, %v588
    %v621 = vmul.f32 %v605, %v589
    %v622 = vmul.f32 %v606, %v590
    %v623 = vmul.f32 %v607, %v591
    %v624 = vmul.f32 %v608, %v592
    %v625 = vmul.f32 %v609, %v593
    %v626 = vmul.f32 %v610, %v594
    %v627 = vmul.f32 %v611, %v595
    %v628 = vmul.f32 %v612, %v596
    %v629 = vmul.f32 %v613, %v597
    %v630 = vmul.f32 %v614, %v598
    %v631 = vmul.f32 %v615, %v599
    %v632 = vmul.f32 %v616, 1.442695
    %v633 = vpow.pop %v632
    %v634 = vmul.f32 %v617, 1.442695
    %v635 = vpow.pop %v634
    %v636 = vmul.f32 %v618, 1.442695
    %v637 = vpow.pop %v636
    %v638 = vmul.f32 %v619, 1.442695
    %v639 = vpow.pop %v638
    %v640 = vmul.f32 %v620, 1.442695
    %v641 = vpow.pop %v640
    %v642 = vmul.f32 %v621, 1.442695
    %v643 = vpow.pop %v642
    %v644 = vmul.f32 %v622, 1.442695
    %v645 = vpow.pop %v644
    %v646 = vmul.f32 %v623, 1.442695
    %v647 = vpow.pop %v646
    %v648 = vmul.f32 %v624, 1.442695
    %v649 = vpow.pop %v648
    %v650 = vmul.f32 %v625, 1.442695
    %v651 = vpow.pop %v650
    %v652 = vmul.f32 %v626, 1.442695
    %v653 = vpow.pop %v652
    %v654 = vmul.f32 %v627, 1.442695
    %v655 = vpow.pop %v654
    %v656 = vmul.f32 %v628, 1.442695
    %v657 = vpow.pop %v656
    %v658 = vmul.f32 %v629, 1.442695
    %v659 = vpow.pop %v658
    %v660 = vmul.f32 %v630, 1.442695
    %v661 = vpow.pop %v660
    %v662 = vmul.f32 %v631, 1.442695
    %v663 = vpow.pop %v662
    %v664 = vpack.c.bf16 %v635, %v633
    %v665 = vpack.c.bf16 %v639, %v637
    %v666 = vpack.c.bf16 %v643, %v641
    %v667 = vpack.c.bf16 %v647, %v645
    %v668 = vpack.c.bf16 %v651, %v649
    %v669 = vpack.c.bf16 %v655, %v653
    %v670 = vpack.c.bf16 %v659, %v657
    %v671 = vpack.c.bf16 %v663, %v661
    %v672 = vld [vmem:[%s4] sm:$0xf]
    %v673 = vld [vmem:[%s4 + $0x4] sm:$0xf]
    %v674 = vld [vmem:[%s4 + $0x8] sm:$0xf]
    %v675 = vld [vmem:[%s4 + $0xc] sm:$0xf]
    %v676 = vld [vmem:[%s5] sm:$0x1]
    %v678 = vlaneseq
    %v679 = vshrl.u32 %v678, 7
    %v680 = vsub.s32 0, %v679
    %v681 = vrot.slane %v676, %v680
    %v687 = vunpack.c.l.b16 %v672
    %v688 = vunpack.c.l.b16 %v673
    %v689 = vunpack.c.l.b16 %v674
    %v690 = vunpack.c.l.b16 %v675
    %v691 = vpack.c.b16 %v688, %v687
    %v692 = vpack.c.b16 %v690, %v689
    %vm695 = vcmask 261120
    %v697 = vsel %vm695, %v664, 0
    %v700 = vsel %vm695, %v665, 0
    %v703 = vsel %vm695, %v666, 0
    %v706 = vsel %vm695, %v667, 0
    %v709 = vsel %vm695, %v668, 0
    %v712 = vsel %vm695, %v669, 0
    %v715 = vsel %vm695, %v670, 0
    %v718 = vsel %vm695, %v671, 0
    %720 = vmatprep.subr.bf16.mxu0 0
    %721 = vmatpush1.bf16.msra.mxu0 %v691
    %722 = vmatprep.subr.bf16.mxu0 0
    %723 = vmatpush1.bf16.msra.mxu0 %v692
    %724 = vmatprep.subr.bf16.mxu0 0
    %725 = vmatpush1.bf16.msra.mxu0 0
    %726 = vmatprep.subr.bf16.mxu0 0
    %727 = vmatpush1.bf16.msra.mxu0 0
    %728 = vmatprep.subr.bf16.mxu0 0
    %729 = vmatpush1.bf16.msra.mxu0 0
    %730 = vmatprep.subr.bf16.mxu0 0
    %731 = vmatpush1.bf16.msra.mxu0 0
    %732 = vmatprep.subr.bf16.mxu0 0
    %733 = vmatpush1.bf16.msra.mxu0 0
    %734 = vmatprep.subr.bf16.mxu0 0
    %735 = vmatpush1.bf16.msra.mxu0 0
    %736 = vmatprep.subr.bf16.mxu0 0
    %737 = vmatpush1.bf16.msra.mxu0 0
    %738 = vmatprep.subr.bf16.mxu0 0
    %739 = vmatpush1.bf16.msra.mxu0 0
    %740 = vmatprep.subr.bf16.mxu0 0
    %741 = vmatpush1.bf16.msra.mxu0 0
    %742 = vmatprep.subr.bf16.mxu0 0
    %743 = vmatpush1.bf16.msra.mxu0 0
    %744 = vmatprep.subr.bf16.mxu0 0
    %745 = vmatpush1.bf16.msra.mxu0 0
    %746 = vmatprep.subr.bf16.mxu0 0
    %747 = vmatpush1.bf16.msra.mxu0 0
    %748 = vmatprep.subr.bf16.mxu0 0
    %749 = vmatpush1.bf16.msra.mxu0 0
    %750 = vmatprep.subr.bf16.mxu0 0
    %751 = vmatpush1.bf16.msra.mxu0 0
    %752 = vmatprep.mubr.bf16.mxu0 0
    %753 = vmatmul.mubr.bf16.gmra.mrb[0].mxu0 %v697
    %v754 = vpop.f32.mrb[0].mxu0
    %v755 = vadd.f32 %v681, %v754
    %v756 = vpop.f32.mrb[0].mxu0
    %v757 = vpop.f32.mrb[0].mxu0
    %v758 = vadd.f32 %v681, %v757
    %v759 = vpop.f32.mrb[0].mxu0
    %760 = vmatprep.mubr.bf16.mxu0 0
    %761 = vmatmul.mubr.bf16.gmra.mrb[0].mxu0 %v700
    %v762 = vpop.f32.mrb[0].mxu0
    %v763 = vadd.f32 %v681, %v762
    %v764 = vpop.f32.mrb[0].mxu0
    %v765 = vpop.f32.mrb[0].mxu0
    %v766 = vadd.f32 %v681, %v765
    %v767 = vpop.f32.mrb[0].mxu0
    %768 = vmatprep.mubr.bf16.mxu0 0
    %769 = vmatmul.mubr.bf16.gmra.mrb[0].mxu0 %v703
    %v770 = vpop.f32.mrb[0].mxu0
    %v771 = vadd.f32 %v681, %v770
    %v772 = vpop.f32.mrb[0].mxu0
    %v773 = vpop.f32.mrb[0].mxu0
    %v774 = vadd.f32 %v681, %v773
    %v775 = vpop.f32.mrb[0].mxu0
    %776 = vmatprep.mubr.bf16.mxu0 0
    %777 = vmatmul.mubr.bf16.gmra.mrb[0].mxu0 %v706
    %v778 = vpop.f32.mrb[0].mxu0
    %v779 = vadd.f32 %v681, %v778
    %v780 = vpop.f32.mrb[0].mxu0
    %v781 = vpop.f32.mrb[0].mxu0
    %v782 = vadd.f32 %v681, %v781
    %v783 = vpop.f32.mrb[0].mxu0
    %784 = vmatprep.mubr.bf16.mxu0 0
    %785 = vmatmul.mubr.bf16.gmra.mrb[0].mxu0 %v709
    %v786 = vpop.f32.mrb[0].mxu0
    %v787 = vadd.f32 %v681, %v786
    %v788 = vpop.f32.mrb[0].mxu0
    %v789 = vpop.f32.mrb[0].mxu0
    %v790 = vadd.f32 %v681, %v789
    %v791 = vpop.f32.mrb[0].mxu0
    %792 = vmatprep.mubr.bf16.mxu0 0
    %793 = vmatmul.mubr.bf16.gmra.mrb[0].mxu0 %v712
    %v794 = vpop.f32.mrb[0].mxu0
    %v795 = vadd.f32 %v681, %v794
    %v796 = vpop.f32.mrb[0].mxu0
    %v797 = vpop.f32.mrb[0].mxu0
    %v798 = vadd.f32 %v681, %v797
    %v799 = vpop.f32.mrb[0].mxu0
    %800 = vmatprep.mubr.bf16.mxu0 0
    %801 = vmatmul.mubr.bf16.gmra.mrb[0].mxu0 %v715
    %v802 = vpop.f32.mrb[0].mxu0
    %v803 = vadd.f32 %v681, %v802
    %v804 = vpop.f32.mrb[0].mxu0
    %v805 = vpop.f32.mrb[0].mxu0
    %v806 = vadd.f32 %v681, %v805
    %v807 = vpop.f32.mrb[0].mxu0
    %808 = vmatprep.mubr.bf16.mxu0 0
    %809 = vmatmul.mubr.bf16.gmra.mrb[0].mxu0 %v718
    %v810 = vpop.f32.mrb[0].mxu0
    %v811 = vadd.f32 %v681, %v810
    %v812 = vpop.f32.mrb[0].mxu0
    %v813 = vpop.f32.mrb[0].mxu0
    %v814 = vadd.f32 %v681, %v813
    %v815 = vpop.f32.mrb[0].mxu0
    %816 = vdwg.mxu0
    %v817 = vmax.f32 %v755, 0.0
    %v818 = vmax.f32 %v758, 0.0
    %v819 = vmax.f32 %v763, 0.0
    %v820 = vmax.f32 %v766, 0.0
    %v821 = vmax.f32 %v771, 0.0
    %v822 = vmax.f32 %v774, 0.0
    %v823 = vmax.f32 %v779, 0.0
    %v824 = vmax.f32 %v782, 0.0
    %v825 = vmax.f32 %v787, 0.0
    %v826 = vmax.f32 %v790, 0.0
    %v827 = vmax.f32 %v795, 0.0
    %v828 = vmax.f32 %v798, 0.0
    %v829 = vmax.f32 %v803, 0.0
    %v830 = vmax.f32 %v806, 0.0
    %v831 = vmax.f32 %v811, 0.0
    %v832 = vmax.f32 %v814, 0.0
    %v833 = vpack.c.bf16 %v818, %v817
    %v834 = vpack.c.bf16 %v820, %v819
    %v835 = vpack.c.bf16 %v822, %v821
    %v836 = vpack.c.bf16 %v824, %v823
    %v837 = vpack.c.bf16 %v826, %v825
    %v838 = vpack.c.bf16 %v828, %v827
    %v839 = vpack.c.bf16 %v830, %v829
    %v840 = vpack.c.bf16 %v832, %v831
    %v841 = vld [vmem:[%s6] sm:$0xf]
    %v842 = vld [vmem:[%s6 + $0x4] sm:$0xf]
    %v843 = vld [vmem:[%s6 + $0x8] sm:$0xf]
    %v844 = vld [vmem:[%s6 + $0xc] sm:$0xf]
    %v845 = vld [vmem:[%s6 + $0x10] sm:$0xf]
    %v846 = vld [vmem:[%s6 + $0x14] sm:$0xf]
    %v847 = vld [vmem:[%s6 + $0x18] sm:$0xf]
    %v848 = vld [vmem:[%s6 + $0x1c] sm:$0xf]
    %v849 = vld [vmem:[%s6 + $0x20] sm:$0xf]
    %v850 = vld [vmem:[%s6 + $0x24] sm:$0xf]
    %v851 = vld [vmem:[%s6 + $0x28] sm:$0xf]
    %v852 = vld [vmem:[%s6 + $0x2c] sm:$0xf]
    %v853 = vld [vmem:[%s6 + $0x30] sm:$0xf]
    %v854 = vld [vmem:[%s6 + $0x34] sm:$0xf]
    %v855 = vld [vmem:[%s6 + $0x38] sm:$0xf]
    %v856 = vld [vmem:[%s6 + $0x3c] sm:$0xf]
    %v857 = vld [vmem:[%s7] sm:$0x1]
    %v859 = vlaneseq
    %v860 = vshrl.u32 %v859, 7
    %v861 = vsub.s32 0, %v860
    %v862 = vrot.slane %v857, %v861
    %v880 = vunpack.c.l.b16 %v841
    %v881 = vunpack.c.l.b16 %v842
    %v882 = vunpack.c.l.b16 %v843
    %v883 = vunpack.c.l.b16 %v844
    %v884 = vunpack.c.l.b16 %v845
    %v885 = vunpack.c.l.b16 %v846
    %v886 = vunpack.c.l.b16 %v847
    %v887 = vunpack.c.l.b16 %v848
    %v888 = vunpack.c.l.b16 %v849
    %v889 = vunpack.c.l.b16 %v850
    %v890 = vunpack.c.l.b16 %v851
    %v891 = vunpack.c.l.b16 %v852
    %v892 = vunpack.c.l.b16 %v853
    %v893 = vunpack.c.l.b16 %v854
    %v894 = vunpack.c.l.b16 %v855
    %v895 = vunpack.c.l.b16 %v856
    %v896 = vpack.c.b16 %v881, %v880
    %v897 = vpack.c.b16 %v883, %v882
    %v898 = vpack.c.b16 %v885, %v884
    %v899 = vpack.c.b16 %v887, %v886
    %v900 = vpack.c.b16 %v889, %v888
    %v901 = vpack.c.b16 %v891, %v890
    %v902 = vpack.c.b16 %v893, %v892
    %v903 = vpack.c.b16 %v895, %v894
    %912 = vmatprep.subr.bf16.mxu0 0
    %913 = vmatpush1.bf16.msra.mxu0 %v896
    %914 = vmatprep.subr.bf16.mxu0 0
    %915 = vmatpush1.bf16.msra.mxu0 %v897
    %916 = vmatprep.subr.bf16.mxu0 0
    %917 = vmatpush1.bf16.msra.mxu0 %v898
    %918 = vmatprep.subr.bf16.mxu0 0
    %919 = vmatpush1.bf16.msra.mxu0 %v899
    %920 = vmatprep.subr.bf16.mxu0 0
    %921 = vmatpush1.bf16.msra.mxu0 %v900
    %922 = vmatprep.subr.bf16.mxu0 0
    %923 = vmatpush1.bf16.msra.mxu0 %v901
    %924 = vmatprep.subr.bf16.mxu0 0
    %925 = vmatpush1.bf16.msra.mxu0 %v902
    %926 = vmatprep.subr.bf16.mxu0 0
    %927 = vmatpush1.bf16.msra.mxu0 %v903
    %928 = vmatprep.subr.bf16.mxu0 0
    %929 = vmatpush1.bf16.msra.mxu0 0
    %930 = vmatprep.subr.bf16.mxu0 0
    %931 = vmatpush1.bf16.msra.mxu0 0
    %932 = vmatprep.subr.bf16.mxu0 0
    %933 = vmatpush1.bf16.msra.mxu0 0
    %934 = vmatprep.subr.bf16.mxu0 0
    %935 = vmatpush1.bf16.msra.mxu0 0
    %936 = vmatprep.subr.bf16.mxu0 0
    %937 = vmatpush1.bf16.msra.mxu0 0
    %938 = vmatprep.subr.bf16.mxu0 0
    %939 = vmatpush1.bf16.msra.mxu0 0
    %940 = vmatprep.subr.bf16.mxu0 0
    %941 = vmatpush1.bf16.msra.mxu0 0
    %942 = vmatprep.subr.bf16.mxu0 0
    %943 = vmatpush1.bf16.msra.mxu0 0
    %944 = vmatprep.mubr.bf16.mxu0 0
    %945 = vmatmul.mubr.bf16.gmra.mrb[0].mxu0 %v833
    %v946 = vpop.f32.mrb[0].mxu0
    %v947 = vadd.f32 %v862, %v946
    %v948 = vpop.f32.mrb[0].mxu0
    %v949 = vpop.f32.mrb[0].mxu0
    %v950 = vadd.f32 %v862, %v949
    %v951 = vpop.f32.mrb[0].mxu0
    %952 = vmatprep.mubr.bf16.mxu0 0
    %953 = vmatmul.mubr.bf16.gmra.mrb[0].mxu0 %v834
    %v954 = vpop.f32.mrb[0].mxu0
    %v955 = vadd.f32 %v862, %v954
    %v956 = vpop.f32.mrb[0].mxu0
    %v957 = vpop.f32.mrb[0].mxu0
    %v958 = vadd.f32 %v862, %v957
    %v959 = vpop.f32.mrb[0].mxu0
    %960 = vmatprep.mubr.bf16.mxu0 0
    %961 = vmatmul.mubr.bf16.gmra.mrb[0].mxu0 %v835
    %v962 = vpop.f32.mrb[0].mxu0
    %v963 = vadd.f32 %v862, %v962
    %v964 = vpop.f32.mrb[0].mxu0
    %v965 = vpop.f32.mrb[0].mxu0
    %v966 = vadd.f32 %v862, %v965
    %v967 = vpop.f32.mrb[0].mxu0
    %968 = vmatprep.mubr.bf16.mxu0 0
    %969 = vmatmul.mubr.bf16.gmra.mrb[0].mxu0 %v836
    %v970 = vpop.f32.mrb[0].mxu0
    %v971 = vadd.f32 %v862, %v970
    %v972 = vpop.f32.mrb[0].mxu0
    %v973 = vpop.f32.mrb[0].mxu0
    %v974 = vadd.f32 %v862, %v973
    %v975 = vpop.f32.mrb[0].mxu0
    %976 = vmatprep.mubr.bf16.mxu0 0
    %977 = vmatmul.mubr.bf16.gmra.mrb[0].mxu0 %v837
    %v978 = vpop.f32.mrb[0].mxu0
    %v979 = vadd.f32 %v862, %v978
    %v980 = vpop.f32.mrb[0].mxu0
    %v981 = vpop.f32.mrb[0].mxu0
    %v982 = vadd.f32 %v862, %v981
    %v983 = vpop.f32.mrb[0].mxu0
    %984 = vmatprep.mubr.bf16.mxu0 0
    %985 = vmatmul.mubr.bf16.gmra.mrb[0].mxu0 %v838
    %v986 = vpop.f32.mrb[0].mxu0
    %v987 = vadd.f32 %v862, %v986
    %v988 = vpop.f32.mrb[0].mxu0
    %v989 = vpop.f32.mrb[0].mxu0
    %v990 = vadd.f32 %v862, %v989
    %v991 = vpop.f32.mrb[0].mxu0
    %992 = vmatprep.mubr.bf16.mxu0 0
    %993 = vmatmul.mubr.bf16.gmra.mrb[0].mxu0 %v839
    %v994 = vpop.f32.mrb[0].mxu0
    %v995 = vadd.f32 %v862, %v994
    %v996 = vpop.f32.mrb[0].mxu0
    %v997 = vpop.f32.mrb[0].mxu0
    %v998 = vadd.f32 %v862, %v997
    %v999 = vpop.f32.mrb[0].mxu0
    %1000 = vmatprep.mubr.bf16.mxu0 0
    %1001 = vmatmul.mubr.bf16.gmra.mrb[0].mxu0 %v840
    %v1002 = vpop.f32.mrb[0].mxu0
    %v1003 = vadd.f32 %v862, %v1002
    %v1004 = vpop.f32.mrb[0].mxu0
    %v1005 = vpop.f32.mrb[0].mxu0
    %v1006 = vadd.f32 %v862, %v1005
    %v1007 = vpop.f32.mrb[0].mxu0
    %1008 = vdwg.mxu0
    %s1009 = sld [smem:[#allocation2]]
    %v1010 = vstv %s1009
    %v1011 = vmul.f32 %v337, %v1010
    %v1012 = vmul.f32 %v338, %v1010
    %v1013 = vmul.f32 %v339, %v1010
    %v1014 = vmul.f32 %v340, %v1010
    %v1015 = vmul.f32 %v341, %v1010
    %v1016 = vmul.f32 %v342, %v1010
    %v1017 = vmul.f32 %v343, %v1010
    %v1018 = vmul.f32 %v344, %v1010
    %v1019 = vmul.f32 %v345, %v1010
    %v1020 = vmul.f32 %v346, %v1010
    %v1021 = vmul.f32 %v347, %v1010
    %v1022 = vmul.f32 %v348, %v1010
    %v1023 = vmul.f32 %v349, %v1010
    %v1024 = vmul.f32 %v350, %v1010
    %v1025 = vmul.f32 %v351, %v1010
    %v1026 = vmul.f32 %v352, %v1010
    %s1027 = sld [smem:[#allocation2 + $0x1]]
    %v1028 = vstv %s1027
    %v1029 = vmul.f32 %v417, %v1028
    %v1030 = vmul.f32 %v418, %v1028
    %v1031 = vmul.f32 %v419, %v1028
    %v1032 = vmul.f32 %v420, %v1028
    %v1033 = vmul.f32 %v421, %v1028
    %v1034 = vmul.f32 %v422, %v1028
    %v1035 = vmul.f32 %v423, %v1028
    %v1036 = vmul.f32 %v424, %v1028
    %v1037 = vmul.f32 %v425, %v1028
    %v1038 = vmul.f32 %v426, %v1028
    %v1039 = vmul.f32 %v427, %v1028
    %v1040 = vmul.f32 %v428, %v1028
    %v1041 = vmul.f32 %v429, %v1028
    %v1042 = vmul.f32 %v430, %v1028
    %v1043 = vmul.f32 %v431, %v1028
    %v1044 = vmul.f32 %v432, %v1028
    %1061 = vrot.lane.b32.xlu0 %v1029, 127
    %v1062 = vpop.permute.xlu0 %1061
    %1063 = vrot.lane.b32.xlu0 %v1030, 127
    %v1064 = vpop.permute.xlu0 %1063
    %1065 = vrot.lane.b32.xlu0 %v1031, 127
    %v1066 = vpop.permute.xlu0 %1065
    %1067 = vrot.lane.b32.xlu0 %v1032, 127
    %v1068 = vpop.permute.xlu0 %1067
    %1069 = vrot.lane.b32.xlu0 %v1033, 127
    %v1070 = vpop.permute.xlu0 %1069
    %1071 = vrot.lane.b32.xlu0 %v1034, 127
    %v1072 = vpop.permute.xlu0 %1071
    %1073 = vrot.lane.b32.xlu0 %v1035, 127
    %v1074 = vpop.permute.xlu0 %1073
    %1075 = vrot.lane.b32.xlu0 %v1036, 127
    %v1076 = vpop.permute.xlu0 %1075
    %1077 = vrot.lane.b32.xlu0 %v1037, 127
    %v1078 = vpop.permute.xlu0 %1077
    %1079 = vrot.lane.b32.xlu0 %v1038, 127
    %v1080 = vpop.permute.xlu0 %1079
    %1081 = vrot.lane.b32.xlu0 %v1039, 127
    %v1082 = vpop.permute.xlu0 %1081
    %1083 = vrot.lane.b32.xlu0 %v1040, 127
    %v1084 = vpop.permute.xlu0 %1083
    %1085 = vrot.lane.b32.xlu0 %v1041, 127
    %v1086 = vpop.permute.xlu0 %1085
    %1087 = vrot.lane.b32.xlu0 %v1042, 127
    %v1088 = vpop.permute.xlu0 %1087
    %1089 = vrot.lane.b32.xlu0 %v1043, 127
    %v1090 = vpop.permute.xlu0 %1089
    %1091 = vrot.lane.b32.xlu0 %v1044, 127
    %v1092 = vpop.permute.xlu0 %1091
    %v1109 = vadd.f32 %v1011, %v1062
    %v1110 = vadd.f32 %v1012, %v1064
    %v1111 = vadd.f32 %v1013, %v1066
    %v1112 = vadd.f32 %v1014, %v1068
    %v1113 = vadd.f32 %v1015, %v1070
    %v1114 = vadd.f32 %v1016, %v1072
    %v1115 = vadd.f32 %v1017, %v1074
    %v1116 = vadd.f32 %v1018, %v1076
    %v1117 = vadd.f32 %v1019, %v1078
    %v1118 = vadd.f32 %v1020, %v1080
    %v1119 = vadd.f32 %v1021, %v1082
    %v1120 = vadd.f32 %v1022, %v1084
    %v1121 = vadd.f32 %v1023, %v1086
    %v1122 = vadd.f32 %v1024, %v1088
    %v1123 = vadd.f32 %v1025, %v1090
    %v1124 = vadd.f32 %v1026, %v1092
    %s1125 = sld [smem:[#allocation2 + $0x2]]
    %v1126 = vstv %s1125
    %v1127 = vmul.f32 %v481, %v1126
    %v1128 = vmul.f32 %v482, %v1126
    %v1129 = vmul.f32 %v483, %v1126
    %v1130 = vmul.f32 %v484, %v1126
    %v1131 = vmul.f32 %v485, %v1126
    %v1132 = vmul.f32 %v486, %v1126
    %v1133 = vmul.f32 %v487, %v1126
    %v1134 = vmul.f32 %v488, %v1126
    %v1135 = vmul.f32 %v489, %v1126
    %v1136 = vmul.f32 %v490, %v1126
    %v1137 = vmul.f32 %v491, %v1126
    %v1138 = vmul.f32 %v492, %v1126
    %v1139 = vmul.f32 %v493, %v1126
    %v1140 = vmul.f32 %v494, %v1126
    %v1141 = vmul.f32 %v495, %v1126
    %v1142 = vmul.f32 %v496, %v1126
    %1159 = vrot.lane.b32.xlu0 %v1127, 126
    %v1160 = vpop.permute.xlu0 %1159
    %1161 = vrot.lane.b32.xlu0 %v1128, 126
    %v1162 = vpop.permute.xlu0 %1161
    %1163 = vrot.lane.b32.xlu0 %v1129, 126
    %v1164 = vpop.permute.xlu0 %1163
    %1165 = vrot.lane.b32.xlu0 %v1130, 126
    %v1166 = vpop.permute.xlu0 %1165
    %1167 = vrot.lane.b32.xlu0 %v1131, 126
    %v1168 = vpop.permute.xlu0 %1167
    %1169 = vrot.lane.b32.xlu0 %v1132, 126
    %v1170 = vpop.permute.xlu0 %1169
    %1171 = vrot.lane.b32.xlu0 %v1133, 126
    %v1172 = vpop.permute.xlu0 %1171
    %1173 = vrot.lane.b32.xlu0 %v1134, 126
    %v1174 = vpop.permute.xlu0 %1173
    %1175 = vrot.lane.b32.xlu0 %v1135, 126
    %v1176 = vpop.permute.xlu0 %1175
    %1177 = vrot.lane.b32.xlu0 %v1136, 126
    %v1178 = vpop.permute.xlu0 %1177
    %1179 = vrot.lane.b32.xlu0 %v1137, 126
    %v1180 = vpop.permute.xlu0 %1179
    %1181 = vrot.lane.b32.xlu0 %v1138, 126
    %v1182 = vpop.permute.xlu0 %1181
    %1183 = vrot.lane.b32.xlu0 %v1139, 126
    %v1184 = vpop.permute.xlu0 %1183
    %1185 = vrot.lane.b32.xlu0 %v1140, 126
    %v1186 = vpop.permute.xlu0 %1185
    %1187 = vrot.lane.b32.xlu0 %v1141, 126
    %v1188 = vpop.permute.xlu0 %1187
    %1189 = vrot.lane.b32.xlu0 %v1142, 126
    %v1190 = vpop.permute.xlu0 %1189
    %v1207 = vadd.f32 %v1109, %v1160
    %v1208 = vadd.f32 %v1110, %v1162
    %v1209 = vadd.f32 %v1111, %v1164
    %v1210 = vadd.f32 %v1112, %v1166
    %v1211 = vadd.f32 %v1113, %v1168
    %v1212 = vadd.f32 %v1114, %v1170
    %v1213 = vadd.f32 %v1115, %v1172
    %v1214 = vadd.f32 %v1116, %v1174
    %v1215 = vadd.f32 %v1117, %v1176
    %v1216 = vadd.f32 %v1118, %v1178
    %v1217 = vadd.f32 %v1119, %v1180
    %v1218 = vadd.f32 %v1120, %v1182
    %v1219 = vadd.f32 %v1121, %v1184
    %v1220 = vadd.f32 %v1122, %v1186
    %v1221 = vadd.f32 %v1123, %v1188
    %v1222 = vadd.f32 %v1124, %v1190
    %1224 = vset.pattern.permute.xlu0 0
    %1225 = vperm.xlu0 %1224, %v1207
    %v1226 = vpop.permute.xlu0 %1225
    %1229 = vset.pattern.permute.xlu0 0
    %1230 = vperm.xlu0 %1229, %v1208
    %v1231 = vpop.permute.xlu0 %1230
    %1234 = vset.pattern.permute.xlu0 0
    %1235 = vperm.xlu0 %1234, %v1209
    %v1236 = vpop.permute.xlu0 %1235
    %1239 = vset.pattern.permute.xlu0 0
    %1240 = vperm.xlu0 %1239, %v1210
    %v1241 = vpop.permute.xlu0 %1240
    %1244 = vset.pattern.permute.xlu0 0
    %1245 = vperm.xlu0 %1244, %v1211
    %v1246 = vpop.permute.xlu0 %1245
    %1249 = vset.pattern.permute.xlu0 0
    %1250 = vperm.xlu0 %1249, %v1212
    %v1251 = vpop.permute.xlu0 %1250
    %1254 = vset.pattern.permute.xlu0 0
    %1255 = vperm.xlu0 %1254, %v1213
    %v1256 = vpop.permute.xlu0 %1255
    %1259 = vset.pattern.permute.xlu0 0
    %1260 = vperm.xlu0 %1259, %v1214
    %v1261 = vpop.permute.xlu0 %1260
    %1264 = vset.pattern.permute.xlu0 0
    %1265 = vperm.xlu0 %1264, %v1215
    %v1266 = vpop.permute.xlu0 %1265
    %1269 = vset.pattern.permute.xlu0 0
    %1270 = vperm.xlu0 %1269, %v1216
    %v1271 = vpop.permute.xlu0 %1270
    %1274 = vset.pattern.permute.xlu0 0
    %1275 = vperm.xlu0 %1274, %v1217
    %v1276 = vpop.permute.xlu0 %1275
    %1279 = vset.pattern.permute.xlu0 0
    %1280 = vperm.xlu0 %1279, %v1218
    %v1281 = vpop.permute.xlu0 %1280
    %1284 = vset.pattern.permute.xlu0 0
    %1285 = vperm.xlu0 %1284, %v1219
    %v1286 = vpop.permute.xlu0 %1285
    %1289 = vset.pattern.permute.xlu0 0
    %1290 = vperm.xlu0 %1289, %v1220
    %v1291 = vpop.permute.xlu0 %1290
    %1294 = vset.pattern.permute.xlu0 0
    %1295 = vperm.xlu0 %1294, %v1221
    %v1296 = vpop.permute.xlu0 %1295
    %1299 = vset.pattern.permute.xlu0 0
    %1300 = vperm.xlu0 %1299, %v1222
    %v1301 = vpop.permute.xlu0 %1300
    %v1303 = vmul.f32 %v947, %v1226
    %v1304 = vmul.f32 %v950, %v1231
    %v1305 = vmul.f32 %v955, %v1236
    %v1306 = vmul.f32 %v958, %v1241
    %v1307 = vmul.f32 %v963, %v1246
    %v1308 = vmul.f32 %v966, %v1251
    %v1309 = vmul.f32 %v971, %v1256
    %v1310 = vmul.f32 %v974, %v1261
    %v1311 = vmul.f32 %v979, %v1266
    %v1312 = vmul.f32 %v982, %v1271
    %v1313 = vmul.f32 %v987, %v1276
    %v1314 = vmul.f32 %v990, %v1281
    %v1315 = vmul.f32 %v995, %v1286
    %v1316 = vmul.f32 %v998, %v1291
    %v1317 = vmul.f32 %v1003, %v1296
    %v1318 = vmul.f32 %v1006, %v1301
    %v1319 = vpack.c.bf16 %v1304, %v1303
    %v1320 = vpack.c.bf16 %v1306, %v1305
    %v1321 = vpack.c.bf16 %v1308, %v1307
    %v1322 = vpack.c.bf16 %v1310, %v1309
    %v1323 = vpack.c.bf16 %v1312, %v1311
    %v1324 = vpack.c.bf16 %v1314, %v1313
    %v1325 = vpack.c.bf16 %v1316, %v1315
    %v1326 = vpack.c.bf16 %v1318, %v1317
    %v1335 = vunpack.c.l.b16 %v1319
    %v1336 = vunpack.c.h.b16 %v1319
    %v1337 = vunpack.c.l.b16 %v1320
    %v1338 = vunpack.c.h.b16 %v1320
    %v1339 = vunpack.c.l.b16 %v1321
    %v1340 = vunpack.c.h.b16 %v1321
    %v1341 = vunpack.c.l.b16 %v1322
    %v1342 = vunpack.c.h.b16 %v1322
    %v1343 = vunpack.c.l.b16 %v1323
    %v1344 = vunpack.c.h.b16 %v1323
    %v1345 = vunpack.c.l.b16 %v1324
    %v1346 = vunpack.c.h.b16 %v1324
    %v1347 = vunpack.c.l.b16 %v1325
    %v1348 = vunpack.c.h.b16 %v1325
    %v1349 = vunpack.c.l.b16 %v1326
    %v1350 = vunpack.c.h.b16 %v1326
    %v1351 = vpack.c.b16 %v1335, %v1335
    %v1352 = vpack.c.b16 %v1336, %v1336
    %v1353 = vpack.c.b16 %v1337, %v1337
    %v1354 = vpack.c.b16 %v1338, %v1338
    %v1355 = vpack.c.b16 %v1339, %v1339
    %v1356 = vpack.c.b16 %v1340, %v1340
    %v1357 = vpack.c.b16 %v1341, %v1341
    %v1358 = vpack.c.b16 %v1342, %v1342
    %v1359 = vpack.c.b16 %v1343, %v1343
    %v1360 = vpack.c.b16 %v1344, %v1344
    %v1361 = vpack.c.b16 %v1345, %v1345
    %v1362 = vpack.c.b16 %v1346, %v1346
    %v1363 = vpack.c.b16 %v1347, %v1347
    %v1364 = vpack.c.b16 %v1348, %v1348
    %v1365 = vpack.c.b16 %v1349, %v1349
    %v1366 = vpack.c.b16 %v1350, %v1350
    %1383 = vst [vmem:[%s9] sm:$0xf] %v1351
    %1384 = vst [vmem:[%s9 + $0x4] sm:$0xf] %v1352
    %1385 = vst [vmem:[%s9 + $0x8] sm:$0xf] %v1353
    %1386 = vst [vmem:[%s9 + $0xc] sm:$0xf] %v1354
    %1387 = vst [vmem:[%s9 + $0x10] sm:$0xf] %v1355
    %1388 = vst [vmem:[%s9 + $0x14] sm:$0xf] %v1356
    %1389 = vst [vmem:[%s9 + $0x18] sm:$0xf] %v1357
    %1390 = vst [vmem:[%s9 + $0x1c] sm:$0xf] %v1358
    %1391 = vst [vmem:[%s9 + $0x20] sm:$0xf] %v1359
    %1392 = vst [vmem:[%s9 + $0x24] sm:$0xf] %v1360
    %1393 = vst [vmem:[%s9 + $0x28] sm:$0xf] %v1361
    %1394 = vst [vmem:[%s9 + $0x2c] sm:$0xf] %v1362
    %1395 = vst [vmem:[%s9 + $0x30] sm:$0xf] %v1363
    %1396 = vst [vmem:[%s9 + $0x34] sm:$0xf] %v1364
    %1397 = vst [vmem:[%s9 + $0x38] sm:$0xf] %v1365
    %1398 = vst [vmem:[%s9 + $0x3c] sm:$0xf] %v1366
    %s1399 = scalar_lea.vmem %s4, 16
    %v1400 = vld [vmem:[%s1399] sm:$0xf]
    %v1401 = vld [vmem:[%s1399 + $0x4] sm:$0xf]
    %v1402 = vld [vmem:[%s1399 + $0x8] sm:$0xf]
    %v1403 = vld [vmem:[%s1399 + $0xc] sm:$0xf]
    %s1404 = scalar_lea.vmem %s5, 1
    %v1405 = vld [vmem:[%s1404] sm:$0x1]
    %v1407 = vlaneseq
    %v1408 = vshrl.u32 %v1407, 7
    %v1409 = vsub.s32 0, %v1408
    %v1410 = vrot.slane %v1405, %v1409
    %v1416 = vunpack.c.l.b16 %v1400
    %v1417 = vunpack.c.l.b16 %v1401
    %v1418 = vunpack.c.l.b16 %v1402
    %v1419 = vunpack.c.l.b16 %v1403
    %v1420 = vpack.c.b16 %v1417, %v1416
    %v1421 = vpack.c.b16 %v1419, %v1418
    %1424 = vmatprep.subr.bf16.mxu0 0
    %1425 = vmatpush1.bf16.msra.mxu0 %v1420
    %1426 = vmatprep.subr.bf16.mxu0 0
    %1427 = vmatpush1.bf16.msra.mxu0 %v1421
    %1428 = vmatprep.subr.bf16.mxu0 0
    %1429 = vmatpush1.bf16.msra.mxu0 0
    %1430 = vmatprep.subr.bf16.mxu0 0
    %1431 = vmatpush1.bf16.msra.mxu0 0
    %1432 = vmatprep.subr.bf16.mxu0 0
    %1433 = vmatpush1.bf16.msra.mxu0 0
    %1434 = vmatprep.subr.bf16.mxu0 0
    %1435 = vmatpush1.bf16.msra.mxu0 0
    %1436 = vmatprep.subr.bf16.mxu0 0
    %1437 = vmatpush1.bf16.msra.mxu0 0
    %1438 = vmatprep.subr.bf16.mxu0 0
    %1439 = vmatpush1.bf16.msra.mxu0 0
    %1440 = vmatprep.subr.bf16.mxu0 0
    %1441 = vmatpush1.bf16.msra.mxu0 0
    %1442 = vmatprep.subr.bf16.mxu0 0
    %1443 = vmatpush1.bf16.msra.mxu0 0
    %1444 = vmatprep.subr.bf16.mxu0 0
    %1445 = vmatpush1.bf16.msra.mxu0 0
    %1446 = vmatprep.subr.bf16.mxu0 0
    %1447 = vmatpush1.bf16.msra.mxu0 0
    %1448 = vmatprep.subr.bf16.mxu0 0
    %1449 = vmatpush1.bf16.msra.mxu0 0
    %1450 = vmatprep.subr.bf16.mxu0 0
    %1451 = vmatpush1.bf16.msra.mxu0 0
    %1452 = vmatprep.subr.bf16.mxu0 0
    %1453 = vmatpush1.bf16.msra.mxu0 0
    %1454 = vmatprep.subr.bf16.mxu0 0
    %1455 = vmatpush1.bf16.msra.mxu0 0
    %1456 = vmatprep.mubr.bf16.mxu0 0
    %1457 = vmatmul.mubr.bf16.gmra.mrb[0].mxu0 %v697
    %v1458 = vpop.f32.mrb[0].mxu0
    %v1459 = vadd.f32 %v1410, %v1458
    %v1460 = vpop.f32.mrb[0].mxu0
    %v1461 = vpop.f32.mrb[0].mxu0
    %v1462 = vadd.f32 %v1410, %v1461
    %v1463 = vpop.f32.mrb[0].mxu0
    %1464 = vmatprep.mubr.bf16.mxu0 0
    %1465 = vmatmul.mubr.bf16.gmra.mrb[0].mxu0 %v700
    %v1466 = vpop.f32.mrb[0].mxu0
    %v1467 = vadd.f32 %v1410, %v1466
    %v1468 = vpop.f32.mrb[0].mxu0
    %v1469 = vpop.f32.mrb[0].mxu0
    %v1470 = vadd.f32 %v1410, %v1469
    %v1471 = vpop.f32.mrb[0].mxu0
    %1472 = vmatprep.mubr.bf16.mxu0 0
    %1473 = vmatmul.mubr.bf16.gmra.mrb[0].mxu0 %v703
    %v1474 = vpop.f32.mrb[0].mxu0
    %v1475 = vadd.f32 %v1410, %v1474
    %v1476 = vpop.f32.mrb[0].mxu0
    %v1477 = vpop.f32.mrb[0].mxu0
    %v1478 = vadd.f32 %v1410, %v1477
    %v1479 = vpop.f32.mrb[0].mxu0
    %1480 = vmatprep.mubr.bf16.mxu0 0
    %1481 = vmatmul.mubr.bf16.gmra.mrb[0].mxu0 %v706
    %v1482 = vpop.f32.mrb[0].mxu0
    %v1483 = vadd.f32 %v1410, %v1482
    %v1484 = vpop.f32.mrb[0].mxu0
    %v1485 = vpop.f32.mrb[0].mxu0
    %v1486 = vadd.f32 %v1410, %v1485
    %v1487 = vpop.f32.mrb[0].mxu0
    %1488 = vmatprep.mubr.bf16.mxu0 0
    %1489 = vmatmul.mubr.bf16.gmra.mrb[0].mxu0 %v709
    %v1490 = vpop.f32.mrb[0].mxu0
    %v1491 = vadd.f32 %v1410, %v1490
    %v1492 = vpop.f32.mrb[0].mxu0
    %v1493 = vpop.f32.mrb[0].mxu0
    %v1494 = vadd.f32 %v1410, %v1493
    %v1495 = vpop.f32.mrb[0].mxu0
    %1496 = vmatprep.mubr.bf16.mxu0 0
    %1497 = vmatmul.mubr.bf16.gmra.mrb[0].mxu0 %v712
    %v1498 = vpop.f32.mrb[0].mxu0
    %v1499 = vadd.f32 %v1410, %v1498
    %v1500 = vpop.f32.mrb[0].mxu0
    %v1501 = vpop.f32.mrb[0].mxu0
    %v1502 = vadd.f32 %v1410, %v1501
    %v1503 = vpop.f32.mrb[0].mxu0
    %1504 = vmatprep.mubr.bf16.mxu0 0
    %1505 = vmatmul.mubr.bf16.gmra.mrb[0].mxu0 %v715
    %v1506 = vpop.f32.mrb[0].mxu0
    %v1507 = vadd.f32 %v1410, %v1506
    %v1508 = vpop.f32.mrb[0].mxu0
    %v1509 = vpop.f32.mrb[0].mxu0
    %v1510 = vadd.f32 %v1410, %v1509
    %v1511 = vpop.f32.mrb[0].mxu0
    %1512 = vmatprep.mubr.bf16.mxu0 0
    %1513 = vmatmul.mubr.bf16.gmra.mrb[0].mxu0 %v718
    %v1514 = vpop.f32.mrb[0].mxu0
    %v1515 = vadd.f32 %v1410, %v1514
    %v1516 = vpop.f32.mrb[0].mxu0
    %v1517 = vpop.f32.mrb[0].mxu0
    %v1518 = vadd.f32 %v1410, %v1517
    %v1519 = vpop.f32.mrb[0].mxu0
    %1520 = vdwg.mxu0
    %v1521 = vmax.f32 %v1459, 0.0
    %v1522 = vmax.f32 %v1462, 0.0
    %v1523 = vmax.f32 %v1467, 0.0
    %v1524 = vmax.f32 %v1470, 0.0
    %v1525 = vmax.f32 %v1475, 0.0
    %v1526 = vmax.f32 %v1478, 0.0
    %v1527 = vmax.f32 %v1483, 0.0
    %v1528 = vmax.f32 %v1486, 0.0
    %v1529 = vmax.f32 %v1491, 0.0
    %v1530 = vmax.f32 %v1494, 0.0
    %v1531 = vmax.f32 %v1499, 0.0
    %v1532 = vmax.f32 %v1502, 0.0
    %v1533 = vmax.f32 %v1507, 0.0
    %v1534 = vmax.f32 %v1510, 0.0
    %v1535 = vmax.f32 %v1515, 0.0
    %v1536 = vmax.f32 %v1518, 0.0
    %v1537 = vpack.c.bf16 %v1522, %v1521
    %v1538 = vpack.c.bf16 %v1524, %v1523
    %v1539 = vpack.c.bf16 %v1526, %v1525
    %v1540 = vpack.c.bf16 %v1528, %v1527
    %v1541 = vpack.c.bf16 %v1530, %v1529
    %v1542 = vpack.c.bf16 %v1532, %v1531
    %v1543 = vpack.c.bf16 %v1534, %v1533
    %v1544 = vpack.c.bf16 %v1536, %v1535
    %s1545 = scalar_lea.vmem %s6, 64
    %v1546 = vld [vmem:[%s1545] sm:$0xf]
    %v1547 = vld [vmem:[%s1545 + $0x4] sm:$0xf]
    %v1548 = vld [vmem:[%s1545 + $0x8] sm:$0xf]
    %v1549 = vld [vmem:[%s1545 + $0xc] sm:$0xf]
    %v1550 = vld [vmem:[%s1545 + $0x10] sm:$0xf]
    %v1551 = vld [vmem:[%s1545 + $0x14] sm:$0xf]
    %v1552 = vld [vmem:[%s1545 + $0x18] sm:$0xf]
    %v1553 = vld [vmem:[%s1545 + $0x1c] sm:$0xf]
    %v1554 = vld [vmem:[%s1545 + $0x20] sm:$0xf]
    %v1555 = vld [vmem:[%s1545 + $0x24] sm:$0xf]
    %v1556 = vld [vmem:[%s1545 + $0x28] sm:$0xf]
    %v1557 = vld [vmem:[%s1545 + $0x2c] sm:$0xf]
    %v1558 = vld [vmem:[%s1545 + $0x30] sm:$0xf]
    %v1559 = vld [vmem:[%s1545 + $0x34] sm:$0xf]
    %v1560 = vld [vmem:[%s1545 + $0x38] sm:$0xf]
    %v1561 = vld [vmem:[%s1545 + $0x3c] sm:$0xf]
    %s1562 = scalar_lea.vmem %s7, 1
    %v1563 = vld [vmem:[%s1562] sm:$0x1]
    %v1565 = vlaneseq
    %v1566 = vshrl.u32 %v1565, 7
    %v1567 = vsub.s32 0, %v1566
    %v1568 = vrot.slane %v1563, %v1567
    %v1586 = vunpack.c.l.b16 %v1546
    %v1587 = vunpack.c.l.b16 %v1547
    %v1588 = vunpack.c.l.b16 %v1548
    %v1589 = vunpack.c.l.b16 %v1549
    %v1590 = vunpack.c.l.b16 %v1550
    %v1591 = vunpack.c.l.b16 %v1551
    %v1592 = vunpack.c.l.b16 %v1552
    %v1593 = vunpack.c.l.b16 %v1553
    %v1594 = vunpack.c.l.b16 %v1554
    %v1595 = vunpack.c.l.b16 %v1555
    %v1596 = vunpack.c.l.b16 %v1556
    %v1597 = vunpack.c.l.b16 %v1557
    %v1598 = vunpack.c.l.b16 %v1558
    %v1599 = vunpack.c.l.b16 %v1559
    %v1600 = vunpack.c.l.b16 %v1560
    %v1601 = vunpack.c.l.b16 %v1561
    %v1602 = vpack.c.b16 %v1587, %v1586
    %v1603 = vpack.c.b16 %v1589, %v1588
    %v1604 = vpack.c.b16 %v1591, %v1590
    %v1605 = vpack.c.b16 %v1593, %v1592
    %v1606 = vpack.c.b16 %v1595, %v1594
    %v1607 = vpack.c.b16 %v1597, %v1596
    %v1608 = vpack.c.b16 %v1599, %v1598
    %v1609 = vpack.c.b16 %v1601, %v1600
    %1618 = vmatprep.subr.bf16.mxu0 0
    %1619 = vmatpush1.bf16.msra.mxu0 %v1602
    %1620 = vmatprep.subr.bf16.mxu0 0
    %1621 = vmatpush1.bf16.msra.mxu0 %v1603
    %1622 = vmatprep.subr.bf16.mxu0 0
    %1623 = vmatpush1.bf16.msra.mxu0 %v1604
    %1624 = vmatprep.subr.bf16.mxu0 0
    %1625 = vmatpush1.bf16.msra.mxu0 %v1605
    %1626 = vmatprep.subr.bf16.mxu0 0
    %1627 = vmatpush1.bf16.msra.mxu0 %v1606
    %1628 = vmatprep.subr.bf16.mxu0 0
    %1629 = vmatpush1.bf16.msra.mxu0 %v1607
    %1630 = vmatprep.subr.bf16.mxu0 0
    %1631 = vmatpush1.bf16.msra.mxu0 %v1608
    %1632 = vmatprep.subr.bf16.mxu0 0
    %1633 = vmatpush1.bf16.msra.mxu0 %v1609
    %1634 = vmatprep.subr.bf16.mxu0 0
    %1635 = vmatpush1.bf16.msra.mxu0 0
    %1636 = vmatprep.subr.bf16.mxu0 0
    %1637 = vmatpush1.bf16.msra.mxu0 0
    %1638 = vmatprep.subr.bf16.mxu0 0
    %1639 = vmatpush1.bf16.msra.mxu0 0
    %1640 = vmatprep.subr.bf16.mxu0 0
    %1641 = vmatpush1.bf16.msra.mxu0 0
    %1642 = vmatprep.subr.bf16.mxu0 0
    %1643 = vmatpush1.bf16.msra.mxu0 0
    %1644 = vmatprep.subr.bf16.mxu0 0
    %1645 = vmatpush1.bf16.msra.mxu0 0
    %1646 = vmatprep.subr.bf16.mxu0 0
    %1647 = vmatpush1.bf16.msra.mxu0 0
    %1648 = vmatprep.subr.bf16.mxu0 0
    %1649 = vmatpush1.bf16.msra.mxu0 0
    %1650 = vmatprep.mubr.bf16.mxu0 0
    %1651 = vmatmul.mubr.bf16.gmra.mrb[0].mxu0 %v1537
    %v1652 = vpop.f32.mrb[0].mxu0
    %v1653 = vadd.f32 %v1568, %v1652
    %v1654 = vpop.f32.mrb[0].mxu0
    %v1655 = vpop.f32.mrb[0].mxu0
    %v1656 = vadd.f32 %v1568, %v1655
    %v1657 = vpop.f32.mrb[0].mxu0
    %1658 = vmatprep.mubr.bf16.mxu0 0
    %1659 = vmatmul.mubr.bf16.gmra.mrb[0].mxu0 %v1538
    %v1660 = vpop.f32.mrb[0].mxu0
    %v1661 = vadd.f32 %v1568, %v1660
    %v1662 = vpop.f32.mrb[0].mxu0
    %v1663 = vpop.f32.mrb[0].mxu0
    %v1664 = vadd.f32 %v1568, %v1663
    %v1665 = vpop.f32.mrb[0].mxu0
    %1666 = vmatprep.mubr.bf16.mxu0 0
    %1667 = vmatmul.mubr.bf16.gmra.mrb[0].mxu0 %v1539
    %v1668 = vpop.f32.mrb[0].mxu0
    %v1669 = vadd.f32 %v1568, %v1668
    %v1670 = vpop.f32.mrb[0].mxu0
    %v1671 = vpop.f32.mrb[0].mxu0
    %v1672 = vadd.f32 %v1568, %v1671
    %v1673 = vpop.f32.mrb[0].mxu0
    %1674 = vmatprep.mubr.bf16.mxu0 0
    %1675 = vmatmul.mubr.bf16.gmra.mrb[0].mxu0 %v1540
    %v1676 = vpop.f32.mrb[0].mxu0
    %v1677 = vadd.f32 %v1568, %v1676
    %v1678 = vpop.f32.mrb[0].mxu0
    %v1679 = vpop.f32.mrb[0].mxu0
    %v1680 = vadd.f32 %v1568, %v1679
    %v1681 = vpop.f32.mrb[0].mxu0
    %1682 = vmatprep.mubr.bf16.mxu0 0
    %1683 = vmatmul.mubr.bf16.gmra.mrb[0].mxu0 %v1541
    %v1684 = vpop.f32.mrb[0].mxu0
    %v1685 = vadd.f32 %v1568, %v1684
    %v1686 = vpop.f32.mrb[0].mxu0
    %v1687 = vpop.f32.mrb[0].mxu0
    %v1688 = vadd.f32 %v1568, %v1687
    %v1689 = vpop.f32.mrb[0].mxu0
    %1690 = vmatprep.mubr.bf16.mxu0 0
    %1691 = vmatmul.mubr.bf16.gmra.mrb[0].mxu0 %v1542
    %v1692 = vpop.f32.mrb[0].mxu0
    %v1693 = vadd.f32 %v1568, %v1692
    %v1694 = vpop.f32.mrb[0].mxu0
    %v1695 = vpop.f32.mrb[0].mxu0
    %v1696 = vadd.f32 %v1568, %v1695
    %v1697 = vpop.f32.mrb[0].mxu0
    %1698 = vmatprep.mubr.bf16.mxu0 0
    %1699 = vmatmul.mubr.bf16.gmra.mrb[0].mxu0 %v1543
    %v1700 = vpop.f32.mrb[0].mxu0
    %v1701 = vadd.f32 %v1568, %v1700
    %v1702 = vpop.f32.mrb[0].mxu0
    %v1703 = vpop.f32.mrb[0].mxu0
    %v1704 = vadd.f32 %v1568, %v1703
    %v1705 = vpop.f32.mrb[0].mxu0
    %1706 = vmatprep.mubr.bf16.mxu0 0
    %1707 = vmatmul.mubr.bf16.gmra.mrb[0].mxu0 %v1544
    %v1708 = vpop.f32.mrb[0].mxu0
    %v1709 = vadd.f32 %v1568, %v1708
    %v1710 = vpop.f32.mrb[0].mxu0
    %v1711 = vpop.f32.mrb[0].mxu0
    %v1712 = vadd.f32 %v1568, %v1711
    %v1713 = vpop.f32.mrb[0].mxu0
    %1714 = vdwg.mxu0
    %s1715 = sld [smem:[#allocation2 + $0x80]]
    %v1716 = vstv %s1715
    %v1717 = vmul.f32 %v337, %v1716
    %v1718 = vmul.f32 %v338, %v1716
    %v1719 = vmul.f32 %v339, %v1716
    %v1720 = vmul.f32 %v340, %v1716
    %v1721 = vmul.f32 %v341, %v1716
    %v1722 = vmul.f32 %v342, %v1716
    %v1723 = vmul.f32 %v343, %v1716
    %v1724 = vmul.f32 %v344, %v1716
    %v1725 = vmul.f32 %v345, %v1716
    %v1726 = vmul.f32 %v346, %v1716
    %v1727 = vmul.f32 %v347, %v1716
    %v1728 = vmul.f32 %v348, %v1716
    %v1729 = vmul.f32 %v349, %v1716
    %v1730 = vmul.f32 %v350, %v1716
    %v1731 = vmul.f32 %v351, %v1716
    %v1732 = vmul.f32 %v352, %v1716
    %s1733 = sld [smem:[#allocation2 + $0x81]]
    %v1734 = vstv %s1733
    %v1735 = vmul.f32 %v417, %v1734
    %v1736 = vmul.f32 %v418, %v1734
    %v1737 = vmul.f32 %v419, %v1734
    %v1738 = vmul.f32 %v420, %v1734
    %v1739 = vmul.f32 %v421, %v1734
    %v1740 = vmul.f32 %v422, %v1734
    %v1741 = vmul.f32 %v423, %v1734
    %v1742 = vmul.f32 %v424, %v1734
    %v1743 = vmul.f32 %v425, %v1734
    %v1744 = vmul.f32 %v426, %v1734
    %v1745 = vmul.f32 %v427, %v1734
    %v1746 = vmul.f32 %v428, %v1734
    %v1747 = vmul.f32 %v429, %v1734
    %v1748 = vmul.f32 %v430, %v1734
    %v1749 = vmul.f32 %v431, %v1734
    %v1750 = vmul.f32 %v432, %v1734
    %1767 = vrot.lane.b32.xlu0 %v1735, 127
    %v1768 = vpop.permute.xlu0 %1767
    %1769 = vrot.lane.b32.xlu0 %v1736, 127
    %v1770 = vpop.permute.xlu0 %1769
    %1771 = vrot.lane.b32.xlu0 %v1737, 127
    %v1772 = vpop.permute.xlu0 %1771
    %1773 = vrot.lane.b32.xlu0 %v1738, 127
    %v1774 = vpop.permute.xlu0 %1773
    %1775 = vrot.lane.b32.xlu0 %v1739, 127
    %v1776 = vpop.permute.xlu0 %1775
    %1777 = vrot.lane.b32.xlu0 %v1740, 127
    %v1778 = vpop.permute.xlu0 %1777
    %1779 = vrot.lane.b32.xlu0 %v1741, 127
    %v1780 = vpop.permute.xlu0 %1779
    %1781 = vrot.lane.b32.xlu0 %v1742, 127
    %v1782 = vpop.permute.xlu0 %1781
    %1783 = vrot.lane.b32.xlu0 %v1743, 127
    %v1784 = vpop.permute.xlu0 %1783
    %1785 = vrot.lane.b32.xlu0 %v1744, 127
    %v1786 = vpop.permute.xlu0 %1785
    %1787 = vrot.lane.b32.xlu0 %v1745, 127
    %v1788 = vpop.permute.xlu0 %1787
    %1789 = vrot.lane.b32.xlu0 %v1746, 127
    %v1790 = vpop.permute.xlu0 %1789
    %1791 = vrot.lane.b32.xlu0 %v1747, 127
    %v1792 = vpop.permute.xlu0 %1791
    %1793 = vrot.lane.b32.xlu0 %v1748, 127
    %v1794 = vpop.permute.xlu0 %1793
    %1795 = vrot.lane.b32.xlu0 %v1749, 127
    %v1796 = vpop.permute.xlu0 %1795
    %1797 = vrot.lane.b32.xlu0 %v1750, 127
    %v1798 = vpop.permute.xlu0 %1797
    %v1815 = vadd.f32 %v1717, %v1768
    %v1816 = vadd.f32 %v1718, %v1770
    %v1817 = vadd.f32 %v1719, %v1772
    %v1818 = vadd.f32 %v1720, %v1774
    %v1819 = vadd.f32 %v1721, %v1776
    %v1820 = vadd.f32 %v1722, %v1778
    %v1821 = vadd.f32 %v1723, %v1780
    %v1822 = vadd.f32 %v1724, %v1782
    %v1823 = vadd.f32 %v1725, %v1784
    %v1824 = vadd.f32 %v1726, %v1786
    %v1825 = vadd.f32 %v1727, %v1788
    %v1826 = vadd.f32 %v1728, %v1790
    %v1827 = vadd.f32 %v1729, %v1792
    %v1828 = vadd.f32 %v1730, %v1794
    %v1829 = vadd.f32 %v1731, %v1796
    %v1830 = vadd.f32 %v1732, %v1798
    %s1831 = sld [smem:[#allocation2 + $0x82]]
    %v1832 = vstv %s1831
    %v1833 = vmul.f32 %v481, %v1832
    %v1834 = vmul.f32 %v482, %v1832
    %v1835 = vmul.f32 %v483, %v1832
    %v1836 = vmul.f32 %v484, %v1832
    %v1837 = vmul.f32 %v485, %v1832
    %v1838 = vmul.f32 %v486, %v1832
    %v1839 = vmul.f32 %v487, %v1832
    %v1840 = vmul.f32 %v488, %v1832
    %v1841 = vmul.f32 %v489, %v1832
    %v1842 = vmul.f32 %v490, %v1832
    %v1843 = vmul.f32 %v491, %v1832
    %v1844 = vmul.f32 %v492, %v1832
    %v1845 = vmul.f32 %v493, %v1832
    %v1846 = vmul.f32 %v494, %v1832
    %v1847 = vmul.f32 %v495, %v1832
    %v1848 = vmul.f32 %v496, %v1832
    %1865 = vrot.lane.b32.xlu0 %v1833, 126
    %v1866 = vpop.permute.xlu0 %1865
    %1867 = vrot.lane.b32.xlu0 %v1834, 126
    %v1868 = vpop.permute.xlu0 %1867
    %1869 = vrot.lane.b32.xlu0 %v1835, 126
    %v1870 = vpop.permute.xlu0 %1869
    %1871 = vrot.lane.b32.xlu0 %v1836, 126
    %v1872 = vpop.permute.xlu0 %1871
    %1873 = vrot.lane.b32.xlu0 %v1837, 126
    %v1874 = vpop.permute.xlu0 %1873
    %1875 = vrot.lane.b32.xlu0 %v1838, 126
    %v1876 = vpop.permute.xlu0 %1875
    %1877 = vrot.lane.b32.xlu0 %v1839, 126
    %v1878 = vpop.permute.xlu0 %1877
    %1879 = vrot.lane.b32.xlu0 %v1840, 126
    %v1880 = vpop.permute.xlu0 %1879
    %1881 = vrot.lane.b32.xlu0 %v1841, 126
    %v1882 = vpop.permute.xlu0 %1881
    %1883 = vrot.lane.b32.xlu0 %v1842, 126
    %v1884 = vpop.permute.xlu0 %1883
    %1885 = vrot.lane.b32.xlu0 %v1843, 126
    %v1886 = vpop.permute.xlu0 %1885
    %1887 = vrot.lane.b32.xlu0 %v1844, 126
    %v1888 = vpop.permute.xlu0 %1887
    %1889 = vrot.lane.b32.xlu0 %v1845, 126
    %v1890 = vpop.permute.xlu0 %1889
    %1891 = vrot.lane.b32.xlu0 %v1846, 126
    %v1892 = vpop.permute.xlu0 %1891
    %1893 = vrot.lane.b32.xlu0 %v1847, 126
    %v1894 = vpop.permute.xlu0 %1893
    %1895 = vrot.lane.b32.xlu0 %v1848, 126
    %v1896 = vpop.permute.xlu0 %1895
    %v1913 = vadd.f32 %v1815, %v1866
    %v1914 = vadd.f32 %v1816, %v1868
    %v1915 = vadd.f32 %v1817, %v1870
    %v1916 = vadd.f32 %v1818, %v1872
    %v1917 = vadd.f32 %v1819, %v1874
    %v1918 = vadd.f32 %v1820, %v1876
    %v1919 = vadd.f32 %v1821, %v1878
    %v1920 = vadd.f32 %v1822, %v1880
    %v1921 = vadd.f32 %v1823, %v1882
    %v1922 = vadd.f32 %v1824, %v1884
    %v1923 = vadd.f32 %v1825, %v1886
    %v1924 = vadd.f32 %v1826, %v1888
    %v1925 = vadd.f32 %v1827, %v1890
    %v1926 = vadd.f32 %v1828, %v1892
    %v1927 = vadd.f32 %v1829, %v1894
    %v1928 = vadd.f32 %v1830, %v1896
    %1930 = vset.pattern.permute.xlu0 0
    %1931 = vperm.xlu0 %1930, %v1913
    %v1932 = vpop.permute.xlu0 %1931
    %1935 = vset.pattern.permute.xlu0 0
    %1936 = vperm.xlu0 %1935, %v1914
    %v1937 = vpop.permute.xlu0 %1936
    %1940 = vset.pattern.permute.xlu0 0
    %1941 = vperm.xlu0 %1940, %v1915
    %v1942 = vpop.permute.xlu0 %1941
    %1945 = vset.pattern.permute.xlu0 0
    %1946 = vperm.xlu0 %1945, %v1916
    %v1947 = vpop.permute.xlu0 %1946
    %1950 = vset.pattern.permute.xlu0 0
    %1951 = vperm.xlu0 %1950, %v1917
    %v1952 = vpop.permute.xlu0 %1951
    %1955 = vset.pattern.permute.xlu0 0
    %1956 = vperm.xlu0 %1955, %v1918
    %v1957 = vpop.permute.xlu0 %1956
    %1960 = vset.pattern.permute.xlu0 0
    %1961 = vperm.xlu0 %1960, %v1919
    %v1962 = vpop.permute.xlu0 %1961
    %1965 = vset.pattern.permute.xlu0 0
    %1966 = vperm.xlu0 %1965, %v1920
    %v1967 = vpop.permute.xlu0 %1966
    %1970 = vset.pattern.permute.xlu0 0
    %1971 = vperm.xlu0 %1970, %v1921
    %v1972 = vpop.permute.xlu0 %1971
    %1975 = vset.pattern.permute.xlu0 0
    %1976 = vperm.xlu0 %1975, %v1922
    %v1977 = vpop.permute.xlu0 %1976
    %1980 = vset.pattern.permute.xlu0 0
    %1981 = vperm.xlu0 %1980, %v1923
    %v1982 = vpop.permute.xlu0 %1981
    %1985 = vset.pattern.permute.xlu0 0
    %1986 = vperm.xlu0 %1985, %v1924
    %v1987 = vpop.permute.xlu0 %1986
    %1990 = vset.pattern.permute.xlu0 0
    %1991 = vperm.xlu0 %1990, %v1925
    %v1992 = vpop.permute.xlu0 %1991
    %1995 = vset.pattern.permute.xlu0 0
    %1996 = vperm.xlu0 %1995, %v1926
    %v1997 = vpop.permute.xlu0 %1996
    %2000 = vset.pattern.permute.xlu0 0
    %2001 = vperm.xlu0 %2000, %v1927
    %v2002 = vpop.permute.xlu0 %2001
    %2005 = vset.pattern.permute.xlu0 0
    %2006 = vperm.xlu0 %2005, %v1928
    %v2007 = vpop.permute.xlu0 %2006
    %v2009 = vmul.f32 %v1653, %v1932
    %v2010 = vmul.f32 %v1656, %v1937
    %v2011 = vmul.f32 %v1661, %v1942
    %v2012 = vmul.f32 %v1664, %v1947
    %v2013 = vmul.f32 %v1669, %v1952
    %v2014 = vmul.f32 %v1672, %v1957
    %v2015 = vmul.f32 %v1677, %v1962
    %v2016 = vmul.f32 %v1680, %v1967
    %v2017 = vmul.f32 %v1685, %v1972
    %v2018 = vmul.f32 %v1688, %v1977
    %v2019 = vmul.f32 %v1693, %v1982
    %v2020 = vmul.f32 %v1696, %v1987
    %v2021 = vmul.f32 %v1701, %v1992
    %v2022 = vmul.f32 %v1704, %v1997
    %v2023 = vmul.f32 %v1709, %v2002
    %v2024 = vmul.f32 %v1712, %v2007
    %v2025 = vpack.c.bf16 %v2010, %v2009
    %v2026 = vpack.c.bf16 %v2012, %v2011
    %v2027 = vpack.c.bf16 %v2014, %v2013
    %v2028 = vpack.c.bf16 %v2016, %v2015
    %v2029 = vpack.c.bf16 %v2018, %v2017
    %v2030 = vpack.c.bf16 %v2020, %v2019
    %v2031 = vpack.c.bf16 %v2022, %v2021
    %v2032 = vpack.c.bf16 %v2024, %v2023
    %v2041 = vunpack.c.l.b16 %v2025
    %v2042 = vunpack.c.h.b16 %v2025
    %v2043 = vunpack.c.l.b16 %v2026
    %v2044 = vunpack.c.h.b16 %v2026
    %v2045 = vunpack.c.l.b16 %v2027
    %v2046 = vunpack.c.h.b16 %v2027
    %v2047 = vunpack.c.l.b16 %v2028
    %v2048 = vunpack.c.h.b16 %v2028
    %v2049 = vunpack.c.l.b16 %v2029
    %v2050 = vunpack.c.h.b16 %v2029
    %v2051 = vunpack.c.l.b16 %v2030
    %v2052 = vunpack.c.h.b16 %v2030
    %v2053 = vunpack.c.l.b16 %v2031
    %v2054 = vunpack.c.h.b16 %v2031
    %v2055 = vunpack.c.l.b16 %v2032
    %v2056 = vunpack.c.h.b16 %v2032
    %v2057 = vpack.c.b16 %v2041, %v2041
    %v2058 = vpack.c.b16 %v2042, %v2042
    %v2059 = vpack.c.b16 %v2043, %v2043
    %v2060 = vpack.c.b16 %v2044, %v2044
    %v2061 = vpack.c.b16 %v2045, %v2045
    %v2062 = vpack.c.b16 %v2046, %v2046
    %v2063 = vpack.c.b16 %v2047, %v2047
    %v2064 = vpack.c.b16 %v2048, %v2048
    %v2065 = vpack.c.b16 %v2049, %v2049
    %v2066 = vpack.c.b16 %v2050, %v2050
    %v2067 = vpack.c.b16 %v2051, %v2051
    %v2068 = vpack.c.b16 %v2052, %v2052
    %v2069 = vpack.c.b16 %v2053, %v2053
    %v2070 = vpack.c.b16 %v2054, %v2054
    %v2071 = vpack.c.b16 %v2055, %v2055
    %v2072 = vpack.c.b16 %v2056, %v2056
    %2089 = vst [vmem:[%s10] sm:$0xf] %v2057
    %2090 = vst [vmem:[%s10 + $0x4] sm:$0xf] %v2058
    %2091 = vst [vmem:[%s10 + $0x8] sm:$0xf] %v2059
    %2092 = vst [vmem:[%s10 + $0xc] sm:$0xf] %v2060
    %2093 = vst [vmem:[%s10 + $0x10] sm:$0xf] %v2061
    %2094 = vst [vmem:[%s10 + $0x14] sm:$0xf] %v2062
    %2095 = vst [vmem:[%s10 + $0x18] sm:$0xf] %v2063
    %2096 = vst [vmem:[%s10 + $0x1c] sm:$0xf] %v2064
    %2097 = vst [vmem:[%s10 + $0x20] sm:$0xf] %v2065
    %2098 = vst [vmem:[%s10 + $0x24] sm:$0xf] %v2066
    %2099 = vst [vmem:[%s10 + $0x28] sm:$0xf] %v2067
    %2100 = vst [vmem:[%s10 + $0x2c] sm:$0xf] %v2068
    %2101 = vst [vmem:[%s10 + $0x30] sm:$0xf] %v2069
    %2102 = vst [vmem:[%s10 + $0x34] sm:$0xf] %v2070
    %2103 = vst [vmem:[%s10 + $0x38] sm:$0xf] %v2071
    %2104 = vst [vmem:[%s10 + $0x3c] sm:$0xf] %v2072
    %s2105 = scalar_lea.vmem %s4, 32
    %v2106 = vld [vmem:[%s2105] sm:$0xf]
    %v2107 = vld [vmem:[%s2105 + $0x4] sm:$0xf]
    %v2108 = vld [vmem:[%s2105 + $0x8] sm:$0xf]
    %v2109 = vld [vmem:[%s2105 + $0xc] sm:$0xf]
    %s2110 = scalar_lea.vmem %s5, 2
    %v2111 = vld [vmem:[%s2110] sm:$0x1]
    %v2113 = vlaneseq
    %v2114 = vshrl.u32 %v2113, 7
    %v2115 = vsub.s32 0, %v2114
    %v2116 = vrot.slane %v2111, %v2115
    %v2122 = vunpack.c.l.b16 %v2106
    %v2123 = vunpack.c.l.b16 %v2107
    %v2124 = vunpack.c.l.b16 %v2108
    %v2125 = vunpack.c.l.b16 %v2109
    %v2126 = vpack.c.b16 %v2123, %v2122
    %v2127 = vpack.c.b16 %v2125, %v2124
    %2130 = vmatprep.subr.bf16.mxu0 0
    %2131 = vmatpush1.bf16.msra.mxu0 %v2126
    %2132 = vmatprep.subr.bf16.mxu0 0
    %2133 = vmatpush1.bf16.msra.mxu0 %v2127
    %2134 = vmatprep.subr.bf16.mxu0 0
    %2135 = vmatpush1.bf16.msra.mxu0 0
    %2136 = vmatprep.subr.bf16.mxu0 0
    %2137 = vmatpush1.bf16.msra.mxu0 0
    %2138 = vmatprep.subr.bf16.mxu0 0
    %2139 = vmatpush1.bf16.msra.mxu0 0
    %2140 = vmatprep.subr.bf16.mxu0 0
    %2141 = vmatpush1.bf16.msra.mxu0 0
    %2142 = vmatprep.subr.bf16.mxu0 0
    %2143 = vmatpush1.bf16.msra.mxu0 0
    %2144 = vmatprep.subr.bf16.mxu0 0
    %2145 = vmatpush1.bf16.msra.mxu0 0
    %2146 = vmatprep.subr.bf16.mxu0 0
    %2147 = vmatpush1.bf16.msra.mxu0 0
    %2148 = vmatprep.subr.bf16.mxu0 0
    %2149 = vmatpush1.bf16.msra.mxu0 0
    %2150 = vmatprep.subr.bf16.mxu0 0
    %2151 = vmatpush1.bf16.msra.mxu0 0
    %2152 = vmatprep.subr.bf16.mxu0 0
    %2153 = vmatpush1.bf16.msra.mxu0 0
    %2154 = vmatprep.subr.bf16.mxu0 0
    %2155 = vmatpush1.bf16.msra.mxu0 0
    %2156 = vmatprep.subr.bf16.mxu0 0
    %2157 = vmatpush1.bf16.msra.mxu0 0
    %2158 = vmatprep.subr.bf16.mxu0 0
    %2159 = vmatpush1.bf16.msra.mxu0 0
    %2160 = vmatprep.subr.bf16.mxu0 0
    %2161 = vmatpush1.bf16.msra.mxu0 0
    %2162 = vmatprep.mubr.bf16.mxu0 0
    %2163 = vmatmul.mubr.bf16.gmra.mrb[0].mxu0 %v697
    %v2164 = vpop.f32.mrb[0].mxu0
    %v2165 = vadd.f32 %v2116, %v2164
    %v2166 = vpop.f32.mrb[0].mxu0
    %v2167 = vpop.f32.mrb[0].mxu0
    %v2168 = vadd.f32 %v2116, %v2167
    %v2169 = vpop.f32.mrb[0].mxu0
    %2170 = vmatprep.mubr.bf16.mxu0 0
    %2171 = vmatmul.mubr.bf16.gmra.mrb[0].mxu0 %v700
    %v2172 = vpop.f32.mrb[0].mxu0
    %v2173 = vadd.f32 %v2116, %v2172
    %v2174 = vpop.f32.mrb[0].mxu0
    %v2175 = vpop.f32.mrb[0].mxu0
    %v2176 = vadd.f32 %v2116, %v2175
    %v2177 = vpop.f32.mrb[0].mxu0
    %2178 = vmatprep.mubr.bf16.mxu0 0
    %2179 = vmatmul.mubr.bf16.gmra.mrb[0].mxu0 %v703
    %v2180 = vpop.f32.mrb[0].mxu0
    %v2181 = vadd.f32 %v2116, %v2180
    %v2182 = vpop.f32.mrb[0].mxu0
    %v2183 = vpop.f32.mrb[0].mxu0
    %v2184 = vadd.f32 %v2116, %v2183
    %v2185 = vpop.f32.mrb[0].mxu0
    %2186 = vmatprep.mubr.bf16.mxu0 0
    %2187 = vmatmul.mubr.bf16.gmra.mrb[0].mxu0 %v706
    %v2188 = vpop.f32.mrb[0].mxu0
    %v2189 = vadd.f32 %v2116, %v2188
    %v2190 = vpop.f32.mrb[0].mxu0
    %v2191 = vpop.f32.mrb[0].mxu0
    %v2192 = vadd.f32 %v2116, %v2191
    %v2193 = vpop.f32.mrb[0].mxu0
    %2194 = vmatprep.mubr.bf16.mxu0 0
    %2195 = vmatmul.mubr.bf16.gmra.mrb[0].mxu0 %v709
    %v2196 = vpop.f32.mrb[0].mxu0
    %v2197 = vadd.f32 %v2116, %v2196
    %v2198 = vpop.f32.mrb[0].mxu0
    %v2199 = vpop.f32.mrb[0].mxu0
    %v2200 = vadd.f32 %v2116, %v2199
    %v2201 = vpop.f32.mrb[0].mxu0
    %2202 = vmatprep.mubr.bf16.mxu0 0
    %2203 = vmatmul.mubr.bf16.gmra.mrb[0].mxu0 %v712
    %v2204 = vpop.f32.mrb[0].mxu0
    %v2205 = vadd.f32 %v2116, %v2204
    %v2206 = vpop.f32.mrb[0].mxu0
    %v2207 = vpop.f32.mrb[0].mxu0
    %v2208 = vadd.f32 %v2116, %v2207
    %v2209 = vpop.f32.mrb[0].mxu0
    %2210 = vmatprep.mubr.bf16.mxu0 0
    %2211 = vmatmul.mubr.bf16.gmra.mrb[0].mxu0 %v715
    %v2212 = vpop.f32.mrb[0].mxu0
    %v2213 = vadd.f32 %v2116, %v2212
    %v2214 = vpop.f32.mrb[0].mxu0
    %v2215 = vpop.f32.mrb[0].mxu0
    %v2216 = vadd.f32 %v2116, %v2215
    %v2217 = vpop.f32.mrb[0].mxu0
    %2218 = vmatprep.mubr.bf16.mxu0 0
    %2219 = vmatmul.mubr.bf16.gmra.mrb[0].mxu0 %v718
    %v2220 = vpop.f32.mrb[0].mxu0
    %v2221 = vadd.f32 %v2116, %v2220
    %v2222 = vpop.f32.mrb[0].mxu0
    %v2223 = vpop.f32.mrb[0].mxu0
    %v2224 = vadd.f32 %v2116, %v2223
    %v2225 = vpop.f32.mrb[0].mxu0
    %2226 = vdwg.mxu0
    %v2227 = vmax.f32 %v2165, 0.0
    %v2228 = vmax.f32 %v2168, 0.0
    %v2229 = vmax.f32 %v2173, 0.0
    %v2230 = vmax.f32 %v2176, 0.0
    %v2231 = vmax.f32 %v2181, 0.0
    %v2232 = vmax.f32 %v2184, 0.0
    %v2233 = vmax.f32 %v2189, 0.0
    %v2234 = vmax.f32 %v2192, 0.0
    %v2235 = vmax.f32 %v2197, 0.0
    %v2236 = vmax.f32 %v2200, 0.0
    %v2237 = vmax.f32 %v2205, 0.0
    %v2238 = vmax.f32 %v2208, 0.0
    %v2239 = vmax.f32 %v2213, 0.0
    %v2240 = vmax.f32 %v2216, 0.0
    %v2241 = vmax.f32 %v2221, 0.0
    %v2242 = vmax.f32 %v2224, 0.0
    %v2243 = vpack.c.bf16 %v2228, %v2227
    %v2244 = vpack.c.bf16 %v2230, %v2229
    %v2245 = vpack.c.bf16 %v2232, %v2231
    %v2246 = vpack.c.bf16 %v2234, %v2233
    %v2247 = vpack.c.bf16 %v2236, %v2235
    %v2248 = vpack.c.bf16 %v2238, %v2237
    %v2249 = vpack.c.bf16 %v2240, %v2239
    %v2250 = vpack.c.bf16 %v2242, %v2241
    %s2251 = scalar_lea.vmem %s6, 128
    %v2252 = vld [vmem:[%s2251] sm:$0xf]
    %v2253 = vld [vmem:[%s2251 + $0x4] sm:$0xf]
    %v2254 = vld [vmem:[%s2251 + $0x8] sm:$0xf]
    %v2255 = vld [vmem:[%s2251 + $0xc] sm:$0xf]
    %v2256 = vld [vmem:[%s2251 + $0x10] sm:$0xf]
    %v2257 = vld [vmem:[%s2251 + $0x14] sm:$0xf]
    %v2258 = vld [vmem:[%s2251 + $0x18] sm:$0xf]
    %v2259 = vld [vmem:[%s2251 + $0x1c] sm:$0xf]
    %v2260 = vld [vmem:[%s2251 + $0x20] sm:$0xf]
    %v2261 = vld [vmem:[%s2251 + $0x24] sm:$0xf]
    %v2262 = vld [vmem:[%s2251 + $0x28] sm:$0xf]
    %v2263 = vld [vmem:[%s2251 + $0x2c] sm:$0xf]
    %v2264 = vld [vmem:[%s2251 + $0x30] sm:$0xf]
    %v2265 = vld [vmem:[%s2251 + $0x34] sm:$0xf]
    %v2266 = vld [vmem:[%s2251 + $0x38] sm:$0xf]
    %v2267 = vld [vmem:[%s2251 + $0x3c] sm:$0xf]
    %s2268 = scalar_lea.vmem %s7, 2
    %v2269 = vld [vmem:[%s2268] sm:$0x1]
    %v2271 = vlaneseq
    %v2272 = vshrl.u32 %v2271, 7
    %v2273 = vsub.s32 0, %v2272
    %v2274 = vrot.slane %v2269, %v2273
    %v2292 = vunpack.c.l.b16 %v2252
    %v2293 = vunpack.c.l.b16 %v2253
    %v2294 = vunpack.c.l.b16 %v2254
    %v2295 = vunpack.c.l.b16 %v2255
    %v2296 = vunpack.c.l.b16 %v2256
    %v2297 = vunpack.c.l.b16 %v2257
    %v2298 = vunpack.c.l.b16 %v2258
    %v2299 = vunpack.c.l.b16 %v2259
    %v2300 = vunpack.c.l.b16 %v2260
    %v2301 = vunpack.c.l.b16 %v2261
    %v2302 = vunpack.c.l.b16 %v2262
    %v2303 = vunpack.c.l.b16 %v2263
    %v2304 = vunpack.c.l.b16 %v2264
    %v2305 = vunpack.c.l.b16 %v2265
    %v2306 = vunpack.c.l.b16 %v2266
    %v2307 = vunpack.c.l.b16 %v2267
    %v2308 = vpack.c.b16 %v2293, %v2292
    %v2309 = vpack.c.b16 %v2295, %v2294
    %v2310 = vpack.c.b16 %v2297, %v2296
    %v2311 = vpack.c.b16 %v2299, %v2298
    %v2312 = vpack.c.b16 %v2301, %v2300
    %v2313 = vpack.c.b16 %v2303, %v2302
    %v2314 = vpack.c.b16 %v2305, %v2304
    %v2315 = vpack.c.b16 %v2307, %v2306
    %2324 = vmatprep.subr.bf16.mxu0 0
    %2325 = vmatpush1.bf16.msra.mxu0 %v2308
    %2326 = vmatprep.subr.bf16.mxu0 0
    %2327 = vmatpush1.bf16.msra.mxu0 %v2309
    %2328 = vmatprep.subr.bf16.mxu0 0
    %2329 = vmatpush1.bf16.msra.mxu0 %v2310
    %2330 = vmatprep.subr.bf16.mxu0 0
    %2331 = vmatpush1.bf16.msra.mxu0 %v2311
    %2332 = vmatprep.subr.bf16.mxu0 0
    %2333 = vmatpush1.bf16.msra.mxu0 %v2312
    %2334 = vmatprep.subr.bf16.mxu0 0
    %2335 = vmatpush1.bf16.msra.mxu0 %v2313
    %2336 = vmatprep.subr.bf16.mxu0 0
    %2337 = vmatpush1.bf16.msra.mxu0 %v2314
    %2338 = vmatprep.subr.bf16.mxu0 0
    %2339 = vmatpush1.bf16.msra.mxu0 %v2315
    %2340 = vmatprep.subr.bf16.mxu0 0
    %2341 = vmatpush1.bf16.msra.mxu0 0
    %2342 = vmatprep.subr.bf16.mxu0 0
    %2343 = vmatpush1.bf16.msra.mxu0 0
    %2344 = vmatprep.subr.bf16.mxu0 0
    %2345 = vmatpush1.bf16.msra.mxu0 0
    %2346 = vmatprep.subr.bf16.mxu0 0
    %2347 = vmatpush1.bf16.msra.mxu0 0
    %2348 = vmatprep.subr.bf16.mxu0 0
    %2349 = vmatpush1.bf16.msra.mxu0 0
    %2350 = vmatprep.subr.bf16.mxu0 0
    %2351 = vmatpush1.bf16.msra.mxu0 0
    %2352 = vmatprep.subr.bf16.mxu0 0
    %2353 = vmatpush1.bf16.msra.mxu0 0
    %2354 = vmatprep.subr.bf16.mxu0 0
    %2355 = vmatpush1.bf16.msra.mxu0 0
    %2356 = vmatprep.mubr.bf16.mxu0 0
    %2357 = vmatmul.mubr.bf16.gmra.mrb[0].mxu0 %v2243
    %v2358 = vpop.f32.mrb[0].mxu0
    %v2359 = vadd.f32 %v2274, %v2358
    %v2360 = vpop.f32.mrb[0].mxu0
    %v2361 = vpop.f32.mrb[0].mxu0
    %v2362 = vadd.f32 %v2274, %v2361
    %v2363 = vpop.f32.mrb[0].mxu0
    %2364 = vmatprep.mubr.bf16.mxu0 0
    %2365 = vmatmul.mubr.bf16.gmra.mrb[0].mxu0 %v2244
    %v2366 = vpop.f32.mrb[0].mxu0
    %v2367 = vadd.f32 %v2274, %v2366
    %v2368 = vpop.f32.mrb[0].mxu0
    %v2369 = vpop.f32.mrb[0].mxu0
    %v2370 = vadd.f32 %v2274, %v2369
    %v2371 = vpop.f32.mrb[0].mxu0
    %2372 = vmatprep.mubr.bf16.mxu0 0
    %2373 = vmatmul.mubr.bf16.gmra.mrb[0].mxu0 %v2245
    %v2374 = vpop.f32.mrb[0].mxu0
    %v2375 = vadd.f32 %v2274, %v2374
    %v2376 = vpop.f32.mrb[0].mxu0
    %v2377 = vpop.f32.mrb[0].mxu0
    %v2378 = vadd.f32 %v2274, %v2377
    %v2379 = vpop.f32.mrb[0].mxu0
    %2380 = vmatprep.mubr.bf16.mxu0 0
    %2381 = vmatmul.mubr.bf16.gmra.mrb[0].mxu0 %v2246
    %v2382 = vpop.f32.mrb[0].mxu0
    %v2383 = vadd.f32 %v2274, %v2382
    %v2384 = vpop.f32.mrb[0].mxu0
    %v2385 = vpop.f32.mrb[0].mxu0
    %v2386 = vadd.f32 %v2274, %v2385
    %v2387 = vpop.f32.mrb[0].mxu0
    %2388 = vmatprep.mubr.bf16.mxu0 0
    %2389 = vmatmul.mubr.bf16.gmra.mrb[0].mxu0 %v2247
    %v2390 = vpop.f32.mrb[0].mxu0
    %v2391 = vadd.f32 %v2274, %v2390
    %v2392 = vpop.f32.mrb[0].mxu0
    %v2393 = vpop.f32.mrb[0].mxu0
    %v2394 = vadd.f32 %v2274, %v2393
    %v2395 = vpop.f32.mrb[0].mxu0
    %2396 = vmatprep.mubr.bf16.mxu0 0
    %2397 = vmatmul.mubr.bf16.gmra.mrb[0].mxu0 %v2248
    %v2398 = vpop.f32.mrb[0].mxu0
    %v2399 = vadd.f32 %v2274, %v2398
    %v2400 = vpop.f32.mrb[0].mxu0
    %v2401 = vpop.f32.mrb[0].mxu0
    %v2402 = vadd.f32 %v2274, %v2401
    %v2403 = vpop.f32.mrb[0].mxu0
    %2404 = vmatprep.mubr.bf16.mxu0 0
    %2405 = vmatmul.mubr.bf16.gmra.mrb[0].mxu0 %v2249
    %v2406 = vpop.f32.mrb[0].mxu0
    %v2407 = vadd.f32 %v2274, %v2406
    %v2408 = vpop.f32.mrb[0].mxu0
    %v2409 = vpop.f32.mrb[0].mxu0
    %v2410 = vadd.f32 %v2274, %v2409
    %v2411 = vpop.f32.mrb[0].mxu0
    %2412 = vmatprep.mubr.bf16.mxu0 0
    %2413 = vmatmul.mubr.bf16.gmra.mrb[0].mxu0 %v2250
    %v2414 = vpop.f32.mrb[0].mxu0
    %v2415 = vadd.f32 %v2274, %v2414
    %v2416 = vpop.f32.mrb[0].mxu0
    %v2417 = vpop.f32.mrb[0].mxu0
    %v2418 = vadd.f32 %v2274, %v2417
    %v2419 = vpop.f32.mrb[0].mxu0
    %2420 = vdwg.mxu0
    %s2421 = sld [smem:[#allocation2 + $0x100]]
    %v2422 = vstv %s2421
    %v2423 = vmul.f32 %v337, %v2422
    %v2424 = vmul.f32 %v338, %v2422
    %v2425 = vmul.f32 %v339, %v2422
    %v2426 = vmul.f32 %v340, %v2422
    %v2427 = vmul.f32 %v341, %v2422
    %v2428 = vmul.f32 %v342, %v2422
    %v2429 = vmul.f32 %v343, %v2422
    %v2430 = vmul.f32 %v344, %v2422
    %v2431 = vmul.f32 %v345, %v2422
    %v2432 = vmul.f32 %v346, %v2422
    %v2433 = vmul.f32 %v347, %v2422
    %v2434 = vmul.f32 %v348, %v2422
    %v2435 = vmul.f32 %v349, %v2422
    %v2436 = vmul.f32 %v350, %v2422
    %v2437 = vmul.f32 %v351, %v2422
    %v2438 = vmul.f32 %v352, %v2422
    %s2439 = sld [smem:[#allocation2 + $0x101]]
    %v2440 = vstv %s2439
    %v2441 = vmul.f32 %v417, %v2440
    %v2442 = vmul.f32 %v418, %v2440
    %v2443 = vmul.f32 %v419, %v2440
    %v2444 = vmul.f32 %v420, %v2440
    %v2445 = vmul.f32 %v421, %v2440
    %v2446 = vmul.f32 %v422, %v2440
    %v2447 = vmul.f32 %v423, %v2440
    %v2448 = vmul.f32 %v424, %v2440
    %v2449 = vmul.f32 %v425, %v2440
    %v2450 = vmul.f32 %v426, %v2440
    %v2451 = vmul.f32 %v427, %v2440
    %v2452 = vmul.f32 %v428, %v2440
    %v2453 = vmul.f32 %v429, %v2440
    %v2454 = vmul.f32 %v430, %v2440
    %v2455 = vmul.f32 %v431, %v2440
    %v2456 = vmul.f32 %v432, %v2440
    %2473 = vrot.lane.b32.xlu0 %v2441, 127
    %v2474 = vpop.permute.xlu0 %2473
    %2475 = vrot.lane.b32.xlu0 %v2442, 127
    %v2476 = vpop.permute.xlu0 %2475
    %2477 = vrot.lane.b32.xlu0 %v2443, 127
    %v2478 = vpop.permute.xlu0 %2477
    %2479 = vrot.lane.b32.xlu0 %v2444, 127
    %v2480 = vpop.permute.xlu0 %2479
    %2481 = vrot.lane.b32.xlu0 %v2445, 127
    %v2482 = vpop.permute.xlu0 %2481
    %2483 = vrot.lane.b32.xlu0 %v2446, 127
    %v2484 = vpop.permute.xlu0 %2483
    %2485 = vrot.lane.b32.xlu0 %v2447, 127
    %v2486 = vpop.permute.xlu0 %2485
    %2487 = vrot.lane.b32.xlu0 %v2448, 127
    %v2488 = vpop.permute.xlu0 %2487
    %2489 = vrot.lane.b32.xlu0 %v2449, 127
    %v2490 = vpop.permute.xlu0 %2489
    %2491 = vrot.lane.b32.xlu0 %v2450, 127
    %v2492 = vpop.permute.xlu0 %2491
    %2493 = vrot.lane.b32.xlu0 %v2451, 127
    %v2494 = vpop.permute.xlu0 %2493
    %2495 = vrot.lane.b32.xlu0 %v2452, 127
    %v2496 = vpop.permute.xlu0 %2495
    %2497 = vrot.lane.b32.xlu0 %v2453, 127
    %v2498 = vpop.permute.xlu0 %2497
    %2499 = vrot.lane.b32.xlu0 %v2454, 127
    %v2500 = vpop.permute.xlu0 %2499
    %2501 = vrot.lane.b32.xlu0 %v2455, 127
    %v2502 = vpop.permute.xlu0 %2501
    %2503 = vrot.lane.b32.xlu0 %v2456, 127
    %v2504 = vpop.permute.xlu0 %2503
    %v2521 = vadd.f32 %v2423, %v2474
    %v2522 = vadd.f32 %v2424, %v2476
    %v2523 = vadd.f32 %v2425, %v2478
    %v2524 = vadd.f32 %v2426, %v2480
    %v2525 = vadd.f32 %v2427, %v2482
    %v2526 = vadd.f32 %v2428, %v2484
    %v2527 = vadd.f32 %v2429, %v2486
    %v2528 = vadd.f32 %v2430, %v2488
    %v2529 = vadd.f32 %v2431, %v2490
    %v2530 = vadd.f32 %v2432, %v2492
    %v2531 = vadd.f32 %v2433, %v2494
    %v2532 = vadd.f32 %v2434, %v2496
    %v2533 = vadd.f32 %v2435, %v2498
    %v2534 = vadd.f32 %v2436, %v2500
    %v2535 = vadd.f32 %v2437, %v2502
    %v2536 = vadd.f32 %v2438, %v2504
    %s2537 = sld [smem:[#allocation2 + $0x102]]
    %v2538 = vstv %s2537
    %v2539 = vmul.f32 %v481, %v2538
    %v2540 = vmul.f32 %v482, %v2538
    %v2541 = vmul.f32 %v483, %v2538
    %v2542 = vmul.f32 %v484, %v2538
    %v2543 = vmul.f32 %v485, %v2538
    %v2544 = vmul.f32 %v486, %v2538
    %v2545 = vmul.f32 %v487, %v2538
    %v2546 = vmul.f32 %v488, %v2538
    %v2547 = vmul.f32 %v489, %v2538
    %v2548 = vmul.f32 %v490, %v2538
    %v2549 = vmul.f32 %v491, %v2538
    %v2550 = vmul.f32 %v492, %v2538
    %v2551 = vmul.f32 %v493, %v2538
    %v2552 = vmul.f32 %v494, %v2538
    %v2553 = vmul.f32 %v495, %v2538
    %v2554 = vmul.f32 %v496, %v2538
    %2571 = vrot.lane.b32.xlu0 %v2539, 126
    %v2572 = vpop.permute.xlu0 %2571
    %2573 = vrot.lane.b32.xlu0 %v2540, 126
    %v2574 = vpop.permute.xlu0 %2573
    %2575 = vrot.lane.b32.xlu0 %v2541, 126
    %v2576 = vpop.permute.xlu0 %2575
    %2577 = vrot.lane.b32.xlu0 %v2542, 126
    %v2578 = vpop.permute.xlu0 %2577
    %2579 = vrot.lane.b32.xlu0 %v2543, 126
    %v2580 = vpop.permute.xlu0 %2579
    %2581 = vrot.lane.b32.xlu0 %v2544, 126
    %v2582 = vpop.permute.xlu0 %2581
    %2583 = vrot.lane.b32.xlu0 %v2545, 126
    %v2584 = vpop.permute.xlu0 %2583
    %2585 = vrot.lane.b32.xlu0 %v2546, 126
    %v2586 = vpop.permute.xlu0 %2585
    %2587 = vrot.lane.b32.xlu0 %v2547, 126
    %v2588 = vpop.permute.xlu0 %2587
    %2589 = vrot.lane.b32.xlu0 %v2548, 126
    %v2590 = vpop.permute.xlu0 %2589
    %2591 = vrot.lane.b32.xlu0 %v2549, 126
    %v2592 = vpop.permute.xlu0 %2591
    %2593 = vrot.lane.b32.xlu0 %v2550, 126
    %v2594 = vpop.permute.xlu0 %2593
    %2595 = vrot.lane.b32.xlu0 %v2551, 126
    %v2596 = vpop.permute.xlu0 %2595
    %2597 = vrot.lane.b32.xlu0 %v2552, 126
    %v2598 = vpop.permute.xlu0 %2597
    %2599 = vrot.lane.b32.xlu0 %v2553, 126
    %v2600 = vpop.permute.xlu0 %2599
    %2601 = vrot.lane.b32.xlu0 %v2554, 126
    %v2602 = vpop.permute.xlu0 %2601
    %v2619 = vadd.f32 %v2521, %v2572
    %v2620 = vadd.f32 %v2522, %v2574
    %v2621 = vadd.f32 %v2523, %v2576
    %v2622 = vadd.f32 %v2524, %v2578
    %v2623 = vadd.f32 %v2525, %v2580
    %v2624 = vadd.f32 %v2526, %v2582
    %v2625 = vadd.f32 %v2527, %v2584
    %v2626 = vadd.f32 %v2528, %v2586
    %v2627 = vadd.f32 %v2529, %v2588
    %v2628 = vadd.f32 %v2530, %v2590
    %v2629 = vadd.f32 %v2531, %v2592
    %v2630 = vadd.f32 %v2532, %v2594
    %v2631 = vadd.f32 %v2533, %v2596
    %v2632 = vadd.f32 %v2534, %v2598
    %v2633 = vadd.f32 %v2535, %v2600
    %v2634 = vadd.f32 %v2536, %v2602
    %2636 = vset.pattern.permute.xlu0 0
    %2637 = vperm.xlu0 %2636, %v2619
    %v2638 = vpop.permute.xlu0 %2637
    %2641 = vset.pattern.permute.xlu0 0
    %2642 = vperm.xlu0 %2641, %v2620
    %v2643 = vpop.permute.xlu0 %2642
    %2646 = vset.pattern.permute.xlu0 0
    %2647 = vperm.xlu0 %2646, %v2621
    %v2648 = vpop.permute.xlu0 %2647
    %2651 = vset.pattern.permute.xlu0 0
    %2652 = vperm.xlu0 %2651, %v2622
    %v2653 = vpop.permute.xlu0 %2652
    %2656 = vset.pattern.permute.xlu0 0
    %2657 = vperm.xlu0 %2656, %v2623
    %v2658 = vpop.permute.xlu0 %2657
    %2661 = vset.pattern.permute.xlu0 0
    %2662 = vperm.xlu0 %2661, %v2624
    %v2663 = vpop.permute.xlu0 %2662
    %2666 = vset.pattern.permute.xlu0 0
    %2667 = vperm.xlu0 %2666, %v2625
    %v2668 = vpop.permute.xlu0 %2667
    %2671 = vset.pattern.permute.xlu0 0
    %2672 = vperm.xlu0 %2671, %v2626
    %v2673 = vpop.permute.xlu0 %2672
    %2676 = vset.pattern.permute.xlu0 0
    %2677 = vperm.xlu0 %2676, %v2627
    %v2678 = vpop.permute.xlu0 %2677
    %2681 = vset.pattern.permute.xlu0 0
    %2682 = vperm.xlu0 %2681, %v2628
    %v2683 = vpop.permute.xlu0 %2682
    %2686 = vset.pattern.permute.xlu0 0
    %2687 = vperm.xlu0 %2686, %v2629
    %v2688 = vpop.permute.xlu0 %2687
    %2691 = vset.pattern.permute.xlu0 0
    %2692 = vperm.xlu0 %2691, %v2630
    %v2693 = vpop.permute.xlu0 %2692
    %2696 = vset.pattern.permute.xlu0 0
    %2697 = vperm.xlu0 %2696, %v2631
    %v2698 = vpop.permute.xlu0 %2697
    %2701 = vset.pattern.permute.xlu0 0
    %2702 = vperm.xlu0 %2701, %v2632
    %v2703 = vpop.permute.xlu0 %2702
    %2706 = vset.pattern.permute.xlu0 0
    %2707 = vperm.xlu0 %2706, %v2633
    %v2708 = vpop.permute.xlu0 %2707
    %2711 = vset.pattern.permute.xlu0 0
    %2712 = vperm.xlu0 %2711, %v2634
    %v2713 = vpop.permute.xlu0 %2712
    %v2715 = vmul.f32 %v2359, %v2638
    %v2716 = vmul.f32 %v2362, %v2643
    %v2717 = vmul.f32 %v2367, %v2648
    %v2718 = vmul.f32 %v2370, %v2653
    %v2719 = vmul.f32 %v2375, %v2658
    %v2720 = vmul.f32 %v2378, %v2663
    %v2721 = vmul.f32 %v2383, %v2668
    %v2722 = vmul.f32 %v2386, %v2673
    %v2723 = vmul.f32 %v2391, %v2678
    %v2724 = vmul.f32 %v2394, %v2683
    %v2725 = vmul.f32 %v2399, %v2688
    %v2726 = vmul.f32 %v2402, %v2693
    %v2727 = vmul.f32 %v2407, %v2698
    %v2728 = vmul.f32 %v2410, %v2703
    %v2729 = vmul.f32 %v2415, %v2708
    %v2730 = vmul.f32 %v2418, %v2713
    %v2731 = vpack.c.bf16 %v2716, %v2715
    %v2732 = vpack.c.bf16 %v2718, %v2717
    %v2733 = vpack.c.bf16 %v2720, %v2719
    %v2734 = vpack.c.bf16 %v2722, %v2721
    %v2735 = vpack.c.bf16 %v2724, %v2723
    %v2736 = vpack.c.bf16 %v2726, %v2725
    %v2737 = vpack.c.bf16 %v2728, %v2727
    %v2738 = vpack.c.bf16 %v2730, %v2729
    %v2747 = vunpack.c.l.b16 %v2731
    %v2748 = vunpack.c.h.b16 %v2731
    %v2749 = vunpack.c.l.b16 %v2732
    %v2750 = vunpack.c.h.b16 %v2732
    %v2751 = vunpack.c.l.b16 %v2733
    %v2752 = vunpack.c.h.b16 %v2733
    %v2753 = vunpack.c.l.b16 %v2734
    %v2754 = vunpack.c.h.b16 %v2734
    %v2755 = vunpack.c.l.b16 %v2735
    %v2756 = vunpack.c.h.b16 %v2735
    %v2757 = vunpack.c.l.b16 %v2736
    %v2758 = vunpack.c.h.b16 %v2736
    %v2759 = vunpack.c.l.b16 %v2737
    %v2760 = vunpack.c.h.b16 %v2737
    %v2761 = vunpack.c.l.b16 %v2738
    %v2762 = vunpack.c.h.b16 %v2738
    %v2763 = vpack.c.b16 %v2747, %v2747
    %v2764 = vpack.c.b16 %v2748, %v2748
    %v2765 = vpack.c.b16 %v2749, %v2749
    %v2766 = vpack.c.b16 %v2750, %v2750
    %v2767 = vpack.c.b16 %v2751, %v2751
    %v2768 = vpack.c.b16 %v2752, %v2752
    %v2769 = vpack.c.b16 %v2753, %v2753
    %v2770 = vpack.c.b16 %v2754, %v2754
    %v2771 = vpack.c.b16 %v2755, %v2755
    %v2772 = vpack.c.b16 %v2756, %v2756
    %v2773 = vpack.c.b16 %v2757, %v2757
    %v2774 = vpack.c.b16 %v2758, %v2758
    %v2775 = vpack.c.b16 %v2759, %v2759
    %v2776 = vpack.c.b16 %v2760, %v2760
    %v2777 = vpack.c.b16 %v2761, %v2761
    %v2778 = vpack.c.b16 %v2762, %v2762
    %2795 = vst [vmem:[%s11] sm:$0xf] %v2763
    %2796 = vst [vmem:[%s11 + $0x4] sm:$0xf] %v2764
    %2797 = vst [vmem:[%s11 + $0x8] sm:$0xf] %v2765
    %2798 = vst [vmem:[%s11 + $0xc] sm:$0xf] %v2766
    %2799 = vst [vmem:[%s11 + $0x10] sm:$0xf] %v2767
    %2800 = vst [vmem:[%s11 + $0x14] sm:$0xf] %v2768
    %2801 = vst [vmem:[%s11 + $0x18] sm:$0xf] %v2769
    %2802 = vst [vmem:[%s11 + $0x1c] sm:$0xf] %v2770
    %2803 = vst [vmem:[%s11 + $0x20] sm:$0xf] %v2771
    %2804 = vst [vmem:[%s11 + $0x24] sm:$0xf] %v2772
    %2805 = vst [vmem:[%s11 + $0x28] sm:$0xf] %v2773
    %2806 = vst [vmem:[%s11 + $0x2c] sm:$0xf] %v2774
    %2807 = vst [vmem:[%s11 + $0x30] sm:$0xf] %v2775
    %2808 = vst [vmem:[%s11 + $0x34] sm:$0xf] %v2776
    %2809 = vst [vmem:[%s11 + $0x38] sm:$0xf] %v2777
    %2810 = vst [vmem:[%s11 + $0x3c] sm:$0xf] %v2778
    // Predicated region
    $region42: #{rep_module_forward.6} parent=1 // pred_check
      _
    $region43: #{rep_module_forward.6} parent=1 // pred_check_branch
      %2812 = sbr.rel (0) target = $region45
    $region44: #{rep_module_forward.6} parent=1 // pred_region
      _
    $region45: #{rep_module_forward.6} parent=1 // pred_fallthru
      _
    // Predicated region
    $region46: #{rep_module_forward.6} parent=1 // pred_check
      _
    $region47: #{rep_module_forward.6} parent=1 // pred_check_branch
      %2814 = sbr.rel (0) target = $region49
    $region48: #{rep_module_forward.6} parent=1 // pred_region
      _
    $region49: #{rep_module_forward.6} parent=1 // pred_fallthru
      _
    // Predicated region
    $region50: #{rep_module_forward.6} parent=1 // pred_check
      _
    $region51: #{rep_module_forward.6} parent=1 // pred_check_branch
      %2816 = sbr.rel (0) target = $region53
    $region52: #{rep_module_forward.6} parent=1 // pred_region
      _
    $region53: #{rep_module_forward.6} parent=1 // pred_fallthru
      _
    // Predicated region
    $region54: #{rep_module_forward.6} parent=1 // pred_check
      _
    $region55: #{rep_module_forward.6} parent=1 // pred_check_branch
      %2818 = sbr.rel (0) target = $region57
    $region56: #{rep_module_forward.6} parent=1 // pred_region
      _
    $region57: #{rep_module_forward.6} parent=1 // pred_fallthru
      _
    // Predicated region
    $region58: #{rep_module_forward.6} parent=1 // pred_check
      _
    $region59: #{rep_module_forward.6} parent=1 // pred_check_branch
      %2820 = sbr.rel (0) target = $region61
    $region60: #{rep_module_forward.6} parent=1 // pred_region
      _
    $region61: #{rep_module_forward.6} parent=1 // pred_fallthru
      _
    // Predicated region
    $region62: #{rep_module_forward.6} parent=1 // pred_check
      _
    $region63: #{rep_module_forward.6} parent=1 // pred_check_branch
      %2822 = sbr.rel (0) target = $region65
    $region64: #{rep_module_forward.6} parent=1 // pred_region
      _
    $region65: #{rep_module_forward.6} parent=1 // pred_fallthru
      _
    %2823 = vsyncpa [#allocation3], 1

</llo_original>
